<compile_context>
chip_gen: v7x
topology: tpu7x:2x2x1
jax: 0.10.0
libtpu: 0.0.40
codegen_flags: <defaults>
</compile_context>

<pallas_src>
import math

import jax
import jax.numpy as jnp
import numpy as np
from jax.experimental import pallas as pl
from jax.experimental.pallas import tpu as pltpu

# architectural constants from the reference module
IN_DIM = 6
HID = 64
GNN_OUT = 2
OUT_DIM = 2
E_H = 27
E_OUT = 27
EDGE_FEAT = IN_DIM * 2 + 2 + 1   # 15
GRU_IN = IN_DIM + GNN_OUT        # 8
FEAT_DIM = IN_DIM - OUT_DIM      # 4 raw meteo features per node
WIND_COL = IN_DIM - 3            # wind (speed, direction) columns == x[..., -3:-1]


def build_pm25_gnn(B, N, E, hist_len, pred_len,
                   edge_src, edge_tgt, edge_attr, wind_mean, wind_std, params):
    """Returns forward(pm25_hist, pm10_hist, feature) -> (pm25_pred, pm10_pred)
    backed by ONE fused pallas_call with grid=(B, hist_len + pred_len)."""
    (w1, b1, w2, b2, wn, bn, wx, bx, wh, bh, wo, bo) = [
        jnp.asarray(a, jnp.float32) for a in params]
    T = hist_len + pred_len

    # ---- host-side graph constants -------------------------------------
    gsrc = jax.nn.one_hot(edge_src, N, dtype=jnp.float32)        # (E, N)
    gtgt = jax.nn.one_hot(edge_tgt, N, dtype=jnp.float32)        # (E, N)
    gst = jnp.concatenate([gsrc, gtgt], axis=0)                  # (2E, N) fused gather
    m_scatter = (gtgt - gsrc).T                                  # (N, E) scatter matrix
    ea_norm = ((edge_attr - edge_attr.mean(axis=0))
               / jnp.std(edge_attr, axis=0, ddof=1))             # torch .std() is unbiased
    # constant per-edge part of edge-MLP layer 1: eattr_norm @ W1[12:14] + b1
    econst = (ea_norm @ w1[2 * IN_DIM:2 * IN_DIM + 2] + b1).astype(jnp.float32)  # (E, 27)
    inv3d = (3.0 / edge_attr[:, 0:1]).astype(jnp.float32)        # (E, 1): 3 / city_dist
    cdirec = edge_attr[:, 1:2].astype(jnp.float32)               # (E, 1)
    wind_stats = jnp.stack([wind_mean, wind_std], axis=0).astype(jnp.float32)  # (2, 2)

    # ---- host-side weight splits (no in-kernel lane concat / gate slicing) ----
    w1s = w1[0:IN_DIM]                        # rows for node_src       (6, 27)
    w1t = w1[IN_DIM:2 * IN_DIM]               # rows for node_tgt       (6, 27)
    w1w = w1[2 * IN_DIM + 2:2 * IN_DIM + 3]   # row for edge_weight     (1, 27)

    def col(wm, k):
        return wm[:, k * HID:(k + 1) * HID]

    wx_g, wx_x = wx[:GNN_OUT], wx[GNN_OUT:]   # GRU input = [gnn(2) | x(6)]
    wxr_g, wxi_g, wxn_g = col(wx_g, 0), col(wx_g, 1), col(wx_g, 2)
    wxr_x, wxi_x, wxn_x = col(wx_x, 0), col(wx_x, 1), col(wx_x, 2)
    bxr, bxi, bxn = col(bx, 0), col(bx, 1), col(bx, 2)
    whr, whi, whn = col(wh, 0), col(wh, 1), col(wh, 2)
    bhr, bhi, bhn = col(bh, 0), col(bh, 1), col(bh, 2)

    const_args = (gst, m_scatter, econst, inv3d, cdirec, wind_stats,
                  w1s, w1t, w1w, w2, b2, wn, bn,
                  wxr_g, wxr_x, wxi_g, wxi_x, wxn_g, wxn_x, bxr, bxi, bxn,
                  whr, whi, whn, bhr, bhi, bhn, wo, bo)

    # ---- fused per-(batch, timestep) kernel -----------------------------
    def kernel(pm_ref, feat_ref,
               gst_ref, m_ref, ec_ref, inv3d_ref, cdir_ref, wind_ref,
               w1s_ref, w1t_ref, w1w_ref, w2_ref, b2_ref, wn_ref, bn_ref,
               wxr_g_ref, wxr_x_ref, wxi_g_ref, wxi_x_ref, wxn_g_ref, wxn_x_ref,
               bxr_ref, bxi_ref, bxn_ref,
               whr_ref, whi_ref, whn_ref, bhr_ref, bhi_ref, bhn_ref,
               wo_ref, bo_ref,
               pred_ref,
               h_sc, xn_sc, x_sc):
        t = pl.program_id(1)

        @pl.when(t == 0)
        def _():
            h_sc[...] = jnp.zeros_like(h_sc)
            xn_sc[...] = jnp.zeros_like(xn_sc)

        # assemble x_t: history -> (pm25, pm10); forecast -> previous fc_out
        @pl.when(t < hist_len)
        def _():
            x_sc[:, 0:OUT_DIM] = pm_ref[0, 0]

        @pl.when(t >= hist_len)
        def _():
            x_sc[:, 0:OUT_DIM] = xn_sc[...]

        x_sc[:, OUT_DIM:IN_DIM] = feat_ref[0, 0]

        x = x_sc[...]           # (N, 6)
        h = h_sc[...]           # (N, 64)

        # --- GraphGNN ---
        node_st = jnp.dot(gst_ref[...], x, preferred_element_type=jnp.float32)  # (2E, 6)
        node_src = node_st[:E]  # sublane split (E % 8 == 0) -> free
        node_tgt = node_st[E:]

        wind = (node_src[:, WIND_COL:WIND_COL + 2] * wind_ref[1:2, :]
                + wind_ref[0:1, :])                              # (E, 2) de-normalized
        speed = wind[:, 0:1]
        direc = wind[:, 1:2]
        theta = jnp.abs(cdir_ref[...] - direc)
        edge_w = jnp.maximum(speed * jnp.cos(theta) * inv3d_ref[...], 0.0)  # relu, (E, 1)

        e1 = jax.nn.sigmoid(
            jnp.dot(node_src, w1s_ref[...], preferred_element_type=jnp.float32)
            + jnp.dot(node_tgt, w1t_ref[...], preferred_element_type=jnp.float32)
            + edge_w * w1w_ref[...]
            + ec_ref[...])                                       # (E, 27)
        e2 = jax.nn.sigmoid(
            jnp.dot(e1, w2_ref[...], preferred_element_type=jnp.float32)
            + b2_ref[...])                                       # (E, 27)

        agg = jnp.dot(m_ref[...], e2, preferred_element_type=jnp.float32)    # (N, 27)
        gnn = jax.nn.sigmoid(
            jnp.dot(agg, wn_ref[...], preferred_element_type=jnp.float32)
            + bn_ref[...])                                       # (N, 2)

        # --- GRU cell: each gate produced directly as a 64-lane tensor ---
        def xgate(wg_ref, wxx_ref, b_ref):
            return (jnp.dot(gnn, wg_ref[...], preferred_element_type=jnp.float32)
                    + jnp.dot(x, wxx_ref[...], preferred_element_type=jnp.float32)
                    + b_ref[...])

        def hgate(whh_ref, b_ref):
            return (jnp.dot(h, whh_ref[...], preferred_element_type=jnp.float32)
                    + b_ref[...])

        i_r = xgate(wxr_g_ref, wxr_x_ref, bxr_ref)
        i_i = xgate(wxi_g_ref, wxi_x_ref, bxi_ref)
        i_n = xgate(wxn_g_ref, wxn_x_ref, bxn_ref)
        h_r = hgate(whr_ref, bhr_ref)
        h_i = hgate(whi_ref, bhi_ref)
        h_n = hgate(whn_ref, bhn_ref)

        resetgate = jax.nn.sigmoid(i_r + h_r)
        inputgate = jax.nn.sigmoid(i_i + h_i)
        newgate = jnp.tanh(i_n + resetgate * h_n)
        hy = newgate + inputgate * (h - newgate)                  # (N, 64)

        # --- fc_out ---
        xn = jnp.dot(hy, wo_ref[...], preferred_element_type=jnp.float32) + bo_ref[...]

        h_sc[...] = hy
        xn_sc[...] = xn
        # Output block index is max(t - hist_len, 0): during history all writes
        # land on the same (VMEM) block 0, and only the t == hist_len value is
        # the one that persists per output block.
        pred_ref[0, 0] = xn

    def _const_spec(a):
        zero = (0,) * a.ndim
        return pl.BlockSpec(a.shape, lambda b, t, _z=zero: _z)

    in_specs = [
        pl.BlockSpec((1, 1, N, OUT_DIM),
                     lambda b, t: (b, jnp.minimum(t, hist_len - 1), 0, 0)),
        pl.BlockSpec((1, 1, N, FEAT_DIM), lambda b, t: (b, t, 0, 0)),
    ] + [_const_spec(a) for a in const_args]

    out_specs = pl.BlockSpec(
        (1, 1, N, OUT_DIM),
        lambda b, t: (b, jnp.maximum(t - hist_len, 0), 0, 0))

    call = pl.pallas_call(
        kernel,
        out_shape=jax.ShapeDtypeStruct((B, pred_len, N, OUT_DIM), jnp.float32),
        grid=(B, T),
        in_specs=in_specs,
        out_specs=out_specs,
        scratch_shapes=[pltpu.VMEM((N, HID), jnp.float32),       # h carried over T
                        pltpu.VMEM((N, OUT_DIM), jnp.float32),   # previous xn
                        pltpu.VMEM((N, IN_DIM), jnp.float32)],   # assembled x_t
        compiler_params=pltpu.CompilerParams(
            dimension_semantics=("parallel", "arbitrary")),
    )

    def forward(pm25_hist, pm10_hist, feature):
        # hoist the per-timestep concat: one (B, hist_len, N, 2) slab
        pm_hist = jnp.stack([pm25_hist, pm10_hist], axis=-1).astype(jnp.float32)
        pred = call(pm_hist, feature.astype(jnp.float32), *const_args)
        return pred[..., 0], pred[..., 1]        # (B, pred_len, N) each

    return forward


# ---------------- pure-JAX reference (mirrors the PyTorch module) -------------
def reference_forward(pm25_hist, pm10_hist, feature,
                      edge_src, edge_tgt, edge_attr, wind_mean, wind_std,
                      params, hist_len, pred_len):
    (w1, b1, w2, b2, wn, bn, wx, bx, wh, bh, wo, bo) = params
    B, _, N = pm25_hist.shape
    E = edge_src.shape[0]
    ea_norm = ((edge_attr - edge_attr.mean(axis=0))
               / jnp.std(edge_attr, axis=0, ddof=1))

    def graph_gnn(x):
        node_src = x[:, edge_src]                                # (B, E, 6)
        node_tgt = x[:, edge_tgt]
        src_wind = node_src[..., -3:-1] * wind_std[None, None] + wind_mean[None, None]
        speed, direc = src_wind[..., 0], src_wind[..., 1]
        city_dist, city_dir = edge_attr[None, :, 0], edge_attr[None, :, 1]
        theta = jnp.abs(city_dir - direc)
        ew = jax.nn.relu(3.0 * speed * jnp.cos(theta) / city_dist)
        out = jnp.concatenate(
            [node_src, node_tgt, jnp.broadcast_to(ea_norm[None], (B, E, 2)),
             ew[..., None]], axis=-1)
        out = jax.nn.sigmoid(out @ w1 + b1)
        out = jax.nn.sigmoid(out @ w2 + b2)
        agg = (jnp.zeros((B, N, E_OUT), jnp.float32)
               .at[:, edge_tgt].add(out)
               .at[:, edge_src].add(-out))
        return jax.nn.sigmoid(agg @ wn + bn)

    def gru(xg, hidden):
        gx = xg @ wx + bx
        gh = hidden @ wh + bh
        i_r, i_i, i_n = jnp.split(gx, 3, axis=-1)
        h_r, h_i, h_n = jnp.split(gh, 3, axis=-1)
        r = jax.nn.sigmoid(i_r + h_r)
        z = jax.nn.sigmoid(i_i + h_i)
        n = jnp.tanh(i_n + r * h_n)
        return n + z * (hidden - n)

    h = jnp.zeros((B, N, HID), jnp.float32)
    xn = None
    p25, p10 = [], []
    for i in range(hist_len):
        x = jnp.concatenate([pm25_hist[:, i, :, None], pm10_hist[:, i, :, None],
                             feature[:, i]], axis=-1)
        g = graph_gnn(x)
        h = gru(jnp.concatenate([g, x], axis=-1), h)
        xn = h @ wo + bo
    for i in range(pred_len):
        x = jnp.concatenate([xn, feature[:, hist_len + i]], axis=-1)
        g = graph_gnn(x)
        h = gru(jnp.concatenate([g, x], axis=-1), h)
        xn = h @ wo + bo
        p25.append(xn[..., 0])
        p10.append(xn[..., 1])
    return jnp.stack(p25, axis=1), jnp.stack(p10, axis=1)


def _uniform(key, shape, scale):
    return jax.random.uniform(key, shape, jnp.float32, -scale, scale)


if __name__ == "__main__":
    # small, module-consistent shapes
    B, N, E = 2, 16, 48
    hist_len, pred_len = 4, 3

    key = jax.random.PRNGKey(0)
    ks = jax.random.split(key, 24)

    # inputs
    pm25_hist = jax.random.uniform(ks[0], (B, hist_len, N), jnp.float32)
    pm10_hist = jax.random.uniform(ks[1], (B, hist_len, N), jnp.float32)
    feature = jax.random.normal(ks[2], (B, hist_len + pred_len, N, FEAT_DIM),
                                jnp.float32)

    # synthetic graph (city direction in degrees so units match wind mean/std)
    edge_src = jax.random.randint(ks[3], (E,), 0, N)
    edge_tgt = jax.random.randint(ks[4], (E,), 0, N)
    dist = jax.random.uniform(ks[5], (E,), jnp.float32, 1.0, 10.0)
    direc = jax.random.uniform(ks[6], (E,), jnp.float32, 0.0, 360.0)
    edge_attr = jnp.stack([dist, direc], axis=-1)
    wind_mean = jnp.array([3.0, 180.0], jnp.float32)
    wind_std = jnp.array([2.0, 90.0], jnp.float32)

    # deterministic parameter init; weight layout: (in_features, out_features)
    s_e1 = 1.0 / math.sqrt(EDGE_FEAT)
    s_e2 = 1.0 / math.sqrt(E_H)
    s_n = 1.0 / math.sqrt(E_OUT)
    s_g = 1.0 / math.sqrt(HID)    # GRUCell.reset_parameters std
    s_o = 1.0 / math.sqrt(HID)

    w1 = _uniform(ks[7], (EDGE_FEAT, E_H), s_e1)
    b1 = _uniform(ks[8], (1, E_H), s_e1)
    w2 = _uniform(ks[9], (E_H, E_OUT), s_e2)
    b2 = _uniform(ks[10], (1, E_OUT), s_e2)
    wn = _uniform(ks[11], (E_OUT, GNN_OUT), s_n)
    bn = _uniform(ks[12], (1, GNN_OUT), s_n)
    wx = _uniform(ks[13], (GRU_IN, 3 * HID), s_g)
    bx = _uniform(ks[14], (1, 3 * HID), s_g)
    wh = _uniform(ks[15], (HID, 3 * HID), s_g)
    bh = _uniform(ks[16], (1, 3 * HID), s_g)
    wo = _uniform(ks[17], (HID, OUT_DIM), s_o)
    bo = _uniform(ks[18], (1, OUT_DIM), s_o)

    params = (w1, b1, w2, b2, wn, bn, wx, bx, wh, bh, wo, bo)

    forward = jax.jit(build_pm25_gnn(B, N, E, hist_len, pred_len,
                                     edge_src, edge_tgt, edge_attr,
                                     wind_mean, wind_std, params))

    pm25_pred, pm10_pred = forward(pm25_hist, pm10_hist, feature)
    jax.block_until_ready((pm25_pred, pm10_pred))
    assert pm25_pred.shape == (B, pred_len, N)
    assert pm10_pred.shape == (B, pred_len, N)

    # pure-JAX reference check (tolerance covers MXU f32 / accumulation-order)
    with jax.default_matmul_precision("highest"):
        ref25, ref10 = reference_forward(
            pm25_hist, pm10_hist, feature, edge_src, edge_tgt, edge_attr,
            wind_mean, wind_std, params, hist_len, pred_len)
    np.testing.assert_allclose(np.asarray(pm25_pred), np.asarray(ref25),
                               rtol=1e-2, atol=1e-2)
    np.testing.assert_allclose(np.asarray(pm10_pred), np.asarray(ref10),
                               rtol=1e-2, atol=1e-2)

    print("KERNEL_OK")
</pallas_src>

<mosaic_0001>
module attributes {stable_mosaic.version = 11 : i64} {
  func.func @kernel(%arg0: i32, %arg1: i32, %arg2: memref<1x1x16x2xf32, #tpu.memory_space<vmem>>, %arg3: memref<1x1x16x4xf32, #tpu.memory_space<vmem>>, %arg4: memref<96x16xf32, #tpu.memory_space<vmem>>, %arg5: memref<16x48xf32, #tpu.memory_space<vmem>>, %arg6: memref<48x27xf32, #tpu.memory_space<vmem>>, %arg7: memref<48x1xf32, #tpu.memory_space<vmem>>, %arg8: memref<48x1xf32, #tpu.memory_space<vmem>>, %arg9: memref<2x2xf32, #tpu.memory_space<vmem>>, %arg10: memref<6x27xf32, #tpu.memory_space<vmem>>, %arg11: memref<6x27xf32, #tpu.memory_space<vmem>>, %arg12: memref<1x27xf32, #tpu.memory_space<vmem>>, %arg13: memref<27x27xf32, #tpu.memory_space<vmem>>, %arg14: memref<1x27xf32, #tpu.memory_space<vmem>>, %arg15: memref<27x2xf32, #tpu.memory_space<vmem>>, %arg16: memref<1x2xf32, #tpu.memory_space<vmem>>, %arg17: memref<2x64xf32, #tpu.memory_space<vmem>>, %arg18: memref<6x64xf32, #tpu.memory_space<vmem>>, %arg19: memref<2x64xf32, #tpu.memory_space<vmem>>, %arg20: memref<6x64xf32, #tpu.memory_space<vmem>>, %arg21: memref<2x64xf32, #tpu.memory_space<vmem>>, %arg22: memref<6x64xf32, #tpu.memory_space<vmem>>, %arg23: memref<1x64xf32, #tpu.memory_space<vmem>>, %arg24: memref<1x64xf32, #tpu.memory_space<vmem>>, %arg25: memref<1x64xf32, #tpu.memory_space<vmem>>, %arg26: memref<64x64xf32, #tpu.memory_space<vmem>>, %arg27: memref<64x64xf32, #tpu.memory_space<vmem>>, %arg28: memref<64x64xf32, #tpu.memory_space<vmem>>, %arg29: memref<1x64xf32, #tpu.memory_space<vmem>>, %arg30: memref<1x64xf32, #tpu.memory_space<vmem>>, %arg31: memref<1x64xf32, #tpu.memory_space<vmem>>, %arg32: memref<64x2xf32, #tpu.memory_space<vmem>>, %arg33: memref<1x2xf32, #tpu.memory_space<vmem>>, %arg34: memref<1x1x16x2xf32, #tpu.memory_space<vmem>>, %arg35: memref<16x64xf32, #tpu.memory_space<vmem>>, %arg36: memref<16x2xf32, #tpu.memory_space<vmem>>, %arg37: memref<16x6xf32, #tpu.memory_space<vmem>>) attributes {dimension_semantics = [#tpu.dimension_semantics<parallel>, #tpu.dimension_semantics<arbitrary>], iteration_bounds = array<i64: 2, 7>, scalar_prefetch = 0 : i64, scratch_operands = 3 : i64, tpu.core_type = #tpu.core_type<tc>, window_params = [{transform_indices = @transform_0, window_bounds = array<i64: 1, 1, 16, 2>}, {transform_indices = @transform_1, window_bounds = array<i64: 1, 1, 16, 4>}, {pipeline_mode = #tpu.pipeline_mode<synchronous>, transform_indices = @transform_2, window_bounds = array<i64: 96, 16>}, {pipeline_mode = #tpu.pipeline_mode<synchronous>, transform_indices = @transform_3, window_bounds = array<i64: 16, 48>}, {pipeline_mode = #tpu.pipeline_mode<synchronous>, transform_indices = @transform_4, window_bounds = array<i64: 48, 27>}, {pipeline_mode = #tpu.pipeline_mode<synchronous>, transform_indices = @transform_5, window_bounds = array<i64: 48, 1>}, {pipeline_mode = #tpu.pipeline_mode<synchronous>, transform_indices = @transform_6, window_bounds = array<i64: 48, 1>}, {pipeline_mode = #tpu.pipeline_mode<synchronous>, transform_indices = @transform_7, window_bounds = array<i64: 2, 2>}, {pipeline_mode = #tpu.pipeline_mode<synchronous>, transform_indices = @transform_8, window_bounds = array<i64: 6, 27>}, {pipeline_mode = #tpu.pipeline_mode<synchronous>, transform_indices = @transform_9, window_bounds = array<i64: 6, 27>}, {pipeline_mode = #tpu.pipeline_mode<synchronous>, transform_indices = @transform_10, window_bounds = array<i64: 1, 27>}, {pipeline_mode = #tpu.pipeline_mode<synchronous>, transform_indices = @transform_11, window_bounds = array<i64: 27, 27>}, {pipeline_mode = #tpu.pipeline_mode<synchronous>, transform_indices = @transform_12, window_bounds = array<i64: 1, 27>}, {pipeline_mode = #tpu.pipeline_mode<synchronous>, transform_indices = @transform_13, window_bounds = array<i64: 27, 2>}, {pipeline_mode = #tpu.pipeline_mode<synchronous>, transform_indices = @transform_14, window_bounds = array<i64: 1, 2>}, {pipeline_mode = #tpu.pipeline_mode<synchronous>, transform_indices = @transform_15, window_bounds = array<i64: 2, 64>}, {pipeline_mode = #tpu.pipeline_mode<synchronous>, transform_indices = @transform_16, window_bounds = array<i64: 6, 64>}, {pipeline_mode = #tpu.pipeline_mode<synchronous>, transform_indices = @transform_17, window_bounds = array<i64: 2, 64>}, {pipeline_mode = #tpu.pipeline_mode<synchronous>, transform_indices = @transform_18, window_bounds = array<i64: 6, 64>}, {pipeline_mode = #tpu.pipeline_mode<synchronous>, transform_indices = @transform_19, window_bounds = array<i64: 2, 64>}, {pipeline_mode = #tpu.pipeline_mode<synchronous>, transform_indices = @transform_20, window_bounds = array<i64: 6, 64>}, {pipeline_mode = #tpu.pipeline_mode<synchronous>, transform_indices = @transform_21, window_bounds = array<i64: 1, 64>}, {pipeline_mode = #tpu.pipeline_mode<synchronous>, transform_indices = @transform_22, window_bounds = array<i64: 1, 64>}, {pipeline_mode = #tpu.pipeline_mode<synchronous>, transform_indices = @transform_23, window_bounds = array<i64: 1, 64>}, {pipeline_mode = #tpu.pipeline_mode<synchronous>, transform_indices = @transform_24, window_bounds = array<i64: 64, 64>}, {pipeline_mode = #tpu.pipeline_mode<synchronous>, transform_indices = @transform_25, window_bounds = array<i64: 64, 64>}, {pipeline_mode = #tpu.pipeline_mode<synchronous>, transform_indices = @transform_26, window_bounds = array<i64: 64, 64>}, {pipeline_mode = #tpu.pipeline_mode<synchronous>, transform_indices = @transform_27, window_bounds = array<i64: 1, 64>}, {pipeline_mode = #tpu.pipeline_mode<synchronous>, transform_indices = @transform_28, window_bounds = array<i64: 1, 64>}, {pipeline_mode = #tpu.pipeline_mode<synchronous>, transform_indices = @transform_29, window_bounds = array<i64: 1, 64>}, {pipeline_mode = #tpu.pipeline_mode<synchronous>, transform_indices = @transform_30, window_bounds = array<i64: 64, 2>}, {pipeline_mode = #tpu.pipeline_mode<synchronous>, transform_indices = @transform_31, window_bounds = array<i64: 1, 2>}, {transform_indices = @transform_32, window_bounds = array<i64: 1, 1, 16, 2>}]} {
    %c0_i32 = arith.constant 0 : i32
    %0 = arith.cmpi eq, %arg1, %c0_i32 : i32
    %1 = arith.extui %0 : i1 to i32
    %c0_i32_0 = arith.constant 0 : i32
    %2 = arith.cmpi ne, %1, %c0_i32_0 : i32
    scf.if %2 {
      %cst_102 = arith.constant 0.000000e+00 : f32
      %142 = vector.broadcast %cst_102 : f32 to vector<16x64xf32>
      %c0_103 = arith.constant 0 : index
      %c0_104 = arith.constant 0 : index
      %143 = vector.load %arg35[%c0_103, %c0_104] : memref<16x64xf32, #tpu.memory_space<vmem>>, vector<16x64xf32>
      tpu.vector_store %arg35[%c0_103, %c0_104], %142 {strides = array<i32>} : memref<16x64xf32, #tpu.memory_space<vmem>>, vector<16x64xf32>,
      %cst_105 = arith.constant 0.000000e+00 : f32
      %144 = vector.broadcast %cst_105 : f32 to vector<16x2xf32>
      %c0_106 = arith.constant 0 : index
      %c0_107 = arith.constant 0 : index
      %145 = vector.load %arg36[%c0_106, %c0_107] : memref<16x2xf32, #tpu.memory_space<vmem>>, vector<16x2xf32>
      tpu.vector_store %arg36[%c0_106, %c0_107], %144 {strides = array<i32>} : memref<16x2xf32, #tpu.memory_space<vmem>>, vector<16x2xf32>,
    } else {
    }
    %c4_i32 = arith.constant 4 : i32
    %3 = arith.cmpi slt, %arg1, %c4_i32 : i32
    %4 = arith.extui %3 : i1 to i32
    %c0_i32_1 = arith.constant 0 : i32
    %5 = arith.cmpi ne, %4, %c0_i32_1 : i32
    scf.if %5 {
      %c0_102 = arith.constant 0 : index
      %c0_103 = arith.constant 0 : index
      %c0_104 = arith.constant 0 : index
      %c0_105 = arith.constant 0 : index
      %142 = vector.load %arg2[%c0_102, %c0_103, %c0_104, %c0_105] : memref<1x1x16x2xf32, #tpu.memory_space<vmem>>, vector<1x1x16x2xf32>
      %143 = vector.shape_cast %142 : vector<1x1x16x2xf32> to vector<16x2xf32>
      %c0_106 = arith.constant 0 : index
      %c0_107 = arith.constant 0 : index
      %144 = vector.load %arg37[%c0_106, %c0_107] : memref<16x6xf32, #tpu.memory_space<vmem>>, vector<16x2xf32>
      tpu.vector_store %arg37[%c0_106, %c0_107], %143 {strides = array<i32>} : memref<16x6xf32, #tpu.memory_space<vmem>>, vector<16x2xf32>,
    } else {
    }
    %c4_i32_2 = arith.constant 4 : i32
    %6 = arith.cmpi sge, %arg1, %c4_i32_2 : i32
    %7 = arith.extui %6 : i1 to i32
    %c0_i32_3 = arith.constant 0 : i32
    %8 = arith.cmpi ne, %7, %c0_i32_3 : i32
    scf.if %8 {
      %c0_102 = arith.constant 0 : index
      %c0_103 = arith.constant 0 : index
      %142 = vector.load %arg36[%c0_102, %c0_103] : memref<16x2xf32, #tpu.memory_space<vmem>>, vector<16x2xf32>
      %c0_104 = arith.constant 0 : index
      %c0_105 = arith.constant 0 : index
      %143 = vector.load %arg37[%c0_104, %c0_105] : memref<16x6xf32, #tpu.memory_space<vmem>>, vector<16x2xf32>
      tpu.vector_store %arg37[%c0_104, %c0_105], %142 {strides = array<i32>} : memref<16x6xf32, #tpu.memory_space<vmem>>, vector<16x2xf32>,
    } else {
    }
    %c0 = arith.constant 0 : index
    %c0_4 = arith.constant 0 : index
    %c0_5 = arith.constant 0 : index
    %c0_6 = arith.constant 0 : index
    %9 = vector.load %arg3[%c0, %c0_4, %c0_5, %c0_6] : memref<1x1x16x4xf32, #tpu.memory_space<vmem>>, vector<1x1x16x4xf32>
    %10 = vector.shape_cast %9 : vector<1x1x16x4xf32> to vector<16x4xf32>
    %c0_7 = arith.constant 0 : index
    %c2 = arith.constant 2 : index
    %11 = vector.load %arg37[%c0_7, %c2] : memref<16x6xf32, #tpu.memory_space<vmem>>, vector<16x4xf32>
    tpu.vector_store %arg37[%c0_7, %c2], %10 {strides = array<i32>} : memref<16x6xf32, #tpu.memory_space<vmem>>, vector<16x4xf32>,
    %c0_8 = arith.constant 0 : index
    %c0_9 = arith.constant 0 : index
    %12 = vector.load %arg37[%c0_8, %c0_9] : memref<16x6xf32, #tpu.memory_space<vmem>>, vector<16x6xf32>
    %c0_10 = arith.constant 0 : index
    %c0_11 = arith.constant 0 : index
    %13 = vector.load %arg35[%c0_10, %c0_11] : memref<16x64xf32, #tpu.memory_space<vmem>>, vector<16x64xf32>
    %c0_12 = arith.constant 0 : index
    %c0_13 = arith.constant 0 : index
    %14 = vector.load %arg4[%c0_12, %c0_13] : memref<96x16xf32, #tpu.memory_space<vmem>>, vector<96x16xf32>
    %cst = arith.constant dense<0.000000e+00> : vector<96x6xf32>
    %15 = tpu.matmul %14, %12, %cst {dimension_numbers = #tpu.dot_dimension_numbers<[1], [0], [0], [1], [0, 0, 1, 1], [], []>} : vector<96x16xf32>, vector<16x6xf32>, vector<96x6xf32> -> vector<96x6xf32>
    %16 = vector.extract_strided_slice %15 {offsets = [0, 0], sizes = [48, 6], strides = [1, 1]} : vector<96x6xf32> to vector<48x6xf32>
    %17 = vector.extract_strided_slice %15 {offsets = [48, 0], sizes = [48, 6], strides = [1, 1]} : vector<96x6xf32> to vector<48x6xf32>
    %18 = vector.extract_strided_slice %16 {offsets = [0, 3], sizes = [48, 2], strides = [1, 1]} : vector<48x6xf32> to vector<48x2xf32>
    %c1 = arith.constant 1 : index
    %c0_14 = arith.constant 0 : index
    %19 = vector.load %arg9[%c1, %c0_14] : memref<2x2xf32, #tpu.memory_space<vmem>>, vector<1x2xf32>
    %20 = vector.broadcast %19 : vector<1x2xf32> to vector<48x2xf32>
    %21 = arith.mulf %18, %20 : vector<48x2xf32>
    %c0_15 = arith.constant 0 : index
    %c0_16 = arith.constant 0 : index
    %22 = vector.load %arg9[%c0_15, %c0_16] : memref<2x2xf32, #tpu.memory_space<vmem>>, vector<1x2xf32>
    %23 = vector.broadcast %22 : vector<1x2xf32> to vector<48x2xf32>
    %24 = arith.addf %21, %23 : vector<48x2xf32>
    %25 = vector.extract_strided_slice %24 {offsets = [0, 0], sizes = [48, 1], strides = [1, 1]} : vector<48x2xf32> to vector<48x1xf32>
    %26 = vector.extract_strided_slice %24 {offsets = [0, 1], sizes = [48, 1], strides = [1, 1]} : vector<48x2xf32> to vector<48x1xf32>
    %c0_17 = arith.constant 0 : index
    %c0_18 = arith.constant 0 : index
    %27 = vector.load %arg8[%c0_17, %c0_18] : memref<48x1xf32, #tpu.memory_space<vmem>>, vector<48x1xf32>
    %28 = arith.subf %27, %26 : vector<48x1xf32>
    %29 = math.absf %28 : vector<48x1xf32>
    %30 = math.cos %29 : vector<48x1xf32>
    %31 = arith.mulf %25, %30 : vector<48x1xf32>
    %c0_19 = arith.constant 0 : index
    %c0_20 = arith.constant 0 : index
    %32 = vector.load %arg7[%c0_19, %c0_20] : memref<48x1xf32, #tpu.memory_space<vmem>>, vector<48x1xf32>
    %33 = arith.mulf %31, %32 : vector<48x1xf32>
    %cst_21 = arith.constant 0.000000e+00 : f32
    %34 = vector.broadcast %cst_21 : f32 to vector<48x1xf32>
    %35 = arith.maximumf %33, %34 : vector<48x1xf32>
    %c0_22 = arith.constant 0 : index
    %c0_23 = arith.constant 0 : index
    %36 = vector.load %arg10[%c0_22, %c0_23] : memref<6x27xf32, #tpu.memory_space<vmem>>, vector<6x27xf32>
    %cst_24 = arith.constant dense<0.000000e+00> : vector<48x27xf32>
    %37 = tpu.matmul %16, %36, %cst_24 {dimension_numbers = #tpu.dot_dimension_numbers<[1], [0], [0], [1], [0, 0, 1, 1], [], []>} : vector<48x6xf32>, vector<6x27xf32>, vector<48x27xf32> -> vector<48x27xf32>
    %c0_25 = arith.constant 0 : index
    %c0_26 = arith.constant 0 : index
    %38 = vector.load %arg11[%c0_25, %c0_26] : memref<6x27xf32, #tpu.memory_space<vmem>>, vector<6x27xf32>
    %cst_27 = arith.constant dense<0.000000e+00> : vector<48x27xf32>
    %39 = tpu.matmul %17, %38, %cst_27 {dimension_numbers = #tpu.dot_dimension_numbers<[1], [0], [0], [1], [0, 0, 1, 1], [], []>} : vector<48x6xf32>, vector<6x27xf32>, vector<48x27xf32> -> vector<48x27xf32>
    %40 = arith.addf %37, %39 : vector<48x27xf32>
    %c0_28 = arith.constant 0 : index
    %c0_29 = arith.constant 0 : index
    %41 = vector.load %arg12[%c0_28, %c0_29] : memref<1x27xf32, #tpu.memory_space<vmem>>, vector<1x27xf32>
    %42 = vector.broadcast %35 : vector<48x1xf32> to vector<48x27xf32>
    %43 = vector.broadcast %41 : vector<1x27xf32> to vector<48x27xf32>
    %44 = arith.mulf %42, %43 : vector<48x27xf32>
    %45 = arith.addf %40, %44 : vector<48x27xf32>
    %c0_30 = arith.constant 0 : index
    %c0_31 = arith.constant 0 : index
    %46 = vector.load %arg6[%c0_30, %c0_31] : memref<48x27xf32, #tpu.memory_space<vmem>>, vector<48x27xf32>
    %47 = arith.addf %45, %46 : vector<48x27xf32>
    %48 = arith.negf %47 : vector<48x27xf32>
    %49 = math.exp %48 : vector<48x27xf32>
    %cst_32 = arith.constant 1.000000e+00 : f32
    %50 = vector.broadcast %cst_32 : f32 to vector<48x27xf32>
    %51 = arith.addf %50, %49 : vector<48x27xf32>
    %52 = arith.divf %50, %51 : vector<48x27xf32>
    %c0_33 = arith.constant 0 : index
    %c0_34 = arith.constant 0 : index
    %53 = vector.load %arg13[%c0_33, %c0_34] : memref<27x27xf32, #tpu.memory_space<vmem>>, vector<27x27xf32>
    %cst_35 = arith.constant dense<0.000000e+00> : vector<48x27xf32>
    %54 = tpu.matmul %52, %53, %cst_35 {dimension_numbers = #tpu.dot_dimension_numbers<[1], [0], [0], [1], [0, 0, 1, 1], [], []>} : vector<48x27xf32>, vector<27x27xf32>, vector<48x27xf32> -> vector<48x27xf32>
    %c0_36 = arith.constant 0 : index
    %c0_37 = arith.constant 0 : index
    %55 = vector.load %arg14[%c0_36, %c0_37] : memref<1x27xf32, #tpu.memory_space<vmem>>, vector<1x27xf32>
    %56 = vector.broadcast %55 : vector<1x27xf32> to vector<48x27xf32>
    %57 = arith.addf %54, %56 : vector<48x27xf32>
    %58 = arith.negf %57 : vector<48x27xf32>
    %59 = math.exp %58 : vector<48x27xf32>
    %cst_38 = arith.constant 1.000000e+00 : f32
    %60 = vector.broadcast %cst_38 : f32 to vector<48x27xf32>
    %61 = arith.addf %60, %59 : vector<48x27xf32>
    %62 = arith.divf %60, %61 : vector<48x27xf32>
    %c0_39 = arith.constant 0 : index
    %c0_40 = arith.constant 0 : index
    %63 = vector.load %arg5[%c0_39, %c0_40] : memref<16x48xf32, #tpu.memory_space<vmem>>, vector<16x48xf32>
    %cst_41 = arith.constant dense<0.000000e+00> : vector<16x27xf32>
    %64 = tpu.matmul %63, %62, %cst_41 {dimension_numbers = #tpu.dot_dimension_numbers<[1], [0], [0], [1], [0, 0, 1, 1], [], []>} : vector<16x48xf32>, vector<48x27xf32>, vector<16x27xf32> -> vector<16x27xf32>
    %c0_42 = arith.constant 0 : index
    %c0_43 = arith.constant 0 : index
    %65 = vector.load %arg15[%c0_42, %c0_43] : memref<27x2xf32, #tpu.memory_space<vmem>>, vector<27x2xf32>
    %cst_44 = arith.constant dense<0.000000e+00> : vector<16x2xf32>
    %66 = tpu.matmul %64, %65, %cst_44 {dimension_numbers = #tpu.dot_dimension_numbers<[1], [0], [0], [1], [0, 0, 1, 1], [], []>} : vector<16x27xf32>, vector<27x2xf32>, vector<16x2xf32> -> vector<16x2xf32>
    %c0_45 = arith.constant 0 : index
    %c0_46 = arith.constant 0 : index
    %67 = vector.load %arg16[%c0_45, %c0_46] : memref<1x2xf32, #tpu.memory_space<vmem>>, vector<1x2xf32>
    %68 = vector.broadcast %67 : vector<1x2xf32> to vector<16x2xf32>
    %69 = arith.addf %66, %68 : vector<16x2xf32>
    %70 = arith.negf %69 : vector<16x2xf32>
    %71 = math.exp %70 : vector<16x2xf32>
    %cst_47 = arith.constant 1.000000e+00 : f32
    %72 = vector.broadcast %cst_47 : f32 to vector<16x2xf32>
    %73 = arith.addf %72, %71 : vector<16x2xf32>
    %74 = arith.divf %72, %73 : vector<16x2xf32>
    %c0_48 = arith.constant 0 : index
    %c0_49 = arith.constant 0 : index
    %75 = vector.load %arg17[%c0_48, %c0_49] : memref<2x64xf32, #tpu.memory_space<vmem>>, vector<2x64xf32>
    %cst_50 = arith.constant dense<0.000000e+00> : vector<16x64xf32>
    %76 = tpu.matmul %74, %75, %cst_50 {dimension_numbers = #tpu.dot_dimension_numbers<[1], [0], [0], [1], [0, 0, 1, 1], [], []>} : vector<16x2xf32>, vector<2x64xf32>, vector<16x64xf32> -> vector<16x64xf32>
    %c0_51 = arith.constant 0 : index
    %c0_52 = arith.constant 0 : index
    %77 = vector.load %arg18[%c0_51, %c0_52] : memref<6x64xf32, #tpu.memory_space<vmem>>, vector<6x64xf32>
    %cst_53 = arith.constant dense<0.000000e+00> : vector<16x64xf32>
    %78 = tpu.matmul %12, %77, %cst_53 {dimension_numbers = #tpu.dot_dimension_numbers<[1], [0], [0], [1], [0, 0, 1, 1], [], []>} : vector<16x6xf32>, vector<6x64xf32>, vector<16x64xf32> -> vector<16x64xf32>
    %79 = arith.addf %76, %78 : vector<16x64xf32>
    %c0_54 = arith.constant 0 : index
    %c0_55 = arith.constant 0 : index
    %80 = vector.load %arg23[%c0_54, %c0_55] : memref<1x64xf32, #tpu.memory_space<vmem>>, vector<1x64xf32>
    %81 = vector.broadcast %80 : vector<1x64xf32> to vector<16x64xf32>
    %82 = arith.addf %79, %81 : vector<16x64xf32>
    %c0_56 = arith.constant 0 : index
    %c0_57 = arith.constant 0 : index
    %83 = vector.load %arg19[%c0_56, %c0_57] : memref<2x64xf32, #tpu.memory_space<vmem>>, vector<2x64xf32>
    %cst_58 = arith.constant dense<0.000000e+00> : vector<16x64xf32>
    %84 = tpu.matmul %74, %83, %cst_58 {dimension_numbers = #tpu.dot_dimension_numbers<[1], [0], [0], [1], [0, 0, 1, 1], [], []>} : vector<16x2xf32>, vector<2x64xf32>, vector<16x64xf32> -> vector<16x64xf32>
    %c0_59 = arith.constant 0 : index
    %c0_60 = arith.constant 0 : index
    %85 = vector.load %arg20[%c0_59, %c0_60] : memref<6x64xf32, #tpu.memory_space<vmem>>, vector<6x64xf32>
    %cst_61 = arith.constant dense<0.000000e+00> : vector<16x64xf32>
    %86 = tpu.matmul %12, %85, %cst_61 {dimension_numbers = #tpu.dot_dimension_numbers<[1], [0], [0], [1], [0, 0, 1, 1], [], []>} : vector<16x6xf32>, vector<6x64xf32>, vector<16x64xf32> -> vector<16x64xf32>
    %87 = arith.addf %84, %86 : vector<16x64xf32>
    %c0_62 = arith.constant 0 : index
    %c0_63 = arith.constant 0 : index
    %88 = vector.load %arg24[%c0_62, %c0_63] : memref<1x64xf32, #tpu.memory_space<vmem>>, vector<1x64xf32>
    %89 = vector.broadcast %88 : vector<1x64xf32> to vector<16x64xf32>
    %90 = arith.addf %87, %89 : vector<16x64xf32>
    %c0_64 = arith.constant 0 : index
    %c0_65 = arith.constant 0 : index
    %91 = vector.load %arg21[%c0_64, %c0_65] : memref<2x64xf32, #tpu.memory_space<vmem>>, vector<2x64xf32>
    %cst_66 = arith.constant dense<0.000000e+00> : vector<16x64xf32>
    %92 = tpu.matmul %74, %91, %cst_66 {dimension_numbers = #tpu.dot_dimension_numbers<[1], [0], [0], [1], [0, 0, 1, 1], [], []>} : vector<16x2xf32>, vector<2x64xf32>, vector<16x64xf32> -> vector<16x64xf32>
    %c0_67 = arith.constant 0 : index
    %c0_68 = arith.constant 0 : index
    %93 = vector.load %arg22[%c0_67, %c0_68] : memref<6x64xf32, #tpu.memory_space<vmem>>, vector<6x64xf32>
    %cst_69 = arith.constant dense<0.000000e+00> : vector<16x64xf32>
    %94 = tpu.matmul %12, %93, %cst_69 {dimension_numbers = #tpu.dot_dimension_numbers<[1], [0], [0], [1], [0, 0, 1, 1], [], []>} : vector<16x6xf32>, vector<6x64xf32>, vector<16x64xf32> -> vector<16x64xf32>
    %95 = arith.addf %92, %94 : vector<16x64xf32>
    %c0_70 = arith.constant 0 : index
    %c0_71 = arith.constant 0 : index
    %96 = vector.load %arg25[%c0_70, %c0_71] : memref<1x64xf32, #tpu.memory_space<vmem>>, vector<1x64xf32>
    %97 = vector.broadcast %96 : vector<1x64xf32> to vector<16x64xf32>
    %98 = arith.addf %95, %97 : vector<16x64xf32>
    %c0_72 = arith.constant 0 : index
    %c0_73 = arith.constant 0 : index
    %99 = vector.load %arg26[%c0_72, %c0_73] : memref<64x64xf32, #tpu.memory_space<vmem>>, vector<64x64xf32>
    %cst_74 = arith.constant dense<0.000000e+00> : vector<16x64xf32>
    %100 = tpu.matmul %13, %99, %cst_74 {dimension_numbers = #tpu.dot_dimension_numbers<[1], [0], [0], [1], [0, 0, 1, 1], [], []>} : vector<16x64xf32>, vector<64x64xf32>, vector<16x64xf32> -> vector<16x64xf32>
    %c0_75 = arith.constant 0 : index
    %c0_76 = arith.constant 0 : index
    %101 = vector.load %arg29[%c0_75, %c0_76] : memref<1x64xf32, #tpu.memory_space<vmem>>, vector<1x64xf32>
    %102 = vector.broadcast %101 : vector<1x64xf32> to vector<16x64xf32>
    %103 = arith.addf %100, %102 : vector<16x64xf32>
    %c0_77 = arith.constant 0 : index
    %c0_78 = arith.constant 0 : index
    %104 = vector.load %arg27[%c0_77, %c0_78] : memref<64x64xf32, #tpu.memory_space<vmem>>, vector<64x64xf32>
    %cst_79 = arith.constant dense<0.000000e+00> : vector<16x64xf32>
    %105 = tpu.matmul %13, %104, %cst_79 {dimension_numbers = #tpu.dot_dimension_numbers<[1], [0], [0], [1], [0, 0, 1, 1], [], []>} : vector<16x64xf32>, vector<64x64xf32>, vector<16x64xf32> -> vector<16x64xf32>
    %c0_80 = arith.constant 0 : index
    %c0_81 = arith.constant 0 : index
    %106 = vector.load %arg30[%c0_80, %c0_81] : memref<1x64xf32, #tpu.memory_space<vmem>>, vector<1x64xf32>
    %107 = vector.broadcast %106 : vector<1x64xf32> to vector<16x64xf32>
    %108 = arith.addf %105, %107 : vector<16x64xf32>
    %c0_82 = arith.constant 0 : index
    %c0_83 = arith.constant 0 : index
    %109 = vector.load %arg28[%c0_82, %c0_83] : memref<64x64xf32, #tpu.memory_space<vmem>>, vector<64x64xf32>
    %cst_84 = arith.constant dense<0.000000e+00> : vector<16x64xf32>
    %110 = tpu.matmul %13, %109, %cst_84 {dimension_numbers = #tpu.dot_dimension_numbers<[1], [0], [0], [1], [0, 0, 1, 1], [], []>} : vector<16x64xf32>, vector<64x64xf32>, vector<16x64xf32> -> vector<16x64xf32>
    %c0_85 = arith.constant 0 : index
    %c0_86 = arith.constant 0 : index
    %111 = vector.load %arg31[%c0_85, %c0_86] : memref<1x64xf32, #tpu.memory_space<vmem>>, vector<1x64xf32>
    %112 = vector.broadcast %111 : vector<1x64xf32> to vector<16x64xf32>
    %113 = arith.addf %110, %112 : vector<16x64xf32>
    %114 = arith.addf %82, %103 : vector<16x64xf32>
    %115 = arith.negf %114 : vector<16x64xf32>
    %116 = math.exp %115 : vector<16x64xf32>
    %cst_87 = arith.constant 1.000000e+00 : f32
    %117 = vector.broadcast %cst_87 : f32 to vector<16x64xf32>
    %118 = arith.addf %117, %116 : vector<16x64xf32>
    %119 = arith.divf %117, %118 : vector<16x64xf32>
    %120 = arith.addf %90, %108 : vector<16x64xf32>
    %121 = arith.negf %120 : vector<16x64xf32>
    %122 = math.exp %121 : vector<16x64xf32>
    %cst_88 = arith.constant 1.000000e+00 : f32
    %123 = vector.broadcast %cst_88 : f32 to vector<16x64xf32>
    %124 = arith.addf %123, %122 : vector<16x64xf32>
    %125 = arith.divf %123, %124 : vector<16x64xf32>
    %126 = arith.mulf %119, %113 : vector<16x64xf32>
    %127 = arith.addf %98, %126 : vector<16x64xf32>
    %128 = math.tanh %127 : vector<16x64xf32>
    %129 = arith.subf %13, %128 : vector<16x64xf32>
    %130 = arith.mulf %125, %129 : vector<16x64xf32>
    %131 = arith.addf %128, %130 : vector<16x64xf32>
    %c0_89 = arith.constant 0 : index
    %c0_90 = arith.constant 0 : index
    %132 = vector.load %arg32[%c0_89, %c0_90] : memref<64x2xf32, #tpu.memory_space<vmem>>, vector<64x2xf32>
    %cst_91 = arith.constant dense<0.000000e+00> : vector<16x2xf32>
    %133 = tpu.matmul %131, %132, %cst_91 {dimension_numbers = #tpu.dot_dimension_numbers<[1], [0], [0], [1], [0, 0, 1, 1], [], []>} : vector<16x64xf32>, vector<64x2xf32>, vector<16x2xf32> -> vector<16x2xf32>
    %c0_92 = arith.constant 0 : index
    %c0_93 = arith.constant 0 : index
    %134 = vector.load %arg33[%c0_92, %c0_93] : memref<1x2xf32, #tpu.memory_space<vmem>>, vector<1x2xf32>
    %135 = vector.broadcast %134 : vector<1x2xf32> to vector<16x2xf32>
    %136 = arith.addf %133, %135 : vector<16x2xf32>
    %c0_94 = arith.constant 0 : index
    %c0_95 = arith.constant 0 : index
    %137 = vector.load %arg35[%c0_94, %c0_95] : memref<16x64xf32, #tpu.memory_space<vmem>>, vector<16x64xf32>
    tpu.vector_store %arg35[%c0_94, %c0_95], %131 {strides = array<i32>} : memref<16x64xf32, #tpu.memory_space<vmem>>, vector<16x64xf32>,
    %c0_96 = arith.constant 0 : index
    %c0_97 = arith.constant 0 : index
    %138 = vector.load %arg36[%c0_96, %c0_97] : memref<16x2xf32, #tpu.memory_space<vmem>>, vector<16x2xf32>
    tpu.vector_store %arg36[%c0_96, %c0_97], %136 {strides = array<i32>} : memref<16x2xf32, #tpu.memory_space<vmem>>, vector<16x2xf32>,
    %c0_98 = arith.constant 0 : index
    %c0_99 = arith.constant 0 : index
    %c0_100 = arith.constant 0 : index
    %c0_101 = arith.constant 0 : index
    %139 = vector.load %arg34[%c0_98, %c0_99, %c0_100, %c0_101] : memref<1x1x16x2xf32, #tpu.memory_space<vmem>>, vector<1x1x16x2xf32>
    %140 = vector.shape_cast %139 : vector<1x1x16x2xf32> to vector<16x2xf32>
    %141 = vector.shape_cast %136 : vector<16x2xf32> to vector<1x1x16x2xf32>
    tpu.vector_store %arg34[%c0_98, %c0_99, %c0_100, %c0_101], %141 {strides = array<i32>} : memref<1x1x16x2xf32, #tpu.memory_space<vmem>>, vector<1x1x16x2xf32>,
    return
  }
  func.func @transform_0(%arg0: i32, %arg1: i32) -> (i32, i32, i32, i32) {
    %c3_i32 = arith.constant 3 : i32
    %0 = arith.minsi %arg1, %c3_i32 : i32
    %c0_i32 = arith.constant 0 : i32
    %c0_i32_0 = arith.constant 0 : i32
    %c0_i32_1 = arith.constant 0 : i32
    return %arg0, %0, %c0_i32, %c0_i32_0 : i32, i32, i32, i32
  }
  func.func @transform_1(%arg0: i32, %arg1: i32) -> (i32, i32, i32, i32) {
    %c0_i32 = arith.constant 0 : i32
    %c0_i32_0 = arith.constant 0 : i32
    %c0_i32_1 = arith.constant 0 : i32
    return %arg0, %arg1, %c0_i32, %c0_i32_0 : i32, i32, i32, i32
  }
  func.func @transform_2(%arg0: i32, %arg1: i32) -> (i32, i32) {
    %c0_i32 = arith.constant 0 : i32
    %c0_i32_0 = arith.constant 0 : i32
    %c0_i32_1 = arith.constant 0 : i32
    return %c0_i32, %c0_i32_0 : i32, i32
  }
  func.func @transform_3(%arg0: i32, %arg1: i32) -> (i32, i32) {
    %c0_i32 = arith.constant 0 : i32
    %c0_i32_0 = arith.constant 0 : i32
    %c0_i32_1 = arith.constant 0 : i32
    return %c0_i32, %c0_i32_0 : i32, i32
  }
  func.func @transform_4(%arg0: i32, %arg1: i32) -> (i32, i32) {
    %c0_i32 = arith.constant 0 : i32
    %c0_i32_0 = arith.constant 0 : i32
    %c0_i32_1 = arith.constant 0 : i32
    return %c0_i32, %c0_i32_0 : i32, i32
  }
  func.func @transform_5(%arg0: i32, %arg1: i32) -> (i32, i32) {
    %c0_i32 = arith.constant 0 : i32
    %c0_i32_0 = arith.constant 0 : i32
    %c0_i32_1 = arith.constant 0 : i32
    return %c0_i32, %c0_i32_0 : i32, i32
  }
  func.func @transform_6(%arg0: i32, %arg1: i32) -> (i32, i32) {
    %c0_i32 = arith.constant 0 : i32
    %c0_i32_0 = arith.constant 0 : i32
    %c0_i32_1 = arith.constant 0 : i32
    return %c0_i32, %c0_i32_0 : i32, i32
  }
  func.func @transform_7(%arg0: i32, %arg1: i32) -> (i32, i32) {
    %c0_i32 = arith.constant 0 : i32
    %c0_i32_0 = arith.constant 0 : i32
    %c0_i32_1 = arith.constant 0 : i32
    return %c0_i32, %c0_i32_0 : i32, i32
  }
  func.func @transform_8(%arg0: i32, %arg1: i32) -> (i32, i32) {
    %c0_i32 = arith.constant 0 : i32
    %c0_i32_0 = arith.constant 0 : i32
    %c0_i32_1 = arith.constant 0 : i32
    return %c0_i32, %c0_i32_0 : i32, i32
  }
  func.func @transform_9(%arg0: i32, %arg1: i32) -> (i32, i32) {
    %c0_i32 = arith.constant 0 : i32
    %c0_i32_0 = arith.constant 0 : i32
    %c0_i32_1 = arith.constant 0 : i32
    return %c0_i32, %c0_i32_0 : i32, i32
  }
  func.func @transform_10(%arg0: i32, %arg1: i32) -> (i32, i32) {
    %c0_i32 = arith.constant 0 : i32
    %c0_i32_0 = arith.constant 0 : i32
    %c0_i32_1 = arith.constant 0 : i32
    return %c0_i32, %c0_i32_0 : i32, i32
  }
  func.func @transform_11(%arg0: i32, %arg1: i32) -> (i32, i32) {
    %c0_i32 = arith.constant 0 : i32
    %c0_i32_0 = arith.constant 0 : i32
    %c0_i32_1 = arith.constant 0 : i32
    return %c0_i32, %c0_i32_0 : i32, i32
  }
  func.func @transform_12(%arg0: i32, %arg1: i32) -> (i32, i32) {
    %c0_i32 = arith.constant 0 : i32
    %c0_i32_0 = arith.constant 0 : i32
    %c0_i32_1 = arith.constant 0 : i32
    return %c0_i32, %c0_i32_0 : i32, i32
  }
  func.func @transform_13(%arg0: i32, %arg1: i32) -> (i32, i32) {
    %c0_i32 = arith.constant 0 : i32
    %c0_i32_0 = arith.constant 0 : i32
    %c0_i32_1 = arith.constant 0 : i32
    return %c0_i32, %c0_i32_0 : i32, i32
  }
  func.func @transform_14(%arg0: i32, %arg1: i32) -> (i32, i32) {
    %c0_i32 = arith.constant 0 : i32
    %c0_i32_0 = arith.constant 0 : i32
    %c0_i32_1 = arith.constant 0 : i32
    return %c0_i32, %c0_i32_0 : i32, i32
  }
  func.func @transform_15(%arg0: i32, %arg1: i32) -> (i32, i32) {
    %c0_i32 = arith.constant 0 : i32
    %c0_i32_0 = arith.constant 0 : i32
    %c0_i32_1 = arith.constant 0 : i32
    return %c0_i32, %c0_i32_0 : i32, i32
  }
  func.func @transform_16(%arg0: i32, %arg1: i32) -> (i32, i32) {
    %c0_i32 = arith.constant 0 : i32
    %c0_i32_0 = arith.constant 0 : i32
    %c0_i32_1 = arith.constant 0 : i32
    return %c0_i32, %c0_i32_0 : i32, i32
  }
  func.func @transform_17(%arg0: i32, %arg1: i32) -> (i32, i32) {
    %c0_i32 = arith.constant 0 : i32
    %c0_i32_0 = arith.constant 0 : i32
    %c0_i32_1 = arith.constant 0 : i32
    return %c0_i32, %c0_i32_0 : i32, i32
  }
  func.func @transform_18(%arg0: i32, %arg1: i32) -> (i32, i32) {
    %c0_i32 = arith.constant 0 : i32
    %c0_i32_0 = arith.constant 0 : i32
    %c0_i32_1 = arith.constant 0 : i32
    return %c0_i32, %c0_i32_0 : i32, i32
  }
  func.func @transform_19(%arg0: i32, %arg1: i32) -> (i32, i32) {
    %c0_i32 = arith.constant 0 : i32
    %c0_i32_0 = arith.constant 0 : i32
    %c0_i32_1 = arith.constant 0 : i32
    return %c0_i32, %c0_i32_0 : i32, i32
  }
  func.func @transform_20(%arg0: i32, %arg1: i32) -> (i32, i32) {
    %c0_i32 = arith.constant 0 : i32
    %c0_i32_0 = arith.constant 0 : i32
    %c0_i32_1 = arith.constant 0 : i32
    return %c0_i32, %c0_i32_0 : i32, i32
  }
  func.func @transform_21(%arg0: i32, %arg1: i32) -> (i32, i32) {
    %c0_i32 = arith.constant 0 : i32
    %c0_i32_0 = arith.constant 0 : i32
    %c0_i32_1 = arith.constant 0 : i32
    return %c0_i32, %c0_i32_0 : i32, i32
  }
  func.func @transform_22(%arg0: i32, %arg1: i32) -> (i32, i32) {
    %c0_i32 = arith.constant 0 : i32
    %c0_i32_0 = arith.constant 0 : i32
    %c0_i32_1 = arith.constant 0 : i32
    return %c0_i32, %c0_i32_0 : i32, i32
  }
  func.func @transform_23(%arg0: i32, %arg1: i32) -> (i32, i32) {
    %c0_i32 = arith.constant 0 : i32
    %c0_i32_0 = arith.constant 0 : i32
    %c0_i32_1 = arith.constant 0 : i32
    return %c0_i32, %c0_i32_0 : i32, i32
  }
  func.func @transform_24(%arg0: i32, %arg1: i32) -> (i32, i32) {
    %c0_i32 = arith.constant 0 : i32
    %c0_i32_0 = arith.constant 0 : i32
    %c0_i32_1 = arith.constant 0 : i32
    return %c0_i32, %c0_i32_0 : i32, i32
  }
  func.func @transform_25(%arg0: i32, %arg1: i32) -> (i32, i32) {
    %c0_i32 = arith.constant 0 : i32
    %c0_i32_0 = arith.constant 0 : i32
    %c0_i32_1 = arith.constant 0 : i32
    return %c0_i32, %c0_i32_0 : i32, i32
  }
  func.func @transform_26(%arg0: i32, %arg1: i32) -> (i32, i32) {
    %c0_i32 = arith.constant 0 : i32
    %c0_i32_0 = arith.constant 0 : i32
    %c0_i32_1 = arith.constant 0 : i32
    return %c0_i32, %c0_i32_0 : i32, i32
  }
  func.func @transform_27(%arg0: i32, %arg1: i32) -> (i32, i32) {
    %c0_i32 = arith.constant 0 : i32
    %c0_i32_0 = arith.constant 0 : i32
    %c0_i32_1 = arith.constant 0 : i32
    return %c0_i32, %c0_i32_0 : i32, i32
  }
  func.func @transform_28(%arg0: i32, %arg1: i32) -> (i32, i32) {
    %c0_i32 = arith.constant 0 : i32
    %c0_i32_0 = arith.constant 0 : i32
    %c0_i32_1 = arith.constant 0 : i32
    return %c0_i32, %c0_i32_0 : i32, i32
  }
  func.func @transform_29(%arg0: i32, %arg1: i32) -> (i32, i32) {
    %c0_i32 = arith.constant 0 : i32
    %c0_i32_0 = arith.constant 0 : i32
    %c0_i32_1 = arith.constant 0 : i32
    return %c0_i32, %c0_i32_0 : i32, i32
  }
  func.func @transform_30(%arg0: i32, %arg1: i32) -> (i32, i32) {
    %c0_i32 = arith.constant 0 : i32
    %c0_i32_0 = arith.constant 0 : i32
    %c0_i32_1 = arith.constant 0 : i32
    return %c0_i32, %c0_i32_0 : i32, i32
  }
  func.func @transform_31(%arg0: i32, %arg1: i32) -> (i32, i32) {
    %c0_i32 = arith.constant 0 : i32
    %c0_i32_0 = arith.constant 0 : i32
    %c0_i32_1 = arith.constant 0 : i32
    return %c0_i32, %c0_i32_0 : i32, i32
  }
  func.func @transform_32(%arg0: i32, %arg1: i32) -> (i32, i32, i32, i32) {
    %c4_i32 = arith.constant 4 : i32
    %0 = arith.subi %arg1, %c4_i32 : i32
    %c0_i32 = arith.constant 0 : i32
    %1 = arith.maxsi %0, %c0_i32 : i32
    %c0_i32_0 = arith.constant 0 : i32
    %c0_i32_1 = arith.constant 0 : i32
    %c0_i32_2 = arith.constant 0 : i32
    return %arg0, %1, %c0_i32_0, %c0_i32_1 : i32, i32, i32, i32
  }
}

</mosaic_0001>

<llo_original>
// kernel: forward.1
$region0: #{forward.1}
  #allocation0 [shape = 'u32[]', space=smem, size = 0x4, offset = 0x4, fixed_abs, tag = 'smem constant byte address 0x4 - core index']
  #allocation1 [shape = 'u32[144,128]{1,0:T(1,128)}', space=vmem, size = 0x12000, scoped, tag = 'internal scratch']
  #allocation2 [shape = 'f32[16,64]{1,0:T(8,128)}', space=vmem, size = 0x2000, scoped, tag = 'scratch operand']
  #allocation3 [shape = 'f32[16,2]{1,0:T(8,128)}', space=vmem, size = 0x2000, scoped, tag = 'scratch operand']
  #allocation4 [shape = 'f32[16,6]{1,0:T(8,128)}', space=vmem, size = 0x2000, scoped, tag = 'scratch operand']
  %s0 = inlined_call_operand.smem [shape: u32[33], index: -1, kind: input, shape index: {}]
  %s1 = sld [smem:[%s0]]
  %s2 = scalar_lea.smem %s0, 1
  %s3 = sld [smem:[%s2]]
  %s4 = scalar_lea.smem %s0, 2
  %s5 = sld [smem:[%s4]]
  %s6 = scalar_lea.smem %s0, 3
  %s7 = sld [smem:[%s6]]
  %s8 = scalar_lea.smem %s0, 4
  %s9 = sld [smem:[%s8]]
  %s10 = scalar_lea.smem %s0, 5
  %s11 = sld [smem:[%s10]]
  %s12 = scalar_lea.smem %s0, 6
  %s13 = sld [smem:[%s12]]
  %s14 = scalar_lea.smem %s0, 7
  %s15 = sld [smem:[%s14]]
  %s16 = scalar_lea.smem %s0, 8
  %s17 = sld [smem:[%s16]]
  %s18 = scalar_lea.smem %s0, 9
  %s19 = sld [smem:[%s18]]
  %s20 = scalar_lea.smem %s0, 10
  %s21 = sld [smem:[%s20]]
  %s22 = scalar_lea.smem %s0, 11
  %s23 = sld [smem:[%s22]]
  %s24 = scalar_lea.smem %s0, 12
  %s25 = sld [smem:[%s24]]
  %s26 = scalar_lea.smem %s0, 13
  %s27 = sld [smem:[%s26]]
  %s28 = scalar_lea.smem %s0, 14
  %s29 = sld [smem:[%s28]]
  %s30 = scalar_lea.smem %s0, 15
  %s31 = sld [smem:[%s30]]
  %s32 = scalar_lea.smem %s0, 16
  %s33 = sld [smem:[%s32]]
  %s34 = scalar_lea.smem %s0, 17
  %s35 = sld [smem:[%s34]]
  %s36 = scalar_lea.smem %s0, 18
  %s37 = sld [smem:[%s36]]
  %s38 = scalar_lea.smem %s0, 19
  %s39 = sld [smem:[%s38]]
  %s40 = scalar_lea.smem %s0, 20
  %s41 = sld [smem:[%s40]]
  %s42 = scalar_lea.smem %s0, 21
  %s43 = sld [smem:[%s42]]
  %s44 = scalar_lea.smem %s0, 22
  %s45 = sld [smem:[%s44]]
  %s46 = scalar_lea.smem %s0, 23
  %s47 = sld [smem:[%s46]]
  %s48 = scalar_lea.smem %s0, 24
  %s49 = sld [smem:[%s48]]
  %s50 = scalar_lea.smem %s0, 25
  %s51 = sld [smem:[%s50]]
  %s52 = scalar_lea.smem %s0, 26
  %s53 = sld [smem:[%s52]]
  %s54 = scalar_lea.smem %s0, 27
  %s55 = sld [smem:[%s54]]
  %s56 = scalar_lea.smem %s0, 28
  %s57 = sld [smem:[%s56]]
  %s58 = scalar_lea.smem %s0, 29
  %s59 = sld [smem:[%s58]]
  %s60 = scalar_lea.smem %s0, 30
  %s61 = sld [smem:[%s60]]
  %s62 = scalar_lea.smem %s0, 31
  %s63 = sld [smem:[%s62]]
  %s64 = scalar_lea.smem %s0, 32
  %s65 = sld [smem:[%s64]]
  %s66 = sld [smem:[#allocation0]]
  $region173: #{forward.1} parent=0
    _
  %s68 = ssub.s32 1, %s66
  %s69 = scalar_select 0, %s68, %s66
  loop: start=0, step=1, limit=16
  $region2: #{forward.1} parent=0 // loop_pre_header
    _
  $region3: #{forward.1} parent=0 // loop_header
    %s71 = sphi 0, %s75
    %p72 = scmp.ge.s32.totalorder %s71, 16
    %s78 = sphi 0, %s90
    %s79 = sphi 0, %s86
    %s80 = sphi 0, %s78
    %s81 = sphi 0, %s79
    %s82 = sphi 0, %s80
    %s83 = sphi 0, %s81
    %s99 = sphi 0, %s101
    %s102 = sphi 0, %s99
    %s103 = sphi 0, %s102
    %s119 = sphi 0, %s103
    %s127 = sphi 0, %s129
    %s130 = sphi 0, %s127
    %s131 = sphi 0, %s130
    %s147 = sphi 0, %s131
    %s151 = sphi 0, %s151
    %s153 = sphi 0, %s151
    %s154 = sphi 0, %s153
    %s168 = sphi 0, %s154
    %s172 = sphi 0, %s172
    %s174 = sphi 0, %s172
    %s175 = sphi 0, %s174
    %s189 = sphi 0, %s175
    %s193 = sphi 0, %s193
    %s195 = sphi 0, %s193
    %s196 = sphi 0, %s195
    %s210 = sphi 0, %s196
    %s214 = sphi 0, %s214
    %s216 = sphi 0, %s214
    %s217 = sphi 0, %s216
    %s231 = sphi 0, %s217
    %s235 = sphi 0, %s235
    %s237 = sphi 0, %s235
    %s238 = sphi 0, %s237
    %s252 = sphi 0, %s238
    %s256 = sphi 0, %s256
    %s258 = sphi 0, %s256
    %s259 = sphi 0, %s258
    %s273 = sphi 0, %s259
    %s277 = sphi 0, %s277
    %s279 = sphi 0, %s277
    %s280 = sphi 0, %s279
    %s294 = sphi 0, %s280
    %s298 = sphi 0, %s298
    %s300 = sphi 0, %s298
    %s301 = sphi 0, %s300
    %s315 = sphi 0, %s301
    %s319 = sphi 0, %s319
    %s321 = sphi 0, %s319
    %s322 = sphi 0, %s321
    %s336 = sphi 0, %s322
    %s340 = sphi 0, %s340
    %s342 = sphi 0, %s340
    %s343 = sphi 0, %s342
    %s357 = sphi 0, %s343
    %s361 = sphi 0, %s361
    %s363 = sphi 0, %s361
    %s364 = sphi 0, %s363
    %s378 = sphi 0, %s364
    %s382 = sphi 0, %s382
    %s384 = sphi 0, %s382
    %s385 = sphi 0, %s384
    %s399 = sphi 0, %s385
    %s403 = sphi 0, %s403
    %s405 = sphi 0, %s403
    %s406 = sphi 0, %s405
    %s420 = sphi 0, %s406
    %s424 = sphi 0, %s424
    %s426 = sphi 0, %s424
    %s427 = sphi 0, %s426
    %s441 = sphi 0, %s427
    %s445 = sphi 0, %s445
    %s447 = sphi 0, %s445
    %s448 = sphi 0, %s447
    %s462 = sphi 0, %s448
    %s466 = sphi 0, %s466
    %s468 = sphi 0, %s466
    %s469 = sphi 0, %s468
    %s483 = sphi 0, %s469
    %s487 = sphi 0, %s487
    %s489 = sphi 0, %s487
    %s490 = sphi 0, %s489
    %s504 = sphi 0, %s490
    %s508 = sphi 0, %s508
    %s510 = sphi 0, %s508
    %s511 = sphi 0, %s510
    %s525 = sphi 0, %s511
    %s529 = sphi 0, %s529
    %s531 = sphi 0, %s529
    %s532 = sphi 0, %s531
    %s546 = sphi 0, %s532
    %s550 = sphi 0, %s550
    %s552 = sphi 0, %s550
    %s553 = sphi 0, %s552
    %s567 = sphi 0, %s553
    %s571 = sphi 0, %s571
    %s573 = sphi 0, %s571
    %s574 = sphi 0, %s573
    %s588 = sphi 0, %s574
    %s592 = sphi 0, %s592
    %s594 = sphi 0, %s592
    %s595 = sphi 0, %s594
    %s609 = sphi 0, %s595
    %s613 = sphi 0, %s613
    %s615 = sphi 0, %s613
    %s616 = sphi 0, %s615
    %s630 = sphi 0, %s616
    %s634 = sphi 0, %s634
    %s636 = sphi 0, %s634
    %s637 = sphi 0, %s636
    %s651 = sphi 0, %s637
    %s655 = sphi 0, %s655
    %s657 = sphi 0, %s655
    %s658 = sphi 0, %s657
    %s672 = sphi 0, %s658
    %s676 = sphi 0, %s676
    %s678 = sphi 0, %s676
    %s679 = sphi 0, %s678
    %s693 = sphi 0, %s679
    %s697 = sphi 0, %s697
    %s699 = sphi 0, %s697
    %s700 = sphi 0, %s699
    %s714 = sphi 0, %s700
    %s718 = sphi 0, %s718
    %s720 = sphi 0, %s718
    %s721 = sphi 0, %s720
    %s735 = sphi 0, %s721
    %s739 = sphi 0, %s739
    %s741 = sphi 0, %s739
    %s742 = sphi 0, %s741
    %s756 = sphi 0, %s742
    %s760 = sphi 0, %s760
    %s762 = sphi 0, %s760
    %s763 = sphi 0, %s762
    %s777 = sphi 0, %s763
    %s791 = sphi 0, %s793
    %s794 = sphi 0, %s791
    %s795 = sphi 0, %s794
    %s811 = sphi 0, %s795
  $region4: #{forward.1} parent=0 // loop_header_branch
    %74 = sbr.rel (%p72) target = $region8
  $region5: #{forward.1} parent=0 // loop_body
    %s76 = ssub.s32 %s71, 1
    %s77 = ssub.s32 %s71, 2
    %s84 = sadd.s32 1, %s79
    %p85 = scmp.ge.s32.totalorder %s84, 7
    %s86 = scalar_select %p85, 0, %s84
    %s87 = sadd.s32 1, %s78
    %s88 = scalar_select %p85, %s87, %s78
    %p89 = scmp.ge.s32.totalorder %s88, 2
    %s90 = scalar_select %p89, 0, %s88
    %p91 = scmp.lt.s32.totalorder %s79, 3
    %s92 = scalar_select %p91, %s79, 3
    %p93 = scmp.lt.s32.totalorder %s86, 3
    %s94 = scalar_select %p93, %s86, 3
    %s95 = ssub.s32 %s78, %s90
    %s96 = ssub.s32 %s92, %s94
    %s97 = sor.u32 %s95, %s96
    %p98 = scmp.eq.s32.totalorder %s97, 0
    %s100 = sadd.s32 %s99, 1
    %s101 = scalar_select %p98, %s99, %s100
    %p104 = pneg %p98
    %p105 = scmp.eq.s32.totalorder %s71, 13
    %p106 = por %p104, %p105
    %p107 = scmp.ne.s32.totalorder %s99, %s102
    %p108 = scmp.eq.s32.totalorder %s71, 0
    %p109 = por %p107, %p108
    %p110 = scmp.ne.s32.totalorder %s99, %s102
    %p111 = scmp.eq.s32.totalorder %s76, 13
    %p112 = por %p110, %p111
    %p113 = scmp.ne.s32.totalorder %s102, %s103
    %p114 = scmp.eq.s32.totalorder %s76, 0
    %p115 = por %p113, %p114
    %p116 = scmp.ne.s32.totalorder %s102, %s103
    %p117 = scmp.eq.s32.totalorder %s77, 13
    %p118 = por %p116, %p117
    %p120 = scmp.ne.s32.totalorder %s103, %s119
    %p121 = scmp.eq.s32.totalorder %s77, 0
    %p122 = por %p120, %p121
    %s123 = ssub.s32 %s78, %s90
    %s124 = ssub.s32 %s79, %s86
    %s125 = sor.u32 %s123, %s124
    %p126 = scmp.eq.s32.totalorder %s125, 0
    %s128 = sadd.s32 %s127, 1
    %s129 = scalar_select %p126, %s127, %s128
    %p132 = pneg %p126
    %p133 = scmp.eq.s32.totalorder %s71, 13
    %p134 = por %p132, %p133
    %p135 = scmp.ne.s32.totalorder %s127, %s130
    %p136 = scmp.eq.s32.totalorder %s71, 0
    %p137 = por %p135, %p136
    %p138 = scmp.ne.s32.totalorder %s127, %s130
    %p139 = scmp.eq.s32.totalorder %s76, 13
    %p140 = por %p138, %p139
    %p141 = scmp.ne.s32.totalorder %s130, %s131
    %p142 = scmp.eq.s32.totalorder %s76, 0
    %p143 = por %p141, %p142
    %p144 = scmp.ne.s32.totalorder %s130, %s131
    %p145 = scmp.eq.s32.totalorder %s77, 13
    %p146 = por %p144, %p145
    %p148 = scmp.ne.s32.totalorder %s131, %s147
    %p149 = scmp.eq.s32.totalorder %s77, 0
    %p150 = por %p148, %p149
    %s152 = sadd.s32 %s151, 1
    %p155 = scmp.eq.s32.totalorder %s71, 13
    %p156 = scmp.ne.s32.totalorder %s151, %s153
    %p157 = scmp.eq.s32.totalorder %s71, 0
    %p158 = por %p156, %p157
    %p159 = scmp.ne.s32.totalorder %s151, %s153
    %p160 = scmp.eq.s32.totalorder %s76, 13
    %p161 = por %p159, %p160
    %p162 = scmp.ne.s32.totalorder %s153, %s154
    %p163 = scmp.eq.s32.totalorder %s76, 0
    %p164 = por %p162, %p163
    %p165 = scmp.ne.s32.totalorder %s153, %s154
    %p166 = scmp.eq.s32.totalorder %s77, 13
    %p167 = por %p165, %p166
    %p169 = scmp.ne.s32.totalorder %s154, %s168
    %p170 = scmp.eq.s32.totalorder %s77, 0
    %p171 = por %p169, %p170
    %s173 = sadd.s32 %s172, 1
    %p176 = scmp.eq.s32.totalorder %s71, 13
    %p177 = scmp.ne.s32.totalorder %s172, %s174
    %p178 = scmp.eq.s32.totalorder %s71, 0
    %p179 = por %p177, %p178
    %p180 = scmp.ne.s32.totalorder %s172, %s174
    %p181 = scmp.eq.s32.totalorder %s76, 13
    %p182 = por %p180, %p181
    %p183 = scmp.ne.s32.totalorder %s174, %s175
    %p184 = scmp.eq.s32.totalorder %s76, 0
    %p185 = por %p183, %p184
    %p186 = scmp.ne.s32.totalorder %s174, %s175
    %p187 = scmp.eq.s32.totalorder %s77, 13
    %p188 = por %p186, %p187
    %p190 = scmp.ne.s32.totalorder %s175, %s189
    %p191 = scmp.eq.s32.totalorder %s77, 0
    %p192 = por %p190, %p191
    %s194 = sadd.s32 %s193, 1
    %p197 = scmp.eq.s32.totalorder %s71, 13
    %p198 = scmp.ne.s32.totalorder %s193, %s195
    %p199 = scmp.eq.s32.totalorder %s71, 0
    %p200 = por %p198, %p199
    %p201 = scmp.ne.s32.totalorder %s193, %s195
    %p202 = scmp.eq.s32.totalorder %s76, 13
    %p203 = por %p201, %p202
    %p204 = scmp.ne.s32.totalorder %s195, %s196
    %p205 = scmp.eq.s32.totalorder %s76, 0
    %p206 = por %p204, %p205
    %p207 = scmp.ne.s32.totalorder %s195, %s196
    %p208 = scmp.eq.s32.totalorder %s77, 13
    %p209 = por %p207, %p208
    %p211 = scmp.ne.s32.totalorder %s196, %s210
    %p212 = scmp.eq.s32.totalorder %s77, 0
    %p213 = por %p211, %p212
    %s215 = sadd.s32 %s214, 1
    %p218 = scmp.eq.s32.totalorder %s71, 13
    %p219 = scmp.ne.s32.totalorder %s214, %s216
    %p220 = scmp.eq.s32.totalorder %s71, 0
    %p221 = por %p219, %p220
    %p222 = scmp.ne.s32.totalorder %s214, %s216
    %p223 = scmp.eq.s32.totalorder %s76, 13
    %p224 = por %p222, %p223
    %p225 = scmp.ne.s32.totalorder %s216, %s217
    %p226 = scmp.eq.s32.totalorder %s76, 0
    %p227 = por %p225, %p226
    %p228 = scmp.ne.s32.totalorder %s216, %s217
    %p229 = scmp.eq.s32.totalorder %s77, 13
    %p230 = por %p228, %p229
    %p232 = scmp.ne.s32.totalorder %s217, %s231
    %p233 = scmp.eq.s32.totalorder %s77, 0
    %p234 = por %p232, %p233
    %s236 = sadd.s32 %s235, 1
    %p239 = scmp.eq.s32.totalorder %s71, 13
    %p240 = scmp.ne.s32.totalorder %s235, %s237
    %p241 = scmp.eq.s32.totalorder %s71, 0
    %p242 = por %p240, %p241
    %p243 = scmp.ne.s32.totalorder %s235, %s237
    %p244 = scmp.eq.s32.totalorder %s76, 13
    %p245 = por %p243, %p244
    %p246 = scmp.ne.s32.totalorder %s237, %s238
    %p247 = scmp.eq.s32.totalorder %s76, 0
    %p248 = por %p246, %p247
    %p249 = scmp.ne.s32.totalorder %s237, %s238
    %p250 = scmp.eq.s32.totalorder %s77, 13
    %p251 = por %p249, %p250
    %p253 = scmp.ne.s32.totalorder %s238, %s252
    %p254 = scmp.eq.s32.totalorder %s77, 0
    %p255 = por %p253, %p254
    %s257 = sadd.s32 %s256, 1
    %p260 = scmp.eq.s32.totalorder %s71, 13
    %p261 = scmp.ne.s32.totalorder %s256, %s258
    %p262 = scmp.eq.s32.totalorder %s71, 0
    %p263 = por %p261, %p262
    %p264 = scmp.ne.s32.totalorder %s256, %s258
    %p265 = scmp.eq.s32.totalorder %s76, 13
    %p266 = por %p264, %p265
    %p267 = scmp.ne.s32.totalorder %s258, %s259
    %p268 = scmp.eq.s32.totalorder %s76, 0
    %p269 = por %p267, %p268
    %p270 = scmp.ne.s32.totalorder %s258, %s259
    %p271 = scmp.eq.s32.totalorder %s77, 13
    %p272 = por %p270, %p271
    %p274 = scmp.ne.s32.totalorder %s259, %s273
    %p275 = scmp.eq.s32.totalorder %s77, 0
    %p276 = por %p274, %p275
    %s278 = sadd.s32 %s277, 1
    %p281 = scmp.eq.s32.totalorder %s71, 13
    %p282 = scmp.ne.s32.totalorder %s277, %s279
    %p283 = scmp.eq.s32.totalorder %s71, 0
    %p284 = por %p282, %p283
    %p285 = scmp.ne.s32.totalorder %s277, %s279
    %p286 = scmp.eq.s32.totalorder %s76, 13
    %p287 = por %p285, %p286
    %p288 = scmp.ne.s32.totalorder %s279, %s280
    %p289 = scmp.eq.s32.totalorder %s76, 0
    %p290 = por %p288, %p289
    %p291 = scmp.ne.s32.totalorder %s279, %s280
    %p292 = scmp.eq.s32.totalorder %s77, 13
    %p293 = por %p291, %p292
    %p295 = scmp.ne.s32.totalorder %s280, %s294
    %p296 = scmp.eq.s32.totalorder %s77, 0
    %p297 = por %p295, %p296
    %s299 = sadd.s32 %s298, 1
    %p302 = scmp.eq.s32.totalorder %s71, 13
    %p303 = scmp.ne.s32.totalorder %s298, %s300
    %p304 = scmp.eq.s32.totalorder %s71, 0
    %p305 = por %p303, %p304
    %p306 = scmp.ne.s32.totalorder %s298, %s300
    %p307 = scmp.eq.s32.totalorder %s76, 13
    %p308 = por %p306, %p307
    %p309 = scmp.ne.s32.totalorder %s300, %s301
    %p310 = scmp.eq.s32.totalorder %s76, 0
    %p311 = por %p309, %p310
    %p312 = scmp.ne.s32.totalorder %s300, %s301
    %p313 = scmp.eq.s32.totalorder %s77, 13
    %p314 = por %p312, %p313
    %p316 = scmp.ne.s32.totalorder %s301, %s315
    %p317 = scmp.eq.s32.totalorder %s77, 0
    %p318 = por %p316, %p317
    %s320 = sadd.s32 %s319, 1
    %p323 = scmp.eq.s32.totalorder %s71, 13
    %p324 = scmp.ne.s32.totalorder %s319, %s321
    %p325 = scmp.eq.s32.totalorder %s71, 0
    %p326 = por %p324, %p325
    %p327 = scmp.ne.s32.totalorder %s319, %s321
    %p328 = scmp.eq.s32.totalorder %s76, 13
    %p329 = por %p327, %p328
    %p330 = scmp.ne.s32.totalorder %s321, %s322
    %p331 = scmp.eq.s32.totalorder %s76, 0
    %p332 = por %p330, %p331
    %p333 = scmp.ne.s32.totalorder %s321, %s322
    %p334 = scmp.eq.s32.totalorder %s77, 13
    %p335 = por %p333, %p334
    %p337 = scmp.ne.s32.totalorder %s322, %s336
    %p338 = scmp.eq.s32.totalorder %s77, 0
    %p339 = por %p337, %p338
    %s341 = sadd.s32 %s340, 1
    %p344 = scmp.eq.s32.totalorder %s71, 13
    %p345 = scmp.ne.s32.totalorder %s340, %s342
    %p346 = scmp.eq.s32.totalorder %s71, 0
    %p347 = por %p345, %p346
    %p348 = scmp.ne.s32.totalorder %s340, %s342
    %p349 = scmp.eq.s32.totalorder %s76, 13
    %p350 = por %p348, %p349
    %p351 = scmp.ne.s32.totalorder %s342, %s343
    %p352 = scmp.eq.s32.totalorder %s76, 0
    %p353 = por %p351, %p352
    %p354 = scmp.ne.s32.totalorder %s342, %s343
    %p355 = scmp.eq.s32.totalorder %s77, 13
    %p356 = por %p354, %p355
    %p358 = scmp.ne.s32.totalorder %s343, %s357
    %p359 = scmp.eq.s32.totalorder %s77, 0
    %p360 = por %p358, %p359
    %s362 = sadd.s32 %s361, 1
    %p365 = scmp.eq.s32.totalorder %s71, 13
    %p366 = scmp.ne.s32.totalorder %s361, %s363
    %p367 = scmp.eq.s32.totalorder %s71, 0
    %p368 = por %p366, %p367
    %p369 = scmp.ne.s32.totalorder %s361, %s363
    %p370 = scmp.eq.s32.totalorder %s76, 13
    %p371 = por %p369, %p370
    %p372 = scmp.ne.s32.totalorder %s363, %s364
    %p373 = scmp.eq.s32.totalorder %s76, 0
    %p374 = por %p372, %p373
    %p375 = scmp.ne.s32.totalorder %s363, %s364
    %p376 = scmp.eq.s32.totalorder %s77, 13
    %p377 = por %p375, %p376
    %p379 = scmp.ne.s32.totalorder %s364, %s378
    %p380 = scmp.eq.s32.totalorder %s77, 0
    %p381 = por %p379, %p380
    %s383 = sadd.s32 %s382, 1
    %p386 = scmp.eq.s32.totalorder %s71, 13
    %p387 = scmp.ne.s32.totalorder %s382, %s384
    %p388 = scmp.eq.s32.totalorder %s71, 0
    %p389 = por %p387, %p388
    %p390 = scmp.ne.s32.totalorder %s382, %s384
    %p391 = scmp.eq.s32.totalorder %s76, 13
    %p392 = por %p390, %p391
    %p393 = scmp.ne.s32.totalorder %s384, %s385
    %p394 = scmp.eq.s32.totalorder %s76, 0
    %p395 = por %p393, %p394
    %p396 = scmp.ne.s32.totalorder %s384, %s385
    %p397 = scmp.eq.s32.totalorder %s77, 13
    %p398 = por %p396, %p397
    %p400 = scmp.ne.s32.totalorder %s385, %s399
    %p401 = scmp.eq.s32.totalorder %s77, 0
    %p402 = por %p400, %p401
    %s404 = sadd.s32 %s403, 1
    %p407 = scmp.eq.s32.totalorder %s71, 13
    %p408 = scmp.ne.s32.totalorder %s403, %s405
    %p409 = scmp.eq.s32.totalorder %s71, 0
    %p410 = por %p408, %p409
    %p411 = scmp.ne.s32.totalorder %s403, %s405
    %p412 = scmp.eq.s32.totalorder %s76, 13
    %p413 = por %p411, %p412
    %p414 = scmp.ne.s32.totalorder %s405, %s406
    %p415 = scmp.eq.s32.totalorder %s76, 0
    %p416 = por %p414, %p415
    %p417 = scmp.ne.s32.totalorder %s405, %s406
    %p418 = scmp.eq.s32.totalorder %s77, 13
    %p419 = por %p417, %p418
    %p421 = scmp.ne.s32.totalorder %s406, %s420
    %p422 = scmp.eq.s32.totalorder %s77, 0
    %p423 = por %p421, %p422
    %s425 = sadd.s32 %s424, 1
    %p428 = scmp.eq.s32.totalorder %s71, 13
    %p429 = scmp.ne.s32.totalorder %s424, %s426
    %p430 = scmp.eq.s32.totalorder %s71, 0
    %p431 = por %p429, %p430
    %p432 = scmp.ne.s32.totalorder %s424, %s426
    %p433 = scmp.eq.s32.totalorder %s76, 13
    %p434 = por %p432, %p433
    %p435 = scmp.ne.s32.totalorder %s426, %s427
    %p436 = scmp.eq.s32.totalorder %s76, 0
    %p437 = por %p435, %p436
    %p438 = scmp.ne.s32.totalorder %s426, %s427
    %p439 = scmp.eq.s32.totalorder %s77, 13
    %p440 = por %p438, %p439
    %p442 = scmp.ne.s32.totalorder %s427, %s441
    %p443 = scmp.eq.s32.totalorder %s77, 0
    %p444 = por %p442, %p443
    %s446 = sadd.s32 %s445, 1
    %p449 = scmp.eq.s32.totalorder %s71, 13
    %p450 = scmp.ne.s32.totalorder %s445, %s447
    %p451 = scmp.eq.s32.totalorder %s71, 0
    %p452 = por %p450, %p451
    %p453 = scmp.ne.s32.totalorder %s445, %s447
    %p454 = scmp.eq.s32.totalorder %s76, 13
    %p455 = por %p453, %p454
    %p456 = scmp.ne.s32.totalorder %s447, %s448
    %p457 = scmp.eq.s32.totalorder %s76, 0
    %p458 = por %p456, %p457
    %p459 = scmp.ne.s32.totalorder %s447, %s448
    %p460 = scmp.eq.s32.totalorder %s77, 13
    %p461 = por %p459, %p460
    %p463 = scmp.ne.s32.totalorder %s448, %s462
    %p464 = scmp.eq.s32.totalorder %s77, 0
    %p465 = por %p463, %p464
    %s467 = sadd.s32 %s466, 1
    %p470 = scmp.eq.s32.totalorder %s71, 13
    %p471 = scmp.ne.s32.totalorder %s466, %s468
    %p472 = scmp.eq.s32.totalorder %s71, 0
    %p473 = por %p471, %p472
    %p474 = scmp.ne.s32.totalorder %s466, %s468
    %p475 = scmp.eq.s32.totalorder %s76, 13
    %p476 = por %p474, %p475
    %p477 = scmp.ne.s32.totalorder %s468, %s469
    %p478 = scmp.eq.s32.totalorder %s76, 0
    %p479 = por %p477, %p478
    %p480 = scmp.ne.s32.totalorder %s468, %s469
    %p481 = scmp.eq.s32.totalorder %s77, 13
    %p482 = por %p480, %p481
    %p484 = scmp.ne.s32.totalorder %s469, %s483
    %p485 = scmp.eq.s32.totalorder %s77, 0
    %p486 = por %p484, %p485
    %s488 = sadd.s32 %s487, 1
    %p491 = scmp.eq.s32.totalorder %s71, 13
    %p492 = scmp.ne.s32.totalorder %s487, %s489
    %p493 = scmp.eq.s32.totalorder %s71, 0
    %p494 = por %p492, %p493
    %p495 = scmp.ne.s32.totalorder %s487, %s489
    %p496 = scmp.eq.s32.totalorder %s76, 13
    %p497 = por %p495, %p496
    %p498 = scmp.ne.s32.totalorder %s489, %s490
    %p499 = scmp.eq.s32.totalorder %s76, 0
    %p500 = por %p498, %p499
    %p501 = scmp.ne.s32.totalorder %s489, %s490
    %p502 = scmp.eq.s32.totalorder %s77, 13
    %p503 = por %p501, %p502
    %p505 = scmp.ne.s32.totalorder %s490, %s504
    %p506 = scmp.eq.s32.totalorder %s77, 0
    %p507 = por %p505, %p506
    %s509 = sadd.s32 %s508, 1
    %p512 = scmp.eq.s32.totalorder %s71, 13
    %p513 = scmp.ne.s32.totalorder %s508, %s510
    %p514 = scmp.eq.s32.totalorder %s71, 0
    %p515 = por %p513, %p514
    %p516 = scmp.ne.s32.totalorder %s508, %s510
    %p517 = scmp.eq.s32.totalorder %s76, 13
    %p518 = por %p516, %p517
    %p519 = scmp.ne.s32.totalorder %s510, %s511
    %p520 = scmp.eq.s32.totalorder %s76, 0
    %p521 = por %p519, %p520
    %p522 = scmp.ne.s32.totalorder %s510, %s511
    %p523 = scmp.eq.s32.totalorder %s77, 13
    %p524 = por %p522, %p523
    %p526 = scmp.ne.s32.totalorder %s511, %s525
    %p527 = scmp.eq.s32.totalorder %s77, 0
    %p528 = por %p526, %p527
    %s530 = sadd.s32 %s529, 1
    %p533 = scmp.eq.s32.totalorder %s71, 13
    %p534 = scmp.ne.s32.totalorder %s529, %s531
    %p535 = scmp.eq.s32.totalorder %s71, 0
    %p536 = por %p534, %p535
    %p537 = scmp.ne.s32.totalorder %s529, %s531
    %p538 = scmp.eq.s32.totalorder %s76, 13
    %p539 = por %p537, %p538
    %p540 = scmp.ne.s32.totalorder %s531, %s532
    %p541 = scmp.eq.s32.totalorder %s76, 0
    %p542 = por %p540, %p541
    %p543 = scmp.ne.s32.totalorder %s531, %s532
    %p544 = scmp.eq.s32.totalorder %s77, 13
    %p545 = por %p543, %p544
    %p547 = scmp.ne.s32.totalorder %s532, %s546
    %p548 = scmp.eq.s32.totalorder %s77, 0
    %p549 = por %p547, %p548
    %s551 = sadd.s32 %s550, 1
    %p554 = scmp.eq.s32.totalorder %s71, 13
    %p555 = scmp.ne.s32.totalorder %s550, %s552
    %p556 = scmp.eq.s32.totalorder %s71, 0
    %p557 = por %p555, %p556
    %p558 = scmp.ne.s32.totalorder %s550, %s552
    %p559 = scmp.eq.s32.totalorder %s76, 13
    %p560 = por %p558, %p559
    %p561 = scmp.ne.s32.totalorder %s552, %s553
    %p562 = scmp.eq.s32.totalorder %s76, 0
    %p563 = por %p561, %p562
    %p564 = scmp.ne.s32.totalorder %s552, %s553
    %p565 = scmp.eq.s32.totalorder %s77, 13
    %p566 = por %p564, %p565
    %p568 = scmp.ne.s32.totalorder %s553, %s567
    %p569 = scmp.eq.s32.totalorder %s77, 0
    %p570 = por %p568, %p569
    %s572 = sadd.s32 %s571, 1
    %p575 = scmp.eq.s32.totalorder %s71, 13
    %p576 = scmp.ne.s32.totalorder %s571, %s573
    %p577 = scmp.eq.s32.totalorder %s71, 0
    %p578 = por %p576, %p577
    %p579 = scmp.ne.s32.totalorder %s571, %s573
    %p580 = scmp.eq.s32.totalorder %s76, 13
    %p581 = por %p579, %p580
    %p582 = scmp.ne.s32.totalorder %s573, %s574
    %p583 = scmp.eq.s32.totalorder %s76, 0
    %p584 = por %p582, %p583
    %p585 = scmp.ne.s32.totalorder %s573, %s574
    %p586 = scmp.eq.s32.totalorder %s77, 13
    %p587 = por %p585, %p586
    %p589 = scmp.ne.s32.totalorder %s574, %s588
    %p590 = scmp.eq.s32.totalorder %s77, 0
    %p591 = por %p589, %p590
    %s593 = sadd.s32 %s592, 1
    %p596 = scmp.eq.s32.totalorder %s71, 13
    %p597 = scmp.ne.s32.totalorder %s592, %s594
    %p598 = scmp.eq.s32.totalorder %s71, 0
    %p599 = por %p597, %p598
    %p600 = scmp.ne.s32.totalorder %s592, %s594
    %p601 = scmp.eq.s32.totalorder %s76, 13
    %p602 = por %p600, %p601
    %p603 = scmp.ne.s32.totalorder %s594, %s595
    %p604 = scmp.eq.s32.totalorder %s76, 0
    %p605 = por %p603, %p604
    %p606 = scmp.ne.s32.totalorder %s594, %s595
    %p607 = scmp.eq.s32.totalorder %s77, 13
    %p608 = por %p606, %p607
    %p610 = scmp.ne.s32.totalorder %s595, %s609
    %p611 = scmp.eq.s32.totalorder %s77, 0
    %p612 = por %p610, %p611
    %s614 = sadd.s32 %s613, 1
    %p617 = scmp.eq.s32.totalorder %s71, 13
    %p618 = scmp.ne.s32.totalorder %s613, %s615
    %p619 = scmp.eq.s32.totalorder %s71, 0
    %p620 = por %p618, %p619
    %p621 = scmp.ne.s32.totalorder %s613, %s615
    %p622 = scmp.eq.s32.totalorder %s76, 13
    %p623 = por %p621, %p622
    %p624 = scmp.ne.s32.totalorder %s615, %s616
    %p625 = scmp.eq.s32.totalorder %s76, 0
    %p626 = por %p624, %p625
    %p627 = scmp.ne.s32.totalorder %s615, %s616
    %p628 = scmp.eq.s32.totalorder %s77, 13
    %p629 = por %p627, %p628
    %p631 = scmp.ne.s32.totalorder %s616, %s630
    %p632 = scmp.eq.s32.totalorder %s77, 0
    %p633 = por %p631, %p632
    %s635 = sadd.s32 %s634, 1
    %p638 = scmp.eq.s32.totalorder %s71, 13
    %p639 = scmp.ne.s32.totalorder %s634, %s636
    %p640 = scmp.eq.s32.totalorder %s71, 0
    %p641 = por %p639, %p640
    %p642 = scmp.ne.s32.totalorder %s634, %s636
    %p643 = scmp.eq.s32.totalorder %s76, 13
    %p644 = por %p642, %p643
    %p645 = scmp.ne.s32.totalorder %s636, %s637
    %p646 = scmp.eq.s32.totalorder %s76, 0
    %p647 = por %p645, %p646
    %p648 = scmp.ne.s32.totalorder %s636, %s637
    %p649 = scmp.eq.s32.totalorder %s77, 13
    %p650 = por %p648, %p649
    %p652 = scmp.ne.s32.totalorder %s637, %s651
    %p653 = scmp.eq.s32.totalorder %s77, 0
    %p654 = por %p652, %p653
    %s656 = sadd.s32 %s655, 1
    %p659 = scmp.eq.s32.totalorder %s71, 13
    %p660 = scmp.ne.s32.totalorder %s655, %s657
    %p661 = scmp.eq.s32.totalorder %s71, 0
    %p662 = por %p660, %p661
    %p663 = scmp.ne.s32.totalorder %s655, %s657
    %p664 = scmp.eq.s32.totalorder %s76, 13
    %p665 = por %p663, %p664
    %p666 = scmp.ne.s32.totalorder %s657, %s658
    %p667 = scmp.eq.s32.totalorder %s76, 0
    %p668 = por %p666, %p667
    %p669 = scmp.ne.s32.totalorder %s657, %s658
    %p670 = scmp.eq.s32.totalorder %s77, 13
    %p671 = por %p669, %p670
    %p673 = scmp.ne.s32.totalorder %s658, %s672
    %p674 = scmp.eq.s32.totalorder %s77, 0
    %p675 = por %p673, %p674
    %s677 = sadd.s32 %s676, 1
    %p680 = scmp.eq.s32.totalorder %s71, 13
    %p681 = scmp.ne.s32.totalorder %s676, %s678
    %p682 = scmp.eq.s32.totalorder %s71, 0
    %p683 = por %p681, %p682
    %p684 = scmp.ne.s32.totalorder %s676, %s678
    %p685 = scmp.eq.s32.totalorder %s76, 13
    %p686 = por %p684, %p685
    %p687 = scmp.ne.s32.totalorder %s678, %s679
    %p688 = scmp.eq.s32.totalorder %s76, 0
    %p689 = por %p687, %p688
    %p690 = scmp.ne.s32.totalorder %s678, %s679
    %p691 = scmp.eq.s32.totalorder %s77, 13
    %p692 = por %p690, %p691
    %p694 = scmp.ne.s32.totalorder %s679, %s693
    %p695 = scmp.eq.s32.totalorder %s77, 0
    %p696 = por %p694, %p695
    %s698 = sadd.s32 %s697, 1
    %p701 = scmp.eq.s32.totalorder %s71, 13
    %p702 = scmp.ne.s32.totalorder %s697, %s699
    %p703 = scmp.eq.s32.totalorder %s71, 0
    %p704 = por %p702, %p703
    %p705 = scmp.ne.s32.totalorder %s697, %s699
    %p706 = scmp.eq.s32.totalorder %s76, 13
    %p707 = por %p705, %p706
    %p708 = scmp.ne.s32.totalorder %s699, %s700
    %p709 = scmp.eq.s32.totalorder %s76, 0
    %p710 = por %p708, %p709
    %p711 = scmp.ne.s32.totalorder %s699, %s700
    %p712 = scmp.eq.s32.totalorder %s77, 13
    %p713 = por %p711, %p712
    %p715 = scmp.ne.s32.totalorder %s700, %s714
    %p716 = scmp.eq.s32.totalorder %s77, 0
    %p717 = por %p715, %p716
    %s719 = sadd.s32 %s718, 1
    %p722 = scmp.eq.s32.totalorder %s71, 13
    %p723 = scmp.ne.s32.totalorder %s718, %s720
    %p724 = scmp.eq.s32.totalorder %s71, 0
    %p725 = por %p723, %p724
    %p726 = scmp.ne.s32.totalorder %s718, %s720
    %p727 = scmp.eq.s32.totalorder %s76, 13
    %p728 = por %p726, %p727
    %p729 = scmp.ne.s32.totalorder %s720, %s721
    %p730 = scmp.eq.s32.totalorder %s76, 0
    %p731 = por %p729, %p730
    %p732 = scmp.ne.s32.totalorder %s720, %s721
    %p733 = scmp.eq.s32.totalorder %s77, 13
    %p734 = por %p732, %p733
    %p736 = scmp.ne.s32.totalorder %s721, %s735
    %p737 = scmp.eq.s32.totalorder %s77, 0
    %p738 = por %p736, %p737
    %s740 = sadd.s32 %s739, 1
    %p743 = scmp.eq.s32.totalorder %s71, 13
    %p744 = scmp.ne.s32.totalorder %s739, %s741
    %p745 = scmp.eq.s32.totalorder %s71, 0
    %p746 = por %p744, %p745
    %p747 = scmp.ne.s32.totalorder %s739, %s741
    %p748 = scmp.eq.s32.totalorder %s76, 13
    %p749 = por %p747, %p748
    %p750 = scmp.ne.s32.totalorder %s741, %s742
    %p751 = scmp.eq.s32.totalorder %s76, 0
    %p752 = por %p750, %p751
    %p753 = scmp.ne.s32.totalorder %s741, %s742
    %p754 = scmp.eq.s32.totalorder %s77, 13
    %p755 = por %p753, %p754
    %p757 = scmp.ne.s32.totalorder %s742, %s756
    %p758 = scmp.eq.s32.totalorder %s77, 0
    %p759 = por %p757, %p758
    %s761 = sadd.s32 %s760, 1
    %p764 = scmp.eq.s32.totalorder %s71, 13
    %p765 = scmp.ne.s32.totalorder %s760, %s762
    %p766 = scmp.eq.s32.totalorder %s71, 0
    %p767 = por %p765, %p766
    %p768 = scmp.ne.s32.totalorder %s760, %s762
    %p769 = scmp.eq.s32.totalorder %s76, 13
    %p770 = por %p768, %p769
    %p771 = scmp.ne.s32.totalorder %s762, %s763
    %p772 = scmp.eq.s32.totalorder %s76, 0
    %p773 = por %p771, %p772
    %p774 = scmp.ne.s32.totalorder %s762, %s763
    %p775 = scmp.eq.s32.totalorder %s77, 13
    %p776 = por %p774, %p775
    %p778 = scmp.ne.s32.totalorder %s763, %s777
    %p779 = scmp.eq.s32.totalorder %s77, 0
    %p780 = por %p778, %p779
    %s781 = ssub.s32 %s79, 4
    %p782 = scmp.gt.s32.totalorder %s781, 0
    %s783 = scalar_select %p782, %s781, 0
    %s784 = ssub.s32 %s86, 4
    %p785 = scmp.gt.s32.totalorder %s784, 0
    %s786 = scalar_select %p785, %s784, 0
    %s787 = ssub.s32 %s78, %s90
    %s788 = ssub.s32 %s783, %s786
    %s789 = sor.u32 %s787, %s788
    %p790 = scmp.eq.s32.totalorder %s789, 0
    %s792 = sadd.s32 %s791, 1
    %s793 = scalar_select %p790, %s791, %s792
    %p796 = pneg %p790
    %p797 = scmp.eq.s32.totalorder %s71, 13
    %p798 = por %p796, %p797
    %p799 = scmp.ne.s32.totalorder %s791, %s794
    %p800 = scmp.eq.s32.totalorder %s71, 0
    %p801 = por %p799, %p800
    %p802 = scmp.ne.s32.totalorder %s791, %s794
    %p803 = scmp.eq.s32.totalorder %s76, 13
    %p804 = por %p802, %p803
    %p805 = scmp.ne.s32.totalorder %s794, %s795
    %p806 = scmp.eq.s32.totalorder %s76, 0
    %p807 = por %p805, %p806
    %p808 = scmp.ne.s32.totalorder %s794, %s795
    %p809 = scmp.eq.s32.totalorder %s77, 13
    %p810 = por %p808, %p809
    %p812 = scmp.ne.s32.totalorder %s795, %s811
    %p813 = scmp.eq.s32.totalorder %s77, 0
    %p814 = por %p812, %p813
    %p815 = scmp.le.s32.totalorder 1, %s71
    %p816 = scmp.lt.s32.totalorder %s71, 15
    %p817 = pnand %p815, %p816
    %p818 = pneg %p817
    // Predicated region
    $region9: #{forward.1} parent=5 // pred_check
      _
    $region10: #{forward.1} parent=5 // pred_check_branch
      %820 = sbr.rel (%p817) target = $region12
    $region11: #{forward.1} parent=5 // pred_region
      %s821 = ssub.s32 %s71, 1
      // Predicated region
      $region13: #{forward.1} parent=11 // pred_check
        %p822 = pneg %p164
      $region14: #{forward.1} parent=11 // pred_check_branch
        %824 = sbr.rel (%p822) target = $region16
      $region15: #{forward.1} parent=11 // pred_region
        _
      $region16: #{forward.1} parent=11 // pred_fallthru
        _
      // Predicated region
      $region17: #{forward.1} parent=11 // pred_check
        %p825 = pneg %p185
      $region18: #{forward.1} parent=11 // pred_check_branch
        %827 = sbr.rel (%p825) target = $region20
      $region19: #{forward.1} parent=11 // pred_region
        _
      $region20: #{forward.1} parent=11 // pred_fallthru
        _
      // Predicated region
      $region21: #{forward.1} parent=11 // pred_check
        %p828 = pneg %p206
      $region22: #{forward.1} parent=11 // pred_check_branch
        %830 = sbr.rel (%p828) target = $region24
      $region23: #{forward.1} parent=11 // pred_region
        _
      $region24: #{forward.1} parent=11 // pred_fallthru
        _
      // Predicated region
      $region25: #{forward.1} parent=11 // pred_check
        %p831 = pneg %p227
      $region26: #{forward.1} parent=11 // pred_check_branch
        %833 = sbr.rel (%p831) target = $region28
      $region27: #{forward.1} parent=11 // pred_region
        _
      $region28: #{forward.1} parent=11 // pred_fallthru
        _
      // Predicated region
      $region29: #{forward.1} parent=11 // pred_check
        %p834 = pneg %p248
      $region30: #{forward.1} parent=11 // pred_check_branch
        %836 = sbr.rel (%p834) target = $region32
      $region31: #{forward.1} parent=11 // pred_region
        _
      $region32: #{forward.1} parent=11 // pred_fallthru
        _
      // Predicated region
      $region33: #{forward.1} parent=11 // pred_check
        %p837 = pneg %p269
      $region34: #{forward.1} parent=11 // pred_check_branch
        %839 = sbr.rel (%p837) target = $region36
      $region35: #{forward.1} parent=11 // pred_region
        _
      $region36: #{forward.1} parent=11 // pred_fallthru
        _
      // Predicated region
      $region37: #{forward.1} parent=11 // pred_check
        %p840 = pneg %p290
      $region38: #{forward.1} parent=11 // pred_check_branch
        %842 = sbr.rel (%p840) target = $region40
      $region39: #{forward.1} parent=11 // pred_region
        _
      $region40: #{forward.1} parent=11 // pred_fallthru
        _
      // Predicated region
      $region41: #{forward.1} parent=11 // pred_check
        %p843 = pneg %p311
      $region42: #{forward.1} parent=11 // pred_check_branch
        %845 = sbr.rel (%p843) target = $region44
      $region43: #{forward.1} parent=11 // pred_region
        _
      $region44: #{forward.1} parent=11 // pred_fallthru
        _
      // Predicated region
      $region45: #{forward.1} parent=11 // pred_check
        %p846 = pneg %p332
      $region46: #{forward.1} parent=11 // pred_check_branch
        %848 = sbr.rel (%p846) target = $region48
      $region47: #{forward.1} parent=11 // pred_region
        _
      $region48: #{forward.1} parent=11 // pred_fallthru
        _
      // Predicated region
      $region49: #{forward.1} parent=11 // pred_check
        %p849 = pneg %p353
      $region50: #{forward.1} parent=11 // pred_check_branch
        %851 = sbr.rel (%p849) target = $region52
      $region51: #{forward.1} parent=11 // pred_region
        _
      $region52: #{forward.1} parent=11 // pred_fallthru
        _
      // Predicated region
      $region53: #{forward.1} parent=11 // pred_check
        %p852 = pneg %p374
      $region54: #{forward.1} parent=11 // pred_check_branch
        %854 = sbr.rel (%p852) target = $region56
      $region55: #{forward.1} parent=11 // pred_region
        _
      $region56: #{forward.1} parent=11 // pred_fallthru
        _
      // Predicated region
      $region57: #{forward.1} parent=11 // pred_check
        %p855 = pneg %p395
      $region58: #{forward.1} parent=11 // pred_check_branch
        %857 = sbr.rel (%p855) target = $region60
      $region59: #{forward.1} parent=11 // pred_region
        _
      $region60: #{forward.1} parent=11 // pred_fallthru
        _
      // Predicated region
      $region61: #{forward.1} parent=11 // pred_check
        %p858 = pneg %p416
      $region62: #{forward.1} parent=11 // pred_check_branch
        %860 = sbr.rel (%p858) target = $region64
      $region63: #{forward.1} parent=11 // pred_region
        _
      $region64: #{forward.1} parent=11 // pred_fallthru
        _
      // Predicated region
      $region65: #{forward.1} parent=11 // pred_check
        %p861 = pneg %p437
      $region66: #{forward.1} parent=11 // pred_check_branch
        %863 = sbr.rel (%p861) target = $region68
      $region67: #{forward.1} parent=11 // pred_region
        _
      $region68: #{forward.1} parent=11 // pred_fallthru
        _
      // Predicated region
      $region69: #{forward.1} parent=11 // pred_check
        %p864 = pneg %p458
      $region70: #{forward.1} parent=11 // pred_check_branch
        %866 = sbr.rel (%p864) target = $region72
      $region71: #{forward.1} parent=11 // pred_region
        _
      $region72: #{forward.1} parent=11 // pred_fallthru
        _
      // Predicated region
      $region73: #{forward.1} parent=11 // pred_check
        %p867 = pneg %p479
      $region74: #{forward.1} parent=11 // pred_check_branch
        %869 = sbr.rel (%p867) target = $region76
      $region75: #{forward.1} parent=11 // pred_region
        _
      $region76: #{forward.1} parent=11 // pred_fallthru
        _
      // Predicated region
      $region77: #{forward.1} parent=11 // pred_check
        %p870 = pneg %p500
      $region78: #{forward.1} parent=11 // pred_check_branch
        %872 = sbr.rel (%p870) target = $region80
      $region79: #{forward.1} parent=11 // pred_region
        _
      $region80: #{forward.1} parent=11 // pred_fallthru
        _
      // Predicated region
      $region81: #{forward.1} parent=11 // pred_check
        %p873 = pneg %p521
      $region82: #{forward.1} parent=11 // pred_check_branch
        %875 = sbr.rel (%p873) target = $region84
      $region83: #{forward.1} parent=11 // pred_region
        _
      $region84: #{forward.1} parent=11 // pred_fallthru
        _
      // Predicated region
      $region85: #{forward.1} parent=11 // pred_check
        %p876 = pneg %p542
      $region86: #{forward.1} parent=11 // pred_check_branch
        %878 = sbr.rel (%p876) target = $region88
      $region87: #{forward.1} parent=11 // pred_region
        _
      $region88: #{forward.1} parent=11 // pred_fallthru
        _
      // Predicated region
      $region89: #{forward.1} parent=11 // pred_check
        %p879 = pneg %p563
      $region90: #{forward.1} parent=11 // pred_check_branch
        %881 = sbr.rel (%p879) target = $region92
      $region91: #{forward.1} parent=11 // pred_region
        _
      $region92: #{forward.1} parent=11 // pred_fallthru
        _
      // Predicated region
      $region93: #{forward.1} parent=11 // pred_check
        %p882 = pneg %p584
      $region94: #{forward.1} parent=11 // pred_check_branch
        %884 = sbr.rel (%p882) target = $region96
      $region95: #{forward.1} parent=11 // pred_region
        _
      $region96: #{forward.1} parent=11 // pred_fallthru
        _
      // Predicated region
      $region97: #{forward.1} parent=11 // pred_check
        %p885 = pneg %p605
      $region98: #{forward.1} parent=11 // pred_check_branch
        %887 = sbr.rel (%p885) target = $region100
      $region99: #{forward.1} parent=11 // pred_region
        _
      $region100: #{forward.1} parent=11 // pred_fallthru
        _
      // Predicated region
      $region101: #{forward.1} parent=11 // pred_check
        %p888 = pneg %p626
      $region102: #{forward.1} parent=11 // pred_check_branch
        %890 = sbr.rel (%p888) target = $region104
      $region103: #{forward.1} parent=11 // pred_region
        _
      $region104: #{forward.1} parent=11 // pred_fallthru
        _
      // Predicated region
      $region105: #{forward.1} parent=11 // pred_check
        %p891 = pneg %p647
      $region106: #{forward.1} parent=11 // pred_check_branch
        %893 = sbr.rel (%p891) target = $region108
      $region107: #{forward.1} parent=11 // pred_region
        _
      $region108: #{forward.1} parent=11 // pred_fallthru
        _
      // Predicated region
      $region109: #{forward.1} parent=11 // pred_check
        %p894 = pneg %p668
      $region110: #{forward.1} parent=11 // pred_check_branch
        %896 = sbr.rel (%p894) target = $region112
      $region111: #{forward.1} parent=11 // pred_region
        _
      $region112: #{forward.1} parent=11 // pred_fallthru
        _
      // Predicated region
      $region113: #{forward.1} parent=11 // pred_check
        %p897 = pneg %p689
      $region114: #{forward.1} parent=11 // pred_check_branch
        %899 = sbr.rel (%p897) target = $region116
      $region115: #{forward.1} parent=11 // pred_region
        _
      $region116: #{forward.1} parent=11 // pred_fallthru
        _
      // Predicated region
      $region117: #{forward.1} parent=11 // pred_check
        %p900 = pneg %p710
      $region118: #{forward.1} parent=11 // pred_check_branch
        %902 = sbr.rel (%p900) target = $region120
      $region119: #{forward.1} parent=11 // pred_region
        _
      $region120: #{forward.1} parent=11 // pred_fallthru
        _
      // Predicated region
      $region121: #{forward.1} parent=11 // pred_check
        %p903 = pneg %p731
      $region122: #{forward.1} parent=11 // pred_check_branch
        %905 = sbr.rel (%p903) target = $region124
      $region123: #{forward.1} parent=11 // pred_region
        _
      $region124: #{forward.1} parent=11 // pred_fallthru
        _
      // Predicated region
      $region125: #{forward.1} parent=11 // pred_check
        %p906 = pneg %p752
      $region126: #{forward.1} parent=11 // pred_check_branch
        %908 = sbr.rel (%p906) target = $region128
      $region127: #{forward.1} parent=11 // pred_region
        _
      $region128: #{forward.1} parent=11 // pred_fallthru
        _
      // Predicated region
      $region129: #{forward.1} parent=11 // pred_check
        %p909 = pneg %p773
      $region130: #{forward.1} parent=11 // pred_check_branch
        %911 = sbr.rel (%p909) target = $region132
      $region131: #{forward.1} parent=11 // pred_region
        _
      $region132: #{forward.1} parent=11 // pred_fallthru
        _
    $region12: #{forward.1} parent=5 // pred_fallthru
      _
    %p912 = scmp.lt.s32.totalorder %s71, 14
    // Predicated region
    $region133: #{forward.1} parent=5 // pred_check
      %p913 = pneg %p912
    $region134: #{forward.1} parent=5 // pred_check_branch
      %915 = sbr.rel (%p913) target = $region136
    $region135: #{forward.1} parent=5 // pred_region
      // Predicated region
      $region137: #{forward.1} parent=135 // pred_check
        %p916 = pneg %p109
      $region138: #{forward.1} parent=135 // pred_check_branch
        %918 = sbr.rel (%p916) target = $region140
      $region139: #{forward.1} parent=135 // pred_region
        %p919 = scmp.lt.s32.totalorder %s79, 3
        %s920 = scalar_select %p919, %s79, 3
        %p921 = scmp.lt.s32.totalorder %s78, 1
        %s922 = scalar_select %p921, %s78, 1
        %p923 = scmp.lt.s32.totalorder %s920, 3
        %s924 = scalar_select %p923, %s920, 3
        %s925 = smul.addr %s924, 2
        %s926 = smul.addr %s922, 8
        %s927 = sadd.s32 %s925, %s926
        %s928 = smul.addr %s927, 8
        %s929 = scalar_lea.vmem %s1, %s928
        %p930 = scmp.lt.s32.totalorder %s79, 3
        %s931 = scalar_select %p930, %s79, 3
      $region140: #{forward.1} parent=135 // pred_fallthru
        _
      // Predicated region
      $region141: #{forward.1} parent=135 // pred_check
        %p932 = pneg %p137
      $region142: #{forward.1} parent=135 // pred_check_branch
        %934 = sbr.rel (%p932) target = $region144
      $region143: #{forward.1} parent=135 // pred_region
        %p935 = scmp.lt.s32.totalorder %s78, 1
        %s936 = scalar_select %p935, %s78, 1
        %p937 = scmp.lt.s32.totalorder %s79, 6
        %s938 = scalar_select %p937, %s79, 6
        %s939 = smul.addr %s938, 2
        %s940 = smul.addr %s936, 14
        %s941 = sadd.s32 %s939, %s940
        %s942 = smul.addr %s941, 8
        %s943 = scalar_lea.vmem %s3, %s942
      $region144: #{forward.1} parent=135 // pred_fallthru
        _
    $region136: #{forward.1} parent=5 // pred_fallthru
      _
    %p944 = scmp.le.s32.totalorder 1, %s71
    %p945 = scmp.lt.s32.totalorder %s71, 15
    %p946 = pnand %p944, %p945
    %p947 = pneg %p946
    // Predicated region
    $region145: #{forward.1} parent=5 // pred_check
      _
    $region146: #{forward.1} parent=5 // pred_check_branch
      %949 = sbr.rel (%p946) target = $region148
    $region147: #{forward.1} parent=5 // pred_region
      %s950 = ssub.s32 %s71, 1
      %p951 = scmp.lt.s32.totalorder %s81, 3
      %s952 = scalar_select %p951, %s81, 3
      %p953 = scmp.lt.s32.totalorder %s80, 1
      %s954 = scalar_select %p953, %s80, 1
      %p955 = scmp.lt.s32.totalorder %s952, 3
      %s956 = scalar_select %p955, %s952, 3
      %s957 = smul.addr %s956, 2
      %s958 = smul.addr %s954, 8
      %s959 = sadd.s32 %s957, %s958
      %s960 = smul.addr %s959, 8
      %s961 = scalar_lea.vmem %s1, %s960
      %p962 = pneg %p115
      %p963 = pneg %p112
      %p964 = scmp.lt.s32.totalorder %s80, 1
      %s965 = scalar_select %p964, %s80, 1
      %p966 = scmp.lt.s32.totalorder %s81, 6
      %s967 = scalar_select %p966, %s81, 6
      %s968 = smul.addr %s967, 2
      %s969 = smul.addr %s965, 14
      %s970 = sadd.s32 %s968, %s969
      %s971 = smul.addr %s970, 8
      %s972 = scalar_lea.vmem %s3, %s971
      %p973 = pneg %p143
      %p974 = pneg %p140
      %p975 = pneg %p164
      %p976 = pneg %p161
      %p977 = pneg %p185
      %p978 = pneg %p182
      %p979 = pneg %p206
      %p980 = pneg %p203
      %p981 = pneg %p227
      %p982 = pneg %p224
      %p983 = pneg %p248
      %p984 = pneg %p245
      %p985 = pneg %p269
      %p986 = pneg %p266
      %p987 = pneg %p290
      %p988 = pneg %p287
      %p989 = pneg %p311
      %p990 = pneg %p308
      %p991 = pneg %p332
      %p992 = pneg %p329
      %p993 = pneg %p353
      %p994 = pneg %p350
      %p995 = pneg %p374
      %p996 = pneg %p371
      %p997 = pneg %p395
      %p998 = pneg %p392
      %p999 = pneg %p416
      %p1000 = pneg %p413
      %p1001 = pneg %p437
      %p1002 = pneg %p434
      %p1003 = pneg %p458
      %p1004 = pneg %p455
      %p1005 = pneg %p479
      %p1006 = pneg %p476
      %p1007 = pneg %p500
      %p1008 = pneg %p497
      %p1009 = pneg %p521
      %p1010 = pneg %p518
      %p1011 = pneg %p542
      %p1012 = pneg %p539
      %p1013 = pneg %p563
      %p1014 = pneg %p560
      %p1015 = pneg %p584
      %p1016 = pneg %p581
      %p1017 = pneg %p605
      %p1018 = pneg %p602
      %p1019 = pneg %p626
      %p1020 = pneg %p623
      %p1021 = pneg %p647
      %p1022 = pneg %p644
      %p1023 = pneg %p668
      %p1024 = pneg %p665
      %p1025 = pneg %p689
      %p1026 = pneg %p686
      %p1027 = pneg %p710
      %p1028 = pneg %p707
      %p1029 = pneg %p731
      %p1030 = pneg %p728
      %p1031 = pneg %p752
      %p1032 = pneg %p749
      %p1033 = pneg %p773
      %p1034 = pneg %p770
      %p1035 = pneg %p807
      %p1036 = pneg %p804
      %s1037 = ssub.s32 %s81, 4
      %p1038 = scmp.gt.s32.totalorder %s1037, 0
      %s1039 = scalar_select %p1038, %s1037, 0
      %p1040 = scmp.lt.s32.totalorder %s80, 1
      %s1041 = scalar_select %p1040, %s80, 1
      %p1042 = scmp.lt.s32.totalorder %s1039, 2
      %s1043 = scalar_select %p1042, %s1039, 2
      %s1044 = smul.addr %s1043, 2
      %s1045 = smul.addr %s1041, 6
      %s1046 = sadd.s32 %s1044, %s1045
      %s1047 = smul.addr %s1046, 8
      %s1048 = scalar_lea.vmem %s65, %s1047
      %p1049 = scmp.lt.s32.totalorder %s81, 3
      %s1050 = scalar_select %p1049, %s81, 3
      %p1051 = scmp.lt.s32.totalorder %s80, 1
      %s1052 = scalar_select %p1051, %s80, 1
      %p1053 = scmp.lt.s32.totalorder %s1050, 3
      %s1054 = scalar_select %p1053, %s1050, 3
      %s1055 = smul.addr %s1054, 2
      %s1056 = smul.addr %s1052, 8
      %s1057 = sadd.s32 %s1055, %s1056
      %s1058 = smul.addr %s1057, 8
      %s1059 = scalar_lea.vmem %s1, %s1058
      %p1060 = scmp.lt.s32.totalorder %s81, 3
      %s1061 = scalar_select %p1060, %s81, 3
      %p1062 = scmp.lt.s32.totalorder %s80, 1
      %s1063 = scalar_select %p1062, %s80, 1
      %p1064 = scmp.lt.s32.totalorder %s81, 6
      %s1065 = scalar_select %p1064, %s81, 6
      %s1066 = smul.addr %s1065, 2
      %s1067 = smul.addr %s1063, 14
      %s1068 = sadd.s32 %s1066, %s1067
      %s1069 = smul.addr %s1068, 8
      %s1070 = scalar_lea.vmem %s3, %s1069
      %s1071 = ssub.s32 %s81, 4
      %p1072 = scmp.gt.s32.totalorder %s1071, 0
      %s1073 = scalar_select %p1072, %s1071, 0
      %p1074 = scmp.lt.s32.totalorder %s80, 1
      %s1075 = scalar_select %p1074, %s80, 1
      %p1076 = scmp.lt.s32.totalorder %s1073, 2
      %s1077 = scalar_select %p1076, %s1073, 2
      %s1078 = smul.addr %s1077, 2
      %s1079 = smul.addr %s1075, 6
      %s1080 = sadd.s32 %s1078, %s1079
      %s1081 = smul.addr %s1080, 8
      %s1082 = scalar_lea.vmem %s65, %s1081
      %s1083 = ssub.s32 %s81, 4
      %p1084 = scmp.gt.s32.totalorder %s1083, 0
      %s1085 = scalar_select %p1084, %s1083, 0
      %p1086 = scmp.eq.s32.totalorder %s81, 0
      // Predicated region
      $region149: #{forward.1} parent=147 // pred_check
        %p1087 = pneg %p1086
      $region150: #{forward.1} parent=147 // pred_check_branch
        %1089 = sbr.rel (%p1087) target = $region152
      $region151: #{forward.1} parent=147 // pred_region
        %vm1090 = vcmask 523264
        %1091 = vst.msk [vmem:[#allocation2] sm:$0xff] %vm1090, 0.0
        %1092 = vst.msk [vmem:[#allocation2 + $0x8] sm:$0xff] %vm1090, 0.0
        %vm1093 = vcmask 15360
        %1094 = vst.msk [vmem:[#allocation3] sm:$0xff] %vm1093, 0.0
        %1095 = vst.msk [vmem:[#allocation3 + $0x8] sm:$0xff] %vm1093, 0.0
      $region152: #{forward.1} parent=147 // pred_fallthru
        _
      %p1096 = scmp.lt.s32.totalorder %s81, 4
      // Predicated region
      $region153: #{forward.1} parent=147 // pred_check
        %p1097 = pneg %p1096
      $region154: #{forward.1} parent=147 // pred_check_branch
        %1099 = sbr.rel (%p1097) target = $region156
      $region155: #{forward.1} parent=147 // pred_region
        %v1100 = vld [vmem:[%s1059] sm:$0xff]
        %v1101 = vld [vmem:[%s1059 + $0x8] sm:$0xff]
        %vm1102 = vcmask 15360
        %1103 = vst.msk [vmem:[#allocation4] sm:$0xff] %vm1102, %v1100
        %1104 = vst.msk [vmem:[#allocation4 + $0x8] sm:$0xff] %vm1102, %v1101
      $region156: #{forward.1} parent=147 // pred_fallthru
        _
      %p1105 = scmp.ge.s32.totalorder %s81, 4
      // Predicated region
      $region157: #{forward.1} parent=147 // pred_check
        %p1106 = pneg %p1105
      $region158: #{forward.1} parent=147 // pred_check_branch
        %1108 = sbr.rel (%p1106) target = $region160
      $region159: #{forward.1} parent=147 // pred_region
        %v1109 = vld [vmem:[#allocation3] sm:$0xff]
        %v1110 = vld [vmem:[#allocation3 + $0x8] sm:$0xff]
        %vm1111 = vcmask 15360
        %1112 = vst.msk [vmem:[#allocation4] sm:$0xff] %vm1111, %v1109
        %1113 = vst.msk [vmem:[#allocation4 + $0x8] sm:$0xff] %vm1111, %v1110
      $region160: #{forward.1} parent=147 // pred_fallthru
        _
      %v1114 = vld [vmem:[%s1070] sm:$0xff]
      %v1115 = vld [vmem:[%s1070 + $0x8] sm:$0xff]
      %1118 = vrot.lane.b32.xlu0 %v1114, 2
      %v1119 = vpop.permute.xlu0 %1118
      %1120 = vrot.lane.b32.xlu0 %v1115, 2
      %v1121 = vpop.permute.xlu0 %1120
      %vm1124 = vcmask 48144
      %1125 = vst.msk [vmem:[#allocation4] sm:$0xff] %vm1124, %v1119
      %1126 = vst.msk [vmem:[#allocation4 + $0x8] sm:$0xff] %vm1124, %v1121
      %v1127 = vld [vmem:[#allocation4] sm:$0xff]
      %v1128 = vld [vmem:[#allocation4 + $0x8] sm:$0xff]
      %v1129 = vld [vmem:[#allocation2] sm:$0xff]
      %v1130 = vld [vmem:[#allocation2 + $0x8] sm:$0xff]
      %v1131 = vld [vmem:[%s5] sm:$0xff]
      %v1132 = vld [vmem:[%s5 + $0x8] sm:$0xff]
      %v1133 = vld [vmem:[%s5 + $0x10] sm:$0xff]
      %v1134 = vld [vmem:[%s5 + $0x18] sm:$0xff]
      %v1135 = vld [vmem:[%s5 + $0x20] sm:$0xff]
      %v1136 = vld [vmem:[%s5 + $0x28] sm:$0xff]
      %v1137 = vld [vmem:[%s5 + $0x30] sm:$0xff]
      %v1138 = vld [vmem:[%s5 + $0x38] sm:$0xff]
      %v1139 = vld [vmem:[%s5 + $0x40] sm:$0xff]
      %v1140 = vld [vmem:[%s5 + $0x48] sm:$0xff]
      %v1141 = vld [vmem:[%s5 + $0x50] sm:$0xff]
      %v1142 = vld [vmem:[%s5 + $0x58] sm:$0xff]
      %vm1143 = vcmask 130048
      %v1145 = vsel %vm1143, %v1131, 0
      %v1148 = vsel %vm1143, %v1132, 0
      %v1151 = vsel %vm1143, %v1133, 0
      %v1154 = vsel %vm1143, %v1134, 0
      %v1157 = vsel %vm1143, %v1135, 0
      %v1160 = vsel %vm1143, %v1136, 0
      %v1163 = vsel %vm1143, %v1137, 0
      %v1166 = vsel %vm1143, %v1138, 0
      %v1169 = vsel %vm1143, %v1139, 0
      %v1172 = vsel %vm1143, %v1140, 0
      %v1175 = vsel %vm1143, %v1141, 0
      %v1178 = vsel %vm1143, %v1142, 0
      %1180 = vmatprep.subr.mxu0 0.0
      %1181 = vmatpush1.msra.mxu0 %v1127
      %1182 = vmatprep.subr.mxu0 0.0
      %1183 = vmatpush1.msra.mxu0 %v1128
      %1184 = vmatprep.subr.mxu0 0.0
      %1185 = vmatpush1.msra.mxu0 0.0
      %1186 = vmatprep.subr.mxu0 0.0
      %1187 = vmatpush1.msra.mxu0 0.0
      %1188 = vmatprep.subr.mxu0 0.0
      %1189 = vmatpush1.msra.mxu0 0.0
      %1190 = vmatprep.subr.mxu0 0.0
      %1191 = vmatpush1.msra.mxu0 0.0
      %1192 = vmatprep.subr.mxu0 0.0
      %1193 = vmatpush1.msra.mxu0 0.0
      %1194 = vmatprep.subr.mxu0 0.0
      %1195 = vmatpush1.msra.mxu0 0.0
      %1196 = vmatprep.subr.mxu0 0.0
      %1197 = vmatpush1.msra.mxu0 0.0
      %1198 = vmatprep.subr.mxu0 0.0
      %1199 = vmatpush1.msra.mxu0 0.0
      %1200 = vmatprep.subr.mxu0 0.0
      %1201 = vmatpush1.msra.mxu0 0.0
      %1202 = vmatprep.subr.mxu0 0.0
      %1203 = vmatpush1.msra.mxu0 0.0
      %1204 = vmatprep.subr.mxu0 0.0
      %1205 = vmatpush1.msra.mxu0 0.0
      %1206 = vmatprep.subr.mxu0 0.0
      %1207 = vmatpush1.msra.mxu0 0.0
      %1208 = vmatprep.subr.mxu0 0.0
      %1209 = vmatpush1.msra.mxu0 0.0
      %1210 = vmatprep.subr.mxu0 0.0
      %1211 = vmatpush1.msra.mxu0 0.0
      %1212 = vmatprep.subr.mxu0 0.0
      %1213 = vmatpush1.msra.mxu0 0.0
      %1214 = vmatprep.subr.mxu0 0.0
      %1215 = vmatpush1.msra.mxu0 0.0
      %1216 = vmatprep.subr.mxu0 0.0
      %1217 = vmatpush1.msra.mxu0 0.0
      %1218 = vmatprep.subr.mxu0 0.0
      %1219 = vmatpush1.msra.mxu0 0.0
      %1220 = vmatprep.subr.mxu0 0.0
      %1221 = vmatpush1.msra.mxu0 0.0
      %1222 = vmatprep.subr.mxu0 0.0
      %1223 = vmatpush1.msra.mxu0 0.0
      %1224 = vmatprep.subr.mxu0 0.0
      %1225 = vmatpush1.msra.mxu0 0.0
      %1226 = vmatprep.subr.mxu0 0.0
      %1227 = vmatpush1.msra.mxu0 0.0
      %1228 = vmatprep.subr.mxu0 0.0
      %1229 = vmatpush1.msra.mxu0 0.0
      %1230 = vmatprep.subr.mxu0 0.0
      %1231 = vmatpush1.msra.mxu0 0.0
      %1232 = vmatprep.subr.mxu0 0.0
      %1233 = vmatpush1.msra.mxu0 0.0
      %1234 = vmatprep.subr.mxu0 0.0
      %1235 = vmatpush1.msra.mxu0 0.0
      %1236 = vmatprep.subr.mxu0 0.0
      %1237 = vmatpush1.msra.mxu0 0.0
      %1238 = vmatprep.subr.mxu0 0.0
      %1239 = vmatpush1.msra.mxu0 0.0
      %1240 = vmatprep.subr.mxu0 0.0
      %1241 = vmatpush1.msra.mxu0 0.0
      %1242 = vmatprep.subr.mxu0 0.0
      %1243 = vmatpush1.msra.mxu0 0.0
      %1244 = vmatprep.mubr.f32.mxu0 0.0
      %1245 = vmatmul.mubr.f32.gmra.mrb[0].mxu0 %v1145
      %v1246 = vpop.f32.mrb[0].mxu0
      %v1247 = vadd.f32 0.0, %v1246
      %v1248 = vpop.f32.mrb[0].mxu0
      %1249 = vmatprep.mubr.f32.mxu0 0.0
      %1250 = vmatmul.mubr.f32.gmra.mrb[0].mxu0 %v1148
      %v1251 = vpop.f32.mrb[0].mxu0
      %v1252 = vadd.f32 0.0, %v1251
      %v1253 = vpop.f32.mrb[0].mxu0
      %1254 = vmatprep.mubr.f32.mxu0 0.0
      %1255 = vmatmul.mubr.f32.gmra.mrb[0].mxu0 %v1151
      %v1256 = vpop.f32.mrb[0].mxu0
      %v1257 = vadd.f32 0.0, %v1256
      %v1258 = vpop.f32.mrb[0].mxu0
      %1259 = vmatprep.mubr.f32.mxu0 0.0
      %1260 = vmatmul.mubr.f32.gmra.mrb[0].mxu0 %v1154
      %v1261 = vpop.f32.mrb[0].mxu0
      %v1262 = vadd.f32 0.0, %v1261
      %v1263 = vpop.f32.mrb[0].mxu0
      %1264 = vmatprep.mubr.f32.mxu0 0.0
      %1265 = vmatmul.mubr.f32.gmra.mrb[0].mxu0 %v1157
      %v1266 = vpop.f32.mrb[0].mxu0
      %v1267 = vadd.f32 0.0, %v1266
      %v1268 = vpop.f32.mrb[0].mxu0
      %1269 = vmatprep.mubr.f32.mxu0 0.0
      %1270 = vmatmul.mubr.f32.gmra.mrb[0].mxu0 %v1160
      %v1271 = vpop.f32.mrb[0].mxu0
      %v1272 = vadd.f32 0.0, %v1271
      %v1273 = vpop.f32.mrb[0].mxu0
      %1274 = vmatprep.mubr.f32.mxu0 0.0
      %1275 = vmatmul.mubr.f32.gmra.mrb[0].mxu0 %v1163
      %v1276 = vpop.f32.mrb[0].mxu0
      %v1277 = vadd.f32 0.0, %v1276
      %v1278 = vpop.f32.mrb[0].mxu0
      %1279 = vmatprep.mubr.f32.mxu0 0.0
      %1280 = vmatmul.mubr.f32.gmra.mrb[0].mxu0 %v1166
      %v1281 = vpop.f32.mrb[0].mxu0
      %v1282 = vadd.f32 0.0, %v1281
      %v1283 = vpop.f32.mrb[0].mxu0
      %1284 = vmatprep.mubr.f32.mxu0 0.0
      %1285 = vmatmul.mubr.f32.gmra.mrb[0].mxu0 %v1169
      %v1286 = vpop.f32.mrb[0].mxu0
      %v1287 = vadd.f32 0.0, %v1286
      %v1288 = vpop.f32.mrb[0].mxu0
      %1289 = vmatprep.mubr.f32.mxu0 0.0
      %1290 = vmatmul.mubr.f32.gmra.mrb[0].mxu0 %v1172
      %v1291 = vpop.f32.mrb[0].mxu0
      %v1292 = vadd.f32 0.0, %v1291
      %v1293 = vpop.f32.mrb[0].mxu0
      %1294 = vmatprep.mubr.f32.mxu0 0.0
      %1295 = vmatmul.mubr.f32.gmra.mrb[0].mxu0 %v1175
      %v1296 = vpop.f32.mrb[0].mxu0
      %v1297 = vadd.f32 0.0, %v1296
      %v1298 = vpop.f32.mrb[0].mxu0
      %1299 = vmatprep.mubr.f32.mxu0 0.0
      %1300 = vmatmul.mubr.f32.gmra.mrb[0].mxu0 %v1178
      %v1301 = vpop.f32.mrb[0].mxu0
      %v1302 = vadd.f32 0.0, %v1301
      %v1303 = vpop.f32.mrb[0].mxu0
      %1304 = vdwg.mxu0
      %v1305 = vld [vmem:[%s15 + $0x1] sm:$0x1]
      %v1306 = vlaneseq
      %v1307 = vshrl.u32 %v1306, 7
      %v1308 = vsub.s32 0, %v1307
      %v1309 = vrot.slane %v1305, %v1308
      %1311 = vrot.lane.b32.xlu0 %v1309, 3
      %v1312 = vpop.permute.xlu0 %1311
      %v1314 = vmul.f32 %v1247, %v1312
      %v1315 = vmul.f32 %v1252, %v1312
      %v1316 = vmul.f32 %v1257, %v1312
      %v1317 = vmul.f32 %v1262, %v1312
      %v1318 = vmul.f32 %v1267, %v1312
      %v1319 = vmul.f32 %v1272, %v1312
      %v1320 = vld [vmem:[%s15] sm:$0x1]
      %v1321 = vlaneseq
      %v1322 = vshrl.u32 %v1321, 7
      %v1323 = vsub.s32 0, %v1322
      %v1324 = vrot.slane %v1320, %v1323
      %1326 = vrot.lane.b32.xlu0 %v1324, 3
      %v1327 = vpop.permute.xlu0 %1326
      %v1329 = vadd.f32 %v1314, %v1327
      %v1330 = vadd.f32 %v1315, %v1327
      %v1331 = vadd.f32 %v1316, %v1327
      %v1332 = vadd.f32 %v1317, %v1327
      %v1333 = vadd.f32 %v1318, %v1327
      %v1334 = vadd.f32 %v1319, %v1327
      %v1335 = vld [vmem:[%s13] sm:$0xff]
      %v1336 = vld [vmem:[%s13 + $0x8] sm:$0xff]
      %v1337 = vld [vmem:[%s13 + $0x10] sm:$0xff]
      %v1338 = vld [vmem:[%s13 + $0x18] sm:$0xff]
      %v1339 = vld [vmem:[%s13 + $0x20] sm:$0xff]
      %v1340 = vld [vmem:[%s13 + $0x28] sm:$0xff]
      %1347 = vrot.lane.b32.xlu0 %v1329, 124
      %v1348 = vpop.permute.xlu0 %1347
      %1349 = vrot.lane.b32.xlu0 %v1330, 124
      %v1350 = vpop.permute.xlu0 %1349
      %1351 = vrot.lane.b32.xlu0 %v1331, 124
      %v1352 = vpop.permute.xlu0 %1351
      %1353 = vrot.lane.b32.xlu0 %v1332, 124
      %v1354 = vpop.permute.xlu0 %1353
      %1355 = vrot.lane.b32.xlu0 %v1333, 124
      %v1356 = vpop.permute.xlu0 %1355
      %1357 = vrot.lane.b32.xlu0 %v1334, 124
      %v1358 = vpop.permute.xlu0 %1357
      %v1365 = vsub.f32 %v1335, %v1348
      %v1366 = vsub.f32 %v1336, %v1350
      %v1367 = vsub.f32 %v1337, %v1352
      %v1368 = vsub.f32 %v1338, %v1354
      %v1369 = vsub.f32 %v1339, %v1356
      %v1370 = vsub.f32 %v1340, %v1358
      %v1371 = vand.u32 2147483647, %v1365
      %v1372 = vand.u32 2147483647, %v1366
      %v1373 = vand.u32 2147483647, %v1367
      %v1374 = vand.u32 2147483647, %v1368
      %v1375 = vand.u32 2147483647, %v1369
      %v1376 = vand.u32 2147483647, %v1370
      %v1377 = vand.u32 2147483647, %v1371
      %vm1378 = vcmp.le.f32.partialorder %v1377, 0.7853982
      %v1379 = vand.u32 %v1371, 2139095040
      %v1380 = vshrl.u32 %v1379, 23
      %v1381 = vsub.s32 %v1380, 127
      %v1382 = vand.u32 2147483647, %v1371
      %v1383 = vand.u32 %v1382, 8388607
      %v1384 = vor.u32 %v1383, 8388608
      %v1385 = vsub.s32 0, %v1384
      %v1386 = vadd.s32 %v1381, 1
      %vm1387 = vcmp.gt.s32.totalorder %v1386, 0
      %v1388 = vsel %vm1387, %v1386, 0
      %v1389 = vshrl.u32 %v1388, 5
      %v1390 = vand.u32 %v1388, 31
      %v1391 = vsub.s32 32, %v1390
      %v1392 = vshrl.u32 683565275, %v1391
      %v1393 = vshll.u32 683565275, %v1390
      %v1394 = vshrl.u32 2475754826, %v1391
      %v1395 = vor.u32 %v1393, %v1394
      %v1396 = vshll.u32 2475754826, %v1390
      %v1397 = vshrl.u32 2131351028, %v1391
      %v1398 = vor.u32 %v1396, %v1397
      %v1399 = vshll.u32 2131351028, %v1390
      %v1400 = vshrl.u32 2102212464, %v1391
      %v1401 = vor.u32 %v1399, %v1400
      %v1402 = vshll.u32 2102212464, %v1390
      %v1403 = vshrl.u32 920167782, %v1391
      %v1404 = vor.u32 %v1402, %v1403
      %v1405 = vshll.u32 920167782, %v1390
      %v1406 = vshrl.u32 1326507024, %v1391
      %v1407 = vor.u32 %v1405, %v1406
      %vm1408 = vcmp.lt.s32.totalorder %v1389, 1
      %vm1409 = vcmp.lt.s32.totalorder %v1389, 2
      %vm1410 = vcmp.lt.s32.totalorder %v1389, 3
      %vm1411 = vcmp.lt.s32.totalorder %v1389, 4
      %v1412 = vsel %vm1408, %v1392, %v1395
      %v1413 = vsel %vm1411, %v1401, 2102212464
      %v1414 = vsel %vm1410, %v1398, %v1413
      %v1415 = vsel %vm1409, %v1412, %v1414
      %v1416 = vsel %vm1408, %v1395, %v1398
      %v1417 = vsel %vm1411, %v1404, 920167782
      %v1418 = vsel %vm1410, %v1401, %v1417
      %v1419 = vsel %vm1409, %v1416, %v1418
      %v1420 = vsel %vm1408, %v1398, %v1401
      %v1421 = vsel %vm1411, %v1407, 1326507024
      %v1422 = vsel %vm1410, %v1404, %v1421
      %v1423 = vsel %vm1409, %v1420, %v1422
      %v1424 = vshll.u32 %v1384, 8
      %v1425 = vmul.u32.u64.compose %v1424, %v1423
      %v1426 = vextract.low.u32 %v1425
      %v1427 = vextract.high.u32 %v1425
      %v1428 = vmul.u32.u64.compose %v1424, %v1419
      %v1429 = vextract.low.u32 %v1428
      %v1430 = vextract.high.u32 %v1428
      %v1431 = vmul.u32 %v1424, %v1415
      %v1432 = vadd.s32 %v1427, %v1429
      %vm1433 = vc.u32 %v1427, %v1429
      %v1434 = vadd.s32 %v1430, 1
      %v1435 = vsel %vm1433, %v1434, %v1430
      %v1436 = vadd.s32 %v1431, %v1435
      %v1437 = vadd.s32 %v1436, 536870912
      %v1438 = vshrl.u32 %v1437, 30
      %v1439 = vshll.u32 %v1438, 30
      %v1440 = vsub.s32 %v1436, %v1439
      %vm1441 = vcmp.lt.s32.totalorder %v1440, 0
      %v1442 = vsub.s32 0, %v1440
      %v1443 = vsel %vm1441, %v1442, %v1440
      %v1444 = vclz %v1443
      %v1445 = vsub.s32 %v1444, 2
      %vm1446 = vcmp.gt.s32.totalorder 0, %v1445
      %v1447 = vsel %vm1446, 0, %v1445
      %v1448 = vsub.s32 32, %v1447
      %v1449 = vshll.u32 %v1440, %v1447
      %v1450 = vshrl.u32 %v1432, %v1448
      %v1451 = vor.u32 %v1449, %v1450
      %v1452 = vsub.s32 4294967266, %v1447
      %v1453 = vadd.s32 %v1452, 127
      %v1454 = vshll.u32 %v1453, 23
      %v1455 = vor.u32 4788187, %v1454
      %v1456 = vand.u32 2147483647, %v1455
      %v1458 = vcvt.s32.f32 %v1451
      %v1459 = vmul.f32 %v1458, %v1456
      %v1460 = vxor.u32 %v1459, 2147483648
      %v1461 = vsub.s32 4, %v1438
      %v1462 = vsel %vm1378, %v1371, %v1459
      %v1463 = vsel %vm1378, 0, %v1438
      %v1464 = vcosq.f32.pop %v1462
      %v1465 = vsinq.f32.pop %v1462
      %vm1466 = vweird.f32 %v1371
      %v1467 = vand.u32 %v1463, 3
      %vm1468 = vcmp.lt.s32.totalorder %v1467, 2
      %vm1469 = vcmp.eq.s32.totalorder %v1467, 0
      %v1470 = vxor.u32 %v1465, 2147483648
      %v1471 = vsel %vm1469, %v1464, %v1470
      %vm1472 = vcmp.eq.s32.totalorder %v1467, 2
      %v1473 = vxor.u32 %v1464, 2147483648
      %v1474 = vsel %vm1472, %v1473, %v1465
      %v1475 = vsel %vm1468, %v1471, %v1474
      %v1476 = vsel %vm1466, nan, %v1475
      %v1477 = vand.u32 2147483647, %v1372
      %vm1478 = vcmp.le.f32.partialorder %v1477, 0.7853982
      %v1479 = vand.u32 %v1372, 2139095040
      %v1480 = vshrl.u32 %v1479, 23
      %v1481 = vsub.s32 %v1480, 127
      %v1482 = vand.u32 2147483647, %v1372
      %v1483 = vand.u32 %v1482, 8388607
      %v1484 = vor.u32 %v1483, 8388608
      %v1485 = vsub.s32 0, %v1484
      %v1486 = vadd.s32 %v1481, 1
      %vm1487 = vcmp.gt.s32.totalorder %v1486, 0
      %v1488 = vsel %vm1487, %v1486, 0
      %v1489 = vshrl.u32 %v1488, 5
      %v1490 = vand.u32 %v1488, 31
      %v1491 = vsub.s32 32, %v1490
      %v1492 = vshrl.u32 683565275, %v1491
      %v1493 = vshll.u32 683565275, %v1490
      %v1494 = vshrl.u32 2475754826, %v1491
      %v1495 = vor.u32 %v1493, %v1494
      %v1496 = vshll.u32 2475754826, %v1490
      %v1497 = vshrl.u32 2131351028, %v1491
      %v1498 = vor.u32 %v1496, %v1497
      %v1499 = vshll.u32 2131351028, %v1490
      %v1500 = vshrl.u32 2102212464, %v1491
      %v1501 = vor.u32 %v1499, %v1500
      %v1502 = vshll.u32 2102212464, %v1490
      %v1503 = vshrl.u32 920167782, %v1491
      %v1504 = vor.u32 %v1502, %v1503
      %v1505 = vshll.u32 920167782, %v1490
      %v1506 = vshrl.u32 1326507024, %v1491
      %v1507 = vor.u32 %v1505, %v1506
      %vm1508 = vcmp.lt.s32.totalorder %v1489, 1
      %vm1509 = vcmp.lt.s32.totalorder %v1489, 2
      %vm1510 = vcmp.lt.s32.totalorder %v1489, 3
      %vm1511 = vcmp.lt.s32.totalorder %v1489, 4
      %v1512 = vsel %vm1508, %v1492, %v1495
      %v1513 = vsel %vm1511, %v1501, 2102212464
      %v1514 = vsel %vm1510, %v1498, %v1513
      %v1515 = vsel %vm1509, %v1512, %v1514
      %v1516 = vsel %vm1508, %v1495, %v1498
      %v1517 = vsel %vm1511, %v1504, 920167782
      %v1518 = vsel %vm1510, %v1501, %v1517
      %v1519 = vsel %vm1509, %v1516, %v1518
      %v1520 = vsel %vm1508, %v1498, %v1501
      %v1521 = vsel %vm1511, %v1507, 1326507024
      %v1522 = vsel %vm1510, %v1504, %v1521
      %v1523 = vsel %vm1509, %v1520, %v1522
      %v1524 = vshll.u32 %v1484, 8
      %v1525 = vmul.u32.u64.compose %v1524, %v1523
      %v1526 = vextract.low.u32 %v1525
      %v1527 = vextract.high.u32 %v1525
      %v1528 = vmul.u32.u64.compose %v1524, %v1519
      %v1529 = vextract.low.u32 %v1528
      %v1530 = vextract.high.u32 %v1528
      %v1531 = vmul.u32 %v1524, %v1515
      %v1532 = vadd.s32 %v1527, %v1529
      %vm1533 = vc.u32 %v1527, %v1529
      %v1534 = vadd.s32 %v1530, 1
      %v1535 = vsel %vm1533, %v1534, %v1530
      %v1536 = vadd.s32 %v1531, %v1535
      %v1537 = vadd.s32 %v1536, 536870912
      %v1538 = vshrl.u32 %v1537, 30
      %v1539 = vshll.u32 %v1538, 30
      %v1540 = vsub.s32 %v1536, %v1539
      %vm1541 = vcmp.lt.s32.totalorder %v1540, 0
      %v1542 = vsub.s32 0, %v1540
      %v1543 = vsel %vm1541, %v1542, %v1540
      %v1544 = vclz %v1543
      %v1545 = vsub.s32 %v1544, 2
      %vm1546 = vcmp.gt.s32.totalorder 0, %v1545
      %v1547 = vsel %vm1546, 0, %v1545
      %v1548 = vsub.s32 32, %v1547
      %v1549 = vshll.u32 %v1540, %v1547
      %v1550 = vshrl.u32 %v1532, %v1548
      %v1551 = vor.u32 %v1549, %v1550
      %v1552 = vsub.s32 4294967266, %v1547
      %v1553 = vadd.s32 %v1552, 127
      %v1554 = vshll.u32 %v1553, 23
      %v1555 = vor.u32 4788187, %v1554
      %v1556 = vand.u32 2147483647, %v1555
      %v1558 = vcvt.s32.f32 %v1551
      %v1559 = vmul.f32 %v1558, %v1556
      %v1560 = vxor.u32 %v1559, 2147483648
      %v1561 = vsub.s32 4, %v1538
      %v1562 = vsel %vm1478, %v1372, %v1559
      %v1563 = vsel %vm1478, 0, %v1538
      %v1564 = vcosq.f32.pop %v1562
      %v1565 = vsinq.f32.pop %v1562
      %vm1566 = vweird.f32 %v1372
      %v1567 = vand.u32 %v1563, 3
      %vm1568 = vcmp.lt.s32.totalorder %v1567, 2
      %vm1569 = vcmp.eq.s32.totalorder %v1567, 0
      %v1570 = vxor.u32 %v1565, 2147483648
      %v1571 = vsel %vm1569, %v1564, %v1570
      %vm1572 = vcmp.eq.s32.totalorder %v1567, 2
      %v1573 = vxor.u32 %v1564, 2147483648
      %v1574 = vsel %vm1572, %v1573, %v1565
      %v1575 = vsel %vm1568, %v1571, %v1574
      %v1576 = vsel %vm1566, nan, %v1575
      %v1577 = vand.u32 2147483647, %v1373
      %vm1578 = vcmp.le.f32.partialorder %v1577, 0.7853982
      %v1579 = vand.u32 %v1373, 2139095040
      %v1580 = vshrl.u32 %v1579, 23
      %v1581 = vsub.s32 %v1580, 127
      %v1582 = vand.u32 2147483647, %v1373
      %v1583 = vand.u32 %v1582, 8388607
      %v1584 = vor.u32 %v1583, 8388608
      %v1585 = vsub.s32 0, %v1584
      %v1586 = vadd.s32 %v1581, 1
      %vm1587 = vcmp.gt.s32.totalorder %v1586, 0
      %v1588 = vsel %vm1587, %v1586, 0
      %v1589 = vshrl.u32 %v1588, 5
      %v1590 = vand.u32 %v1588, 31
      %v1591 = vsub.s32 32, %v1590
      %v1592 = vshrl.u32 683565275, %v1591
      %v1593 = vshll.u32 683565275, %v1590
      %v1594 = vshrl.u32 2475754826, %v1591
      %v1595 = vor.u32 %v1593, %v1594
      %v1596 = vshll.u32 2475754826, %v1590
      %v1597 = vshrl.u32 2131351028, %v1591
      %v1598 = vor.u32 %v1596, %v1597
      %v1599 = vshll.u32 2131351028, %v1590
      %v1600 = vshrl.u32 2102212464, %v1591
      %v1601 = vor.u32 %v1599, %v1600
      %v1602 = vshll.u32 2102212464, %v1590
      %v1603 = vshrl.u32 920167782, %v1591
      %v1604 = vor.u32 %v1602, %v1603
      %v1605 = vshll.u32 920167782, %v1590
      %v1606 = vshrl.u32 1326507024, %v1591
      %v1607 = vor.u32 %v1605, %v1606
      %vm1608 = vcmp.lt.s32.totalorder %v1589, 1
      %vm1609 = vcmp.lt.s32.totalorder %v1589, 2
      %vm1610 = vcmp.lt.s32.totalorder %v1589, 3
      %vm1611 = vcmp.lt.s32.totalorder %v1589, 4
      %v1612 = vsel %vm1608, %v1592, %v1595
      %v1613 = vsel %vm1611, %v1601, 2102212464
      %v1614 = vsel %vm1610, %v1598, %v1613
      %v1615 = vsel %vm1609, %v1612, %v1614
      %v1616 = vsel %vm1608, %v1595, %v1598
      %v1617 = vsel %vm1611, %v1604, 920167782
      %v1618 = vsel %vm1610, %v1601, %v1617
      %v1619 = vsel %vm1609, %v1616, %v1618
      %v1620 = vsel %vm1608, %v1598, %v1601
      %v1621 = vsel %vm1611, %v1607, 1326507024
      %v1622 = vsel %vm1610, %v1604, %v1621
      %v1623 = vsel %vm1609, %v1620, %v1622
      %v1624 = vshll.u32 %v1584, 8
      %v1625 = vmul.u32.u64.compose %v1624, %v1623
      %v1626 = vextract.low.u32 %v1625
      %v1627 = vextract.high.u32 %v1625
      %v1628 = vmul.u32.u64.compose %v1624, %v1619
      %v1629 = vextract.low.u32 %v1628
      %v1630 = vextract.high.u32 %v1628
      %v1631 = vmul.u32 %v1624, %v1615
      %v1632 = vadd.s32 %v1627, %v1629
      %vm1633 = vc.u32 %v1627, %v1629
      %v1634 = vadd.s32 %v1630, 1
      %v1635 = vsel %vm1633, %v1634, %v1630
      %v1636 = vadd.s32 %v1631, %v1635
      %v1637 = vadd.s32 %v1636, 536870912
      %v1638 = vshrl.u32 %v1637, 30
      %v1639 = vshll.u32 %v1638, 30
      %v1640 = vsub.s32 %v1636, %v1639
      %vm1641 = vcmp.lt.s32.totalorder %v1640, 0
      %v1642 = vsub.s32 0, %v1640
      %v1643 = vsel %vm1641, %v1642, %v1640
      %v1644 = vclz %v1643
      %v1645 = vsub.s32 %v1644, 2
      %vm1646 = vcmp.gt.s32.totalorder 0, %v1645
      %v1647 = vsel %vm1646, 0, %v1645
      %v1648 = vsub.s32 32, %v1647
      %v1649 = vshll.u32 %v1640, %v1647
      %v1650 = vshrl.u32 %v1632, %v1648
      %v1651 = vor.u32 %v1649, %v1650
      %v1652 = vsub.s32 4294967266, %v1647
      %v1653 = vadd.s32 %v1652, 127
      %v1654 = vshll.u32 %v1653, 23
      %v1655 = vor.u32 4788187, %v1654
      %v1656 = vand.u32 2147483647, %v1655
      %v1658 = vcvt.s32.f32 %v1651
      %v1659 = vmul.f32 %v1658, %v1656
      %v1660 = vxor.u32 %v1659, 2147483648
      %v1661 = vsub.s32 4, %v1638
      %v1662 = vsel %vm1578, %v1373, %v1659
      %v1663 = vsel %vm1578, 0, %v1638
      %v1664 = vcosq.f32.pop %v1662
      %v1665 = vsinq.f32.pop %v1662
      %vm1666 = vweird.f32 %v1373
      %v1667 = vand.u32 %v1663, 3
      %vm1668 = vcmp.lt.s32.totalorder %v1667, 2
      %vm1669 = vcmp.eq.s32.totalorder %v1667, 0
      %v1670 = vxor.u32 %v1665, 2147483648
      %v1671 = vsel %vm1669, %v1664, %v1670
      %vm1672 = vcmp.eq.s32.totalorder %v1667, 2
      %v1673 = vxor.u32 %v1664, 2147483648
      %v1674 = vsel %vm1672, %v1673, %v1665
      %v1675 = vsel %vm1668, %v1671, %v1674
      %v1676 = vsel %vm1666, nan, %v1675
      %v1677 = vand.u32 2147483647, %v1374
      %vm1678 = vcmp.le.f32.partialorder %v1677, 0.7853982
      %v1679 = vand.u32 %v1374, 2139095040
      %v1680 = vshrl.u32 %v1679, 23
      %v1681 = vsub.s32 %v1680, 127
      %v1682 = vand.u32 2147483647, %v1374
      %v1683 = vand.u32 %v1682, 8388607
      %v1684 = vor.u32 %v1683, 8388608
      %v1685 = vsub.s32 0, %v1684
      %v1686 = vadd.s32 %v1681, 1
      %vm1687 = vcmp.gt.s32.totalorder %v1686, 0
      %v1688 = vsel %vm1687, %v1686, 0
      %v1689 = vshrl.u32 %v1688, 5
      %v1690 = vand.u32 %v1688, 31
      %v1691 = vsub.s32 32, %v1690
      %v1692 = vshrl.u32 683565275, %v1691
      %v1693 = vshll.u32 683565275, %v1690
      %v1694 = vshrl.u32 2475754826, %v1691
      %v1695 = vor.u32 %v1693, %v1694
      %v1696 = vshll.u32 2475754826, %v1690
      %v1697 = vshrl.u32 2131351028, %v1691
      %v1698 = vor.u32 %v1696, %v1697
      %v1699 = vshll.u32 2131351028, %v1690
      %v1700 = vshrl.u32 2102212464, %v1691
      %v1701 = vor.u32 %v1699, %v1700
      %v1702 = vshll.u32 2102212464, %v1690
      %v1703 = vshrl.u32 920167782, %v1691
      %v1704 = vor.u32 %v1702, %v1703
      %v1705 = vshll.u32 920167782, %v1690
      %v1706 = vshrl.u32 1326507024, %v1691
      %v1707 = vor.u32 %v1705, %v1706
      %vm1708 = vcmp.lt.s32.totalorder %v1689, 1
      %vm1709 = vcmp.lt.s32.totalorder %v1689, 2
      %vm1710 = vcmp.lt.s32.totalorder %v1689, 3
      %vm1711 = vcmp.lt.s32.totalorder %v1689, 4
      %v1712 = vsel %vm1708, %v1692, %v1695
      %v1713 = vsel %vm1711, %v1701, 2102212464
      %v1714 = vsel %vm1710, %v1698, %v1713
      %v1715 = vsel %vm1709, %v1712, %v1714
      %v1716 = vsel %vm1708, %v1695, %v1698
      %v1717 = vsel %vm1711, %v1704, 920167782
      %v1718 = vsel %vm1710, %v1701, %v1717
      %v1719 = vsel %vm1709, %v1716, %v1718
      %v1720 = vsel %vm1708, %v1698, %v1701
      %v1721 = vsel %vm1711, %v1707, 1326507024
      %v1722 = vsel %vm1710, %v1704, %v1721
      %v1723 = vsel %vm1709, %v1720, %v1722
      %v1724 = vshll.u32 %v1684, 8
      %v1725 = vmul.u32.u64.compose %v1724, %v1723
      %v1726 = vextract.low.u32 %v1725
      %v1727 = vextract.high.u32 %v1725
      %v1728 = vmul.u32.u64.compose %v1724, %v1719
      %v1729 = vextract.low.u32 %v1728
      %v1730 = vextract.high.u32 %v1728
      %v1731 = vmul.u32 %v1724, %v1715
      %v1732 = vadd.s32 %v1727, %v1729
      %vm1733 = vc.u32 %v1727, %v1729
      %v1734 = vadd.s32 %v1730, 1
      %v1735 = vsel %vm1733, %v1734, %v1730
      %v1736 = vadd.s32 %v1731, %v1735
      %v1737 = vadd.s32 %v1736, 536870912
      %v1738 = vshrl.u32 %v1737, 30
      %v1739 = vshll.u32 %v1738, 30
      %v1740 = vsub.s32 %v1736, %v1739
      %vm1741 = vcmp.lt.s32.totalorder %v1740, 0
      %v1742 = vsub.s32 0, %v1740
      %v1743 = vsel %vm1741, %v1742, %v1740
      %v1744 = vclz %v1743
      %v1745 = vsub.s32 %v1744, 2
      %vm1746 = vcmp.gt.s32.totalorder 0, %v1745
      %v1747 = vsel %vm1746, 0, %v1745
      %v1748 = vsub.s32 32, %v1747
      %v1749 = vshll.u32 %v1740, %v1747
      %v1750 = vshrl.u32 %v1732, %v1748
      %v1751 = vor.u32 %v1749, %v1750
      %v1752 = vsub.s32 4294967266, %v1747
      %v1753 = vadd.s32 %v1752, 127
      %v1754 = vshll.u32 %v1753, 23
      %v1755 = vor.u32 4788187, %v1754
      %v1756 = vand.u32 2147483647, %v1755
      %v1758 = vcvt.s32.f32 %v1751
      %v1759 = vmul.f32 %v1758, %v1756
      %v1760 = vxor.u32 %v1759, 2147483648
      %v1761 = vsub.s32 4, %v1738
      %v1762 = vsel %vm1678, %v1374, %v1759
      %v1763 = vsel %vm1678, 0, %v1738
      %v1764 = vcosq.f32.pop %v1762
      %v1765 = vsinq.f32.pop %v1762
      %vm1766 = vweird.f32 %v1374
      %v1767 = vand.u32 %v1763, 3
      %vm1768 = vcmp.lt.s32.totalorder %v1767, 2
      %vm1769 = vcmp.eq.s32.totalorder %v1767, 0
      %v1770 = vxor.u32 %v1765, 2147483648
      %v1771 = vsel %vm1769, %v1764, %v1770
      %vm1772 = vcmp.eq.s32.totalorder %v1767, 2
      %v1773 = vxor.u32 %v1764, 2147483648
      %v1774 = vsel %vm1772, %v1773, %v1765
      %v1775 = vsel %vm1768, %v1771, %v1774
      %v1776 = vsel %vm1766, nan, %v1775
      %v1777 = vand.u32 2147483647, %v1375
      %vm1778 = vcmp.le.f32.partialorder %v1777, 0.7853982
      %v1779 = vand.u32 %v1375, 2139095040
      %v1780 = vshrl.u32 %v1779, 23
      %v1781 = vsub.s32 %v1780, 127
      %v1782 = vand.u32 2147483647, %v1375
      %v1783 = vand.u32 %v1782, 8388607
      %v1784 = vor.u32 %v1783, 8388608
      %v1785 = vsub.s32 0, %v1784
      %v1786 = vadd.s32 %v1781, 1
      %vm1787 = vcmp.gt.s32.totalorder %v1786, 0
      %v1788 = vsel %vm1787, %v1786, 0
      %v1789 = vshrl.u32 %v1788, 5
      %v1790 = vand.u32 %v1788, 31
      %v1791 = vsub.s32 32, %v1790
      %v1792 = vshrl.u32 683565275, %v1791
      %v1793 = vshll.u32 683565275, %v1790
      %v1794 = vshrl.u32 2475754826, %v1791
      %v1795 = vor.u32 %v1793, %v1794
      %v1796 = vshll.u32 2475754826, %v1790
      %v1797 = vshrl.u32 2131351028, %v1791
      %v1798 = vor.u32 %v1796, %v1797
      %v1799 = vshll.u32 2131351028, %v1790
      %v1800 = vshrl.u32 2102212464, %v1791
      %v1801 = vor.u32 %v1799, %v1800
      %v1802 = vshll.u32 2102212464, %v1790
      %v1803 = vshrl.u32 920167782, %v1791
      %v1804 = vor.u32 %v1802, %v1803
      %v1805 = vshll.u32 920167782, %v1790
      %v1806 = vshrl.u32 1326507024, %v1791
      %v1807 = vor.u32 %v1805, %v1806
      %vm1808 = vcmp.lt.s32.totalorder %v1789, 1
      %vm1809 = vcmp.lt.s32.totalorder %v1789, 2
      %vm1810 = vcmp.lt.s32.totalorder %v1789, 3
      %vm1811 = vcmp.lt.s32.totalorder %v1789, 4
      %v1812 = vsel %vm1808, %v1792, %v1795
      %v1813 = vsel %vm1811, %v1801, 2102212464
      %v1814 = vsel %vm1810, %v1798, %v1813
      %v1815 = vsel %vm1809, %v1812, %v1814
      %v1816 = vsel %vm1808, %v1795, %v1798
      %v1817 = vsel %vm1811, %v1804, 920167782
      %v1818 = vsel %vm1810, %v1801, %v1817
      %v1819 = vsel %vm1809, %v1816, %v1818
      %v1820 = vsel %vm1808, %v1798, %v1801
      %v1821 = vsel %vm1811, %v1807, 1326507024
      %v1822 = vsel %vm1810, %v1804, %v1821
      %v1823 = vsel %vm1809, %v1820, %v1822
      %v1824 = vshll.u32 %v1784, 8
      %v1825 = vmul.u32.u64.compose %v1824, %v1823
      %v1826 = vextract.low.u32 %v1825
      %v1827 = vextract.high.u32 %v1825
      %v1828 = vmul.u32.u64.compose %v1824, %v1819
      %v1829 = vextract.low.u32 %v1828
      %v1830 = vextract.high.u32 %v1828
      %v1831 = vmul.u32 %v1824, %v1815
      %v1832 = vadd.s32 %v1827, %v1829
      %vm1833 = vc.u32 %v1827, %v1829
      %v1834 = vadd.s32 %v1830, 1
      %v1835 = vsel %vm1833, %v1834, %v1830
      %v1836 = vadd.s32 %v1831, %v1835
      %v1837 = vadd.s32 %v1836, 536870912
      %v1838 = vshrl.u32 %v1837, 30
      %v1839 = vshll.u32 %v1838, 30
      %v1840 = vsub.s32 %v1836, %v1839
      %vm1841 = vcmp.lt.s32.totalorder %v1840, 0
      %v1842 = vsub.s32 0, %v1840
      %v1843 = vsel %vm1841, %v1842, %v1840
      %v1844 = vclz %v1843
      %v1845 = vsub.s32 %v1844, 2
      %vm1846 = vcmp.gt.s32.totalorder 0, %v1845
      %v1847 = vsel %vm1846, 0, %v1845
      %v1848 = vsub.s32 32, %v1847
      %v1849 = vshll.u32 %v1840, %v1847
      %v1850 = vshrl.u32 %v1832, %v1848
      %v1851 = vor.u32 %v1849, %v1850
      %v1852 = vsub.s32 4294967266, %v1847
      %v1853 = vadd.s32 %v1852, 127
      %v1854 = vshll.u32 %v1853, 23
      %v1855 = vor.u32 4788187, %v1854
      %v1856 = vand.u32 2147483647, %v1855
      %v1858 = vcvt.s32.f32 %v1851
      %v1859 = vmul.f32 %v1858, %v1856
      %v1860 = vxor.u32 %v1859, 2147483648
      %v1861 = vsub.s32 4, %v1838
      %v1862 = vsel %vm1778, %v1375, %v1859
      %v1863 = vsel %vm1778, 0, %v1838
      %v1864 = vcosq.f32.pop %v1862
      %v1865 = vsinq.f32.pop %v1862
      %vm1866 = vweird.f32 %v1375
      %v1867 = vand.u32 %v1863, 3
      %vm1868 = vcmp.lt.s32.totalorder %v1867, 2
      %vm1869 = vcmp.eq.s32.totalorder %v1867, 0
      %v1870 = vxor.u32 %v1865, 2147483648
      %v1871 = vsel %vm1869, %v1864, %v1870
      %vm1872 = vcmp.eq.s32.totalorder %v1867, 2
      %v1873 = vxor.u32 %v1864, 2147483648
      %v1874 = vsel %vm1872, %v1873, %v1865
      %v1875 = vsel %vm1868, %v1871, %v1874
      %v1876 = vsel %vm1866, nan, %v1875
      %v1877 = vand.u32 2147483647, %v1376
      %vm1878 = vcmp.le.f32.partialorder %v1877, 0.7853982
      %v1879 = vand.u32 %v1376, 2139095040
      %v1880 = vshrl.u32 %v1879, 23
      %v1881 = vsub.s32 %v1880, 127
      %v1882 = vand.u32 2147483647, %v1376
      %v1883 = vand.u32 %v1882, 8388607
      %v1884 = vor.u32 %v1883, 8388608
      %v1885 = vsub.s32 0, %v1884
      %v1886 = vadd.s32 %v1881, 1
      %vm1887 = vcmp.gt.s32.totalorder %v1886, 0
      %v1888 = vsel %vm1887, %v1886, 0
      %v1889 = vshrl.u32 %v1888, 5
      %v1890 = vand.u32 %v1888, 31
      %v1891 = vsub.s32 32, %v1890
      %v1892 = vshrl.u32 683565275, %v1891
      %v1893 = vshll.u32 683565275, %v1890
      %v1894 = vshrl.u32 2475754826, %v1891
      %v1895 = vor.u32 %v1893, %v1894
      %v1896 = vshll.u32 2475754826, %v1890
      %v1897 = vshrl.u32 2131351028, %v1891
      %v1898 = vor.u32 %v1896, %v1897
      %v1899 = vshll.u32 2131351028, %v1890
      %v1900 = vshrl.u32 2102212464, %v1891
      %v1901 = vor.u32 %v1899, %v1900
      %v1902 = vshll.u32 2102212464, %v1890
      %v1903 = vshrl.u32 920167782, %v1891
      %v1904 = vor.u32 %v1902, %v1903
      %v1905 = vshll.u32 920167782, %v1890
      %v1906 = vshrl.u32 1326507024, %v1891
      %v1907 = vor.u32 %v1905, %v1906
      %vm1908 = vcmp.lt.s32.totalorder %v1889, 1
      %vm1909 = vcmp.lt.s32.totalorder %v1889, 2
      %vm1910 = vcmp.lt.s32.totalorder %v1889, 3
      %vm1911 = vcmp.lt.s32.totalorder %v1889, 4
      %v1912 = vsel %vm1908, %v1892, %v1895
      %v1913 = vsel %vm1911, %v1901, 2102212464
      %v1914 = vsel %vm1910, %v1898, %v1913
      %v1915 = vsel %vm1909, %v1912, %v1914
      %v1916 = vsel %vm1908, %v1895, %v1898
      %v1917 = vsel %vm1911, %v1904, 920167782
      %v1918 = vsel %vm1910, %v1901, %v1917
      %v1919 = vsel %vm1909, %v1916, %v1918
      %v1920 = vsel %vm1908, %v1898, %v1901
      %v1921 = vsel %vm1911, %v1907, 1326507024
      %v1922 = vsel %vm1910, %v1904, %v1921
      %v1923 = vsel %vm1909, %v1920, %v1922
      %v1924 = vshll.u32 %v1884, 8
      %v1925 = vmul.u32.u64.compose %v1924, %v1923
      %v1926 = vextract.low.u32 %v1925
      %v1927 = vextract.high.u32 %v1925
      %v1928 = vmul.u32.u64.compose %v1924, %v1919
      %v1929 = vextract.low.u32 %v1928
      %v1930 = vextract.high.u32 %v1928
      %v1931 = vmul.u32 %v1924, %v1915
      %v1932 = vadd.s32 %v1927, %v1929
      %vm1933 = vc.u32 %v1927, %v1929
      %v1934 = vadd.s32 %v1930, 1
      %v1935 = vsel %vm1933, %v1934, %v1930
      %v1936 = vadd.s32 %v1931, %v1935
      %v1937 = vadd.s32 %v1936, 536870912
      %v1938 = vshrl.u32 %v1937, 30
      %v1939 = vshll.u32 %v1938, 30
      %v1940 = vsub.s32 %v1936, %v1939
      %vm1941 = vcmp.lt.s32.totalorder %v1940, 0
      %v1942 = vsub.s32 0, %v1940
      %v1943 = vsel %vm1941, %v1942, %v1940
      %v1944 = vclz %v1943
      %v1945 = vsub.s32 %v1944, 2
      %vm1946 = vcmp.gt.s32.totalorder 0, %v1945
      %v1947 = vsel %vm1946, 0, %v1945
      %v1948 = vsub.s32 32, %v1947
      %v1949 = vshll.u32 %v1940, %v1947
      %v1950 = vshrl.u32 %v1932, %v1948
      %v1951 = vor.u32 %v1949, %v1950
      %v1952 = vsub.s32 4294967266, %v1947
      %v1953 = vadd.s32 %v1952, 127
      %v1954 = vshll.u32 %v1953, 23
      %v1955 = vor.u32 4788187, %v1954
      %v1956 = vand.u32 2147483647, %v1955
      %v1958 = vcvt.s32.f32 %v1951
      %v1959 = vmul.f32 %v1958, %v1956
      %v1960 = vxor.u32 %v1959, 2147483648
      %v1961 = vsub.s32 4, %v1938
      %v1962 = vsel %vm1878, %v1376, %v1959
      %v1963 = vsel %vm1878, 0, %v1938
      %v1964 = vcosq.f32.pop %v1962
      %v1965 = vsinq.f32.pop %v1962
      %vm1966 = vweird.f32 %v1376
      %v1967 = vand.u32 %v1963, 3
      %vm1968 = vcmp.lt.s32.totalorder %v1967, 2
      %vm1969 = vcmp.eq.s32.totalorder %v1967, 0
      %v1970 = vxor.u32 %v1965, 2147483648
      %v1971 = vsel %vm1969, %v1964, %v1970
      %vm1972 = vcmp.eq.s32.totalorder %v1967, 2
      %v1973 = vxor.u32 %v1964, 2147483648
      %v1974 = vsel %vm1972, %v1973, %v1965
      %v1975 = vsel %vm1968, %v1971, %v1974
      %v1976 = vsel %vm1966, nan, %v1975
      %1983 = vrot.lane.b32.xlu0 %v1476, 3
      %v1984 = vpop.permute.xlu0 %1983
      %1985 = vrot.lane.b32.xlu0 %v1576, 3
      %v1986 = vpop.permute.xlu0 %1985
      %1987 = vrot.lane.b32.xlu0 %v1676, 3
      %v1988 = vpop.permute.xlu0 %1987
      %1989 = vrot.lane.b32.xlu0 %v1776, 3
      %v1990 = vpop.permute.xlu0 %1989
      %1991 = vrot.lane.b32.xlu0 %v1876, 3
      %v1992 = vpop.permute.xlu0 %1991
      %1993 = vrot.lane.b32.xlu0 %v1976, 3
      %v1994 = vpop.permute.xlu0 %1993
      %v2001 = vmul.f32 %v1329, %v1984
      %v2002 = vmul.f32 %v1330, %v1986
      %v2003 = vmul.f32 %v1331, %v1988
      %v2004 = vmul.f32 %v1332, %v1990
      %v2005 = vmul.f32 %v1333, %v1992
      %v2006 = vmul.f32 %v1334, %v1994
      %v2007 = vld [vmem:[%s11] sm:$0xff]
      %v2008 = vld [vmem:[%s11 + $0x8] sm:$0xff]
      %v2009 = vld [vmem:[%s11 + $0x10] sm:$0xff]
      %v2010 = vld [vmem:[%s11 + $0x18] sm:$0xff]
      %v2011 = vld [vmem:[%s11 + $0x20] sm:$0xff]
      %v2012 = vld [vmem:[%s11 + $0x28] sm:$0xff]
      %2019 = vrot.lane.b32.xlu0 %v2007, 3
      %v2020 = vpop.permute.xlu0 %2019
      %2021 = vrot.lane.b32.xlu0 %v2008, 3
      %v2022 = vpop.permute.xlu0 %2021
      %2023 = vrot.lane.b32.xlu0 %v2009, 3
      %v2024 = vpop.permute.xlu0 %2023
      %2025 = vrot.lane.b32.xlu0 %v2010, 3
      %v2026 = vpop.permute.xlu0 %2025
      %2027 = vrot.lane.b32.xlu0 %v2011, 3
      %v2028 = vpop.permute.xlu0 %2027
      %2029 = vrot.lane.b32.xlu0 %v2012, 3
      %v2030 = vpop.permute.xlu0 %2029
      %v2037 = vmul.f32 %v2001, %v2020
      %v2038 = vmul.f32 %v2002, %v2022
      %v2039 = vmul.f32 %v2003, %v2024
      %v2040 = vmul.f32 %v2004, %v2026
      %v2041 = vmul.f32 %v2005, %v2028
      %v2042 = vmul.f32 %v2006, %v2030
      %v2043 = vmax.f32 %v2037, 0.0
      %v2044 = vmax.f32 %v2038, 0.0
      %v2045 = vmax.f32 %v2039, 0.0
      %v2046 = vmax.f32 %v2040, 0.0
      %v2047 = vmax.f32 %v2041, 0.0
      %v2048 = vmax.f32 %v2042, 0.0
      %v2049 = vld [vmem:[%s17] sm:$0x3f]
      %v2050 = vld [vmem:[%s19] sm:$0x3f]
      %vm2051 = vcmask 48128
      %v2053 = vsel %vm2051, %v1277, 0
      %v2056 = vsel %vm2051, %v1282, 0
      %v2059 = vsel %vm2051, %v1287, 0
      %v2062 = vsel %vm2051, %v1292, 0
      %v2065 = vsel %vm2051, %v1297, 0
      %v2068 = vsel %vm2051, %v1302, 0
      %vm2070 = vcmask 1045504
      %v2072 = vsel %vm2070, %v2050, 0
      %2074 = vmatprep.subr.mxu0 0.0
      %2075 = vmatpush1.msra.mxu0 %v2072
      %2076 = vmatprep.subr.mxu0 0.0
      %2077 = vmatpush1.msra.mxu0 0.0
      %2078 = vmatprep.subr.mxu0 0.0
      %2079 = vmatpush1.msra.mxu0 0.0
      %2080 = vmatprep.subr.mxu0 0.0
      %2081 = vmatpush1.msra.mxu0 0.0
      %2082 = vmatprep.subr.mxu0 0.0
      %2083 = vmatpush1.msra.mxu0 0.0
      %2084 = vmatprep.subr.mxu0 0.0
      %2085 = vmatpush1.msra.mxu0 0.0
      %2086 = vmatprep.subr.mxu0 0.0
      %2087 = vmatpush1.msra.mxu0 0.0
      %2088 = vmatprep.subr.mxu0 0.0
      %2089 = vmatpush1.msra.mxu0 0.0
      %2090 = vmatprep.subr.mxu0 0.0
      %2091 = vmatpush1.msra.mxu0 0.0
      %2092 = vmatprep.subr.mxu0 0.0
      %2093 = vmatpush1.msra.mxu0 0.0
      %2094 = vmatprep.subr.mxu0 0.0
      %2095 = vmatpush1.msra.mxu0 0.0
      %2096 = vmatprep.subr.mxu0 0.0
      %2097 = vmatpush1.msra.mxu0 0.0
      %2098 = vmatprep.subr.mxu0 0.0
      %2099 = vmatpush1.msra.mxu0 0.0
      %2100 = vmatprep.subr.mxu0 0.0
      %2101 = vmatpush1.msra.mxu0 0.0
      %2102 = vmatprep.subr.mxu0 0.0
      %2103 = vmatpush1.msra.mxu0 0.0
      %2104 = vmatprep.subr.mxu0 0.0
      %2105 = vmatpush1.msra.mxu0 0.0
      %2106 = vmatprep.subr.mxu0 0.0
      %2107 = vmatpush1.msra.mxu0 0.0
      %2108 = vmatprep.subr.mxu0 0.0
      %2109 = vmatpush1.msra.mxu0 0.0
      %2110 = vmatprep.subr.mxu0 0.0
      %2111 = vmatpush1.msra.mxu0 0.0
      %2112 = vmatprep.subr.mxu0 0.0
      %2113 = vmatpush1.msra.mxu0 0.0
      %2114 = vmatprep.subr.mxu0 0.0
      %2115 = vmatpush1.msra.mxu0 0.0
      %2116 = vmatprep.subr.mxu0 0.0
      %2117 = vmatpush1.msra.mxu0 0.0
      %2118 = vmatprep.subr.mxu0 0.0
      %2119 = vmatpush1.msra.mxu0 0.0
      %2120 = vmatprep.subr.mxu0 0.0
      %2121 = vmatpush1.msra.mxu0 0.0
      %2122 = vmatprep.subr.mxu0 0.0
      %2123 = vmatpush1.msra.mxu0 0.0
      %2124 = vmatprep.subr.mxu0 0.0
      %2125 = vmatpush1.msra.mxu0 0.0
      %2126 = vmatprep.subr.mxu0 0.0
      %2127 = vmatpush1.msra.mxu0 0.0
      %2128 = vmatprep.subr.mxu0 0.0
      %2129 = vmatpush1.msra.mxu0 0.0
      %2130 = vmatprep.subr.mxu0 0.0
      %2131 = vmatpush1.msra.mxu0 0.0
      %2132 = vmatprep.subr.mxu0 0.0
      %2133 = vmatpush1.msra.mxu0 0.0
      %2134 = vmatprep.subr.mxu0 0.0
      %2135 = vmatpush1.msra.mxu0 0.0
      %2136 = vmatprep.subr.mxu0 0.0
      %2137 = vmatpush1.msra.mxu0 0.0
      %2138 = vmatprep.mubr.f32.mxu0 0.0
      %2139 = vmatmul.mubr.f32.gmra.mrb[0].mxu0 %v2053
      %v2140 = vpop.f32.mrb[0].mxu0
      %v2141 = vadd.f32 0.0, %v2140
      %v2142 = vpop.f32.mrb[0].mxu0
      %2143 = vmatprep.mubr.f32.mxu0 0.0
      %2144 = vmatmul.mubr.f32.gmra.mrb[0].mxu0 %v2056
      %v2145 = vpop.f32.mrb[0].mxu0
      %v2146 = vadd.f32 0.0, %v2145
      %v2147 = vpop.f32.mrb[0].mxu0
      %2148 = vmatprep.mubr.f32.mxu0 0.0
      %2149 = vmatmul.mubr.f32.gmra.mrb[0].mxu0 %v2059
      %v2150 = vpop.f32.mrb[0].mxu0
      %v2151 = vadd.f32 0.0, %v2150
      %v2152 = vpop.f32.mrb[0].mxu0
      %2153 = vmatprep.mubr.f32.mxu0 0.0
      %2154 = vmatmul.mubr.f32.gmra.mrb[0].mxu0 %v2062
      %v2155 = vpop.f32.mrb[0].mxu0
      %v2156 = vadd.f32 0.0, %v2155
      %v2157 = vpop.f32.mrb[0].mxu0
      %2158 = vmatprep.mubr.f32.mxu0 0.0
      %2159 = vmatmul.mubr.f32.gmra.mrb[0].mxu0 %v2065
      %v2160 = vpop.f32.mrb[0].mxu0
      %v2161 = vadd.f32 0.0, %v2160
      %v2162 = vpop.f32.mrb[0].mxu0
      %2163 = vmatprep.mubr.f32.mxu0 0.0
      %2164 = vmatmul.mubr.f32.gmra.mrb[0].mxu0 %v2068
      %v2165 = vpop.f32.mrb[0].mxu0
      %v2166 = vadd.f32 0.0, %v2165
      %v2167 = vpop.f32.mrb[0].mxu0
      %2168 = vdwg.mxu0
      %v2170 = vsel %vm2051, %v1247, 0
      %v2173 = vsel %vm2051, %v1252, 0
      %v2176 = vsel %vm2051, %v1257, 0
      %v2179 = vsel %vm2051, %v1262, 0
      %v2182 = vsel %vm2051, %v1267, 0
      %v2185 = vsel %vm2051, %v1272, 0
      %v2188 = vsel %vm2070, %v2049, 0
      %2190 = vmatprep.subr.mxu0 0.0
      %2191 = vmatpush1.msra.mxu0 %v2188
      %2192 = vmatprep.subr.mxu0 0.0
      %2193 = vmatpush1.msra.mxu0 0.0
      %2194 = vmatprep.subr.mxu0 0.0
      %2195 = vmatpush1.msra.mxu0 0.0
      %2196 = vmatprep.subr.mxu0 0.0
      %2197 = vmatpush1.msra.mxu0 0.0
      %2198 = vmatprep.subr.mxu0 0.0
      %2199 = vmatpush1.msra.mxu0 0.0
      %2200 = vmatprep.subr.mxu0 0.0
      %2201 = vmatpush1.msra.mxu0 0.0
      %2202 = vmatprep.subr.mxu0 0.0
      %2203 = vmatpush1.msra.mxu0 0.0
      %2204 = vmatprep.subr.mxu0 0.0
      %2205 = vmatpush1.msra.mxu0 0.0
      %2206 = vmatprep.subr.mxu0 0.0
      %2207 = vmatpush1.msra.mxu0 0.0
      %2208 = vmatprep.subr.mxu0 0.0
      %2209 = vmatpush1.msra.mxu0 0.0
      %2210 = vmatprep.subr.mxu0 0.0
      %2211 = vmatpush1.msra.mxu0 0.0
      %2212 = vmatprep.subr.mxu0 0.0
      %2213 = vmatpush1.msra.mxu0 0.0
      %2214 = vmatprep.subr.mxu0 0.0
      %2215 = vmatpush1.msra.mxu0 0.0
      %2216 = vmatprep.subr.mxu0 0.0
      %2217 = vmatpush1.msra.mxu0 0.0
      %2218 = vmatprep.subr.mxu0 0.0
      %2219 = vmatpush1.msra.mxu0 0.0
      %2220 = vmatprep.subr.mxu0 0.0
      %2221 = vmatpush1.msra.mxu0 0.0
      %2222 = vmatprep.subr.mxu0 0.0
      %2223 = vmatpush1.msra.mxu0 0.0
      %2224 = vmatprep.subr.mxu0 0.0
      %2225 = vmatpush1.msra.mxu0 0.0
      %2226 = vmatprep.subr.mxu0 0.0
      %2227 = vmatpush1.msra.mxu0 0.0
      %2228 = vmatprep.subr.mxu0 0.0
      %2229 = vmatpush1.msra.mxu0 0.0
      %2230 = vmatprep.subr.mxu0 0.0
      %2231 = vmatpush1.msra.mxu0 0.0
      %2232 = vmatprep.subr.mxu0 0.0
      %2233 = vmatpush1.msra.mxu0 0.0
      %2234 = vmatprep.subr.mxu0 0.0
      %2235 = vmatpush1.msra.mxu0 0.0
      %2236 = vmatprep.subr.mxu0 0.0
      %2237 = vmatpush1.msra.mxu0 0.0
      %2238 = vmatprep.subr.mxu0 0.0
      %2239 = vmatpush1.msra.mxu0 0.0
      %2240 = vmatprep.subr.mxu0 0.0
      %2241 = vmatpush1.msra.mxu0 0.0
      %2242 = vmatprep.subr.mxu0 0.0
      %2243 = vmatpush1.msra.mxu0 0.0
      %2244 = vmatprep.subr.mxu0 0.0
      %2245 = vmatpush1.msra.mxu0 0.0
      %2246 = vmatprep.subr.mxu0 0.0
      %2247 = vmatpush1.msra.mxu0 0.0
      %2248 = vmatprep.subr.mxu0 0.0
      %2249 = vmatpush1.msra.mxu0 0.0
      %2250 = vmatprep.subr.mxu0 0.0
      %2251 = vmatpush1.msra.mxu0 0.0
      %2252 = vmatprep.subr.mxu0 0.0
      %2253 = vmatpush1.msra.mxu0 0.0
      %2254 = vmatprep.mubr.f32.mxu0 0.0
      %2255 = vmatmul.mubr.f32.gmra.mrb[0].mxu0 %v2170
      %v2256 = vpop.f32.mrb[0].mxu0
      %v2257 = vadd.f32 %v2141, %v2256
      %v2258 = vpop.f32.mrb[0].mxu0
      %2259 = vmatprep.mubr.f32.mxu0 0.0
      %2260 = vmatmul.mubr.f32.gmra.mrb[0].mxu0 %v2173
      %v2261 = vpop.f32.mrb[0].mxu0
      %v2262 = vadd.f32 %v2146, %v2261
      %v2263 = vpop.f32.mrb[0].mxu0
      %2264 = vmatprep.mubr.f32.mxu0 0.0
      %2265 = vmatmul.mubr.f32.gmra.mrb[0].mxu0 %v2176
      %v2266 = vpop.f32.mrb[0].mxu0
      %v2267 = vadd.f32 %v2151, %v2266
      %v2268 = vpop.f32.mrb[0].mxu0
      %2269 = vmatprep.mubr.f32.mxu0 0.0
      %2270 = vmatmul.mubr.f32.gmra.mrb[0].mxu0 %v2179
      %v2271 = vpop.f32.mrb[0].mxu0
      %v2272 = vadd.f32 %v2156, %v2271
      %v2273 = vpop.f32.mrb[0].mxu0
      %2274 = vmatprep.mubr.f32.mxu0 0.0
      %2275 = vmatmul.mubr.f32.gmra.mrb[0].mxu0 %v2182
      %v2276 = vpop.f32.mrb[0].mxu0
      %v2277 = vadd.f32 %v2161, %v2276
      %v2278 = vpop.f32.mrb[0].mxu0
      %2279 = vmatprep.mubr.f32.mxu0 0.0
      %2280 = vmatmul.mubr.f32.gmra.mrb[0].mxu0 %v2185
      %v2281 = vpop.f32.mrb[0].mxu0
      %v2282 = vadd.f32 %v2166, %v2281
      %v2283 = vpop.f32.mrb[0].mxu0
      %2284 = vdwg.mxu0
      %v2285 = vld [vmem:[%s21] sm:$0x1]
      %2287 = vset.pattern.permute.xlu0 3
      %2288 = vperm.xlu0 %2287, %v2043
      %v2289 = vpop.permute.xlu0 %2288
      %2292 = vset.pattern.permute.xlu0 3
      %2293 = vperm.xlu0 %2292, %v2044
      %v2294 = vpop.permute.xlu0 %2293
      %2297 = vset.pattern.permute.xlu0 3
      %2298 = vperm.xlu0 %2297, %v2045
      %v2299 = vpop.permute.xlu0 %2298
      %2302 = vset.pattern.permute.xlu0 3
      %2303 = vperm.xlu0 %2302, %v2046
      %v2304 = vpop.permute.xlu0 %2303
      %2307 = vset.pattern.permute.xlu0 3
      %2308 = vperm.xlu0 %2307, %v2047
      %v2309 = vpop.permute.xlu0 %2308
      %2312 = vset.pattern.permute.xlu0 3
      %2313 = vperm.xlu0 %2312, %v2048
      %v2314 = vpop.permute.xlu0 %2313
      %v2317 = vlaneseq
      %v2318 = vshrl.u32 %v2317, 7
      %v2319 = vsub.s32 0, %v2318
      %v2320 = vrot.slane %v2285, %v2319
      %v2322 = vmul.f32 %v2289, %v2320
      %v2323 = vmul.f32 %v2294, %v2320
      %v2324 = vmul.f32 %v2299, %v2320
      %v2325 = vmul.f32 %v2304, %v2320
      %v2326 = vmul.f32 %v2309, %v2320
      %v2327 = vmul.f32 %v2314, %v2320
      %v2328 = vadd.f32 %v2257, %v2322
      %v2329 = vadd.f32 %v2262, %v2323
      %v2330 = vadd.f32 %v2267, %v2324
      %v2331 = vadd.f32 %v2272, %v2325
      %v2332 = vadd.f32 %v2277, %v2326
      %v2333 = vadd.f32 %v2282, %v2327
      %v2334 = vld [vmem:[%s9] sm:$0xff]
      %v2335 = vld [vmem:[%s9 + $0x8] sm:$0xff]
      %v2336 = vld [vmem:[%s9 + $0x10] sm:$0xff]
      %v2337 = vld [vmem:[%s9 + $0x18] sm:$0xff]
      %v2338 = vld [vmem:[%s9 + $0x20] sm:$0xff]
      %v2339 = vld [vmem:[%s9 + $0x28] sm:$0xff]
      %v2340 = vadd.f32 %v2328, %v2334
      %v2341 = vadd.f32 %v2329, %v2335
      %v2342 = vadd.f32 %v2330, %v2336
      %v2343 = vadd.f32 %v2331, %v2337
      %v2344 = vadd.f32 %v2332, %v2338
      %v2345 = vadd.f32 %v2333, %v2339
      %v2346 = vxor.u32 %v2340, 2147483648
      %v2347 = vxor.u32 %v2341, 2147483648
      %v2348 = vxor.u32 %v2342, 2147483648
      %v2349 = vxor.u32 %v2343, 2147483648
      %v2350 = vxor.u32 %v2344, 2147483648
      %v2351 = vxor.u32 %v2345, 2147483648
      %v2352 = vmul.f32 %v2346, 1.442695
      %v2353 = vpow.pop %v2352
      %v2354 = vmul.f32 %v2347, 1.442695
      %v2355 = vpow.pop %v2354
      %v2356 = vmul.f32 %v2348, 1.442695
      %v2357 = vpow.pop %v2356
      %v2358 = vmul.f32 %v2349, 1.442695
      %v2359 = vpow.pop %v2358
      %v2360 = vmul.f32 %v2350, 1.442695
      %v2361 = vpow.pop %v2360
      %v2362 = vmul.f32 %v2351, 1.442695
      %v2363 = vpow.pop %v2362
      %v2364 = vadd.f32 %v2353, 1.0
      %v2365 = vadd.f32 %v2355, 1.0
      %v2366 = vadd.f32 %v2357, 1.0
      %v2367 = vadd.f32 %v2359, 1.0
      %v2368 = vadd.f32 %v2361, 1.0
      %v2369 = vadd.f32 %v2363, 1.0
      %v2370 = vrcp.pop %v2364
      %v2371 = vmul.f32 1.0, %v2370
      %v2372 = vrcp.pop %v2365
      %v2373 = vmul.f32 1.0, %v2372
      %v2374 = vrcp.pop %v2366
      %v2375 = vmul.f32 1.0, %v2374
      %v2376 = vrcp.pop %v2367
      %v2377 = vmul.f32 1.0, %v2376
      %v2378 = vrcp.pop %v2368
      %v2379 = vmul.f32 1.0, %v2378
      %v2380 = vrcp.pop %v2369
      %v2381 = vmul.f32 1.0, %v2380
      %v2382 = vld [vmem:[%s23] sm:$0xff]
      %v2383 = vld [vmem:[%s23 + $0x8] sm:$0xff]
      %v2384 = vld [vmem:[%s23 + $0x10] sm:$0xff]
      %v2385 = vld [vmem:[%s23 + $0x18] sm:$0x7]
      %v2386 = vld [vmem:[%s25] sm:$0x1]
      %v2388 = vlaneseq
      %v2389 = vshrl.u32 %v2388, 7
      %v2390 = vsub.s32 0, %v2389
      %v2391 = vrot.slane %v2386, %v2390
      %vm2393 = vcmask 220160
      %v2395 = vsel %vm2393, %v2371, 0
      %v2398 = vsel %vm2393, %v2373, 0
      %v2401 = vsel %vm2393, %v2375, 0
      %v2404 = vsel %vm2393, %v2377, 0
      %v2407 = vsel %vm2393, %v2379, 0
      %v2410 = vsel %vm2393, %v2381, 0
      %vm2412 = vcmask 1042432
      %v2414 = vsel %vm2412, %v2385, 0
      %2416 = vmatprep.subr.mxu0 0.0
      %2417 = vmatpush1.msra.mxu0 %v2382
      %2418 = vmatprep.subr.mxu0 0.0
      %2419 = vmatpush1.msra.mxu0 %v2383
      %2420 = vmatprep.subr.mxu0 0.0
      %2421 = vmatpush1.msra.mxu0 %v2384
      %2422 = vmatprep.subr.mxu0 0.0
      %2423 = vmatpush1.msra.mxu0 %v2414
      %2424 = vmatprep.subr.mxu0 0.0
      %2425 = vmatpush1.msra.mxu0 0.0
      %2426 = vmatprep.subr.mxu0 0.0
      %2427 = vmatpush1.msra.mxu0 0.0
      %2428 = vmatprep.subr.mxu0 0.0
      %2429 = vmatpush1.msra.mxu0 0.0
      %2430 = vmatprep.subr.mxu0 0.0
      %2431 = vmatpush1.msra.mxu0 0.0
      %2432 = vmatprep.subr.mxu0 0.0
      %2433 = vmatpush1.msra.mxu0 0.0
      %2434 = vmatprep.subr.mxu0 0.0
      %2435 = vmatpush1.msra.mxu0 0.0
      %2436 = vmatprep.subr.mxu0 0.0
      %2437 = vmatpush1.msra.mxu0 0.0
      %2438 = vmatprep.subr.mxu0 0.0
      %2439 = vmatpush1.msra.mxu0 0.0
      %2440 = vmatprep.subr.mxu0 0.0
      %2441 = vmatpush1.msra.mxu0 0.0
      %2442 = vmatprep.subr.mxu0 0.0
      %2443 = vmatpush1.msra.mxu0 0.0
      %2444 = vmatprep.subr.mxu0 0.0
      %2445 = vmatpush1.msra.mxu0 0.0
      %2446 = vmatprep.subr.mxu0 0.0
      %2447 = vmatpush1.msra.mxu0 0.0
      %2448 = vmatprep.subr.mxu0 0.0
      %2449 = vmatpush1.msra.mxu0 0.0
      %2450 = vmatprep.subr.mxu0 0.0
      %2451 = vmatpush1.msra.mxu0 0.0
      %2452 = vmatprep.subr.mxu0 0.0
      %2453 = vmatpush1.msra.mxu0 0.0
      %2454 = vmatprep.subr.mxu0 0.0
      %2455 = vmatpush1.msra.mxu0 0.0
      %2456 = vmatprep.subr.mxu0 0.0
      %2457 = vmatpush1.msra.mxu0 0.0
      %2458 = vmatprep.subr.mxu0 0.0
      %2459 = vmatpush1.msra.mxu0 0.0
      %2460 = vmatprep.subr.mxu0 0.0
      %2461 = vmatpush1.msra.mxu0 0.0
      %2462 = vmatprep.subr.mxu0 0.0
      %2463 = vmatpush1.msra.mxu0 0.0
      %2464 = vmatprep.subr.mxu0 0.0
      %2465 = vmatpush1.msra.mxu0 0.0
      %2466 = vmatprep.subr.mxu0 0.0
      %2467 = vmatpush1.msra.mxu0 0.0
      %2468 = vmatprep.subr.mxu0 0.0
      %2469 = vmatpush1.msra.mxu0 0.0
      %2470 = vmatprep.subr.mxu0 0.0
      %2471 = vmatpush1.msra.mxu0 0.0
      %2472 = vmatprep.subr.mxu0 0.0
      %2473 = vmatpush1.msra.mxu0 0.0
      %2474 = vmatprep.subr.mxu0 0.0
      %2475 = vmatpush1.msra.mxu0 0.0
      %2476 = vmatprep.subr.mxu0 0.0
      %2477 = vmatpush1.msra.mxu0 0.0
      %2478 = vmatprep.subr.mxu0 0.0
      %2479 = vmatpush1.msra.mxu0 0.0
      %2480 = vmatprep.mubr.f32.mxu0 0.0
      %2481 = vmatmul.mubr.f32.gmra.mrb[0].mxu0 %v2395
      %v2482 = vpop.f32.mrb[0].mxu0
      %v2483 = vadd.f32 %v2391, %v2482
      %v2484 = vpop.f32.mrb[0].mxu0
      %2485 = vmatprep.mubr.f32.mxu0 0.0
      %2486 = vmatmul.mubr.f32.gmra.mrb[0].mxu0 %v2398
      %v2487 = vpop.f32.mrb[0].mxu0
      %v2488 = vadd.f32 %v2391, %v2487
      %v2489 = vpop.f32.mrb[0].mxu0
      %2490 = vmatprep.mubr.f32.mxu0 0.0
      %2491 = vmatmul.mubr.f32.gmra.mrb[0].mxu0 %v2401
      %v2492 = vpop.f32.mrb[0].mxu0
      %v2493 = vadd.f32 %v2391, %v2492
      %v2494 = vpop.f32.mrb[0].mxu0
      %2495 = vmatprep.mubr.f32.mxu0 0.0
      %2496 = vmatmul.mubr.f32.gmra.mrb[0].mxu0 %v2404
      %v2497 = vpop.f32.mrb[0].mxu0
      %v2498 = vadd.f32 %v2391, %v2497
      %v2499 = vpop.f32.mrb[0].mxu0
      %2500 = vmatprep.mubr.f32.mxu0 0.0
      %2501 = vmatmul.mubr.f32.gmra.mrb[0].mxu0 %v2407
      %v2502 = vpop.f32.mrb[0].mxu0
      %v2503 = vadd.f32 %v2391, %v2502
      %v2504 = vpop.f32.mrb[0].mxu0
      %2505 = vmatprep.mubr.f32.mxu0 0.0
      %2506 = vmatmul.mubr.f32.gmra.mrb[0].mxu0 %v2410
      %v2507 = vpop.f32.mrb[0].mxu0
      %v2508 = vadd.f32 %v2391, %v2507
      %v2509 = vpop.f32.mrb[0].mxu0
      %2510 = vdwg.mxu0
      %v2511 = vxor.u32 %v2483, 2147483648
      %v2512 = vxor.u32 %v2488, 2147483648
      %v2513 = vxor.u32 %v2493, 2147483648
      %v2514 = vxor.u32 %v2498, 2147483648
      %v2515 = vxor.u32 %v2503, 2147483648
      %v2516 = vxor.u32 %v2508, 2147483648
      %v2517 = vmul.f32 %v2511, 1.442695
      %v2518 = vpow.pop %v2517
      %v2519 = vmul.f32 %v2512, 1.442695
      %v2520 = vpow.pop %v2519
      %v2521 = vmul.f32 %v2513, 1.442695
      %v2522 = vpow.pop %v2521
      %v2523 = vmul.f32 %v2514, 1.442695
      %v2524 = vpow.pop %v2523
      %v2525 = vmul.f32 %v2515, 1.442695
      %v2526 = vpow.pop %v2525
      %v2527 = vmul.f32 %v2516, 1.442695
      %v2528 = vpow.pop %v2527
      %v2529 = vadd.f32 %v2518, 1.0
      %v2530 = vadd.f32 %v2520, 1.0
      %v2531 = vadd.f32 %v2522, 1.0
      %v2532 = vadd.f32 %v2524, 1.0
      %v2533 = vadd.f32 %v2526, 1.0
      %v2534 = vadd.f32 %v2528, 1.0
      %v2535 = vrcp.pop %v2529
      %v2536 = vmul.f32 1.0, %v2535
      %v2537 = vrcp.pop %v2530
      %v2538 = vmul.f32 1.0, %v2537
      %v2539 = vrcp.pop %v2531
      %v2540 = vmul.f32 1.0, %v2539
      %v2541 = vrcp.pop %v2532
      %v2542 = vmul.f32 1.0, %v2541
      %v2543 = vrcp.pop %v2533
      %v2544 = vmul.f32 1.0, %v2543
      %v2545 = vrcp.pop %v2534
      %v2546 = vmul.f32 1.0, %v2545
      %v2547 = vld [vmem:[%s7] sm:$0xff]
      %v2548 = vld [vmem:[%s7 + $0x8] sm:$0xff]
      %vm2549 = vcmask 392192
      %v2551 = vsel %vm2549, %v2547, 0
      %v2554 = vsel %vm2549, %v2548, 0
      %2556 = vmatprep.subr.mxu0 0.0
      %2557 = vmatpush1.msra.mxu0 %v2536
      %2558 = vmatprep.subr.mxu0 0.0
      %2559 = vmatpush1.msra.mxu0 %v2538
      %2560 = vmatprep.subr.mxu0 0.0
      %2561 = vmatpush1.msra.mxu0 %v2540
      %2562 = vmatprep.subr.mxu0 0.0
      %2563 = vmatpush1.msra.mxu0 %v2542
      %2564 = vmatprep.subr.mxu0 0.0
      %2565 = vmatpush1.msra.mxu0 %v2544
      %2566 = vmatprep.subr.mxu0 0.0
      %2567 = vmatpush1.msra.mxu0 %v2546
      %2568 = vmatprep.subr.mxu0 0.0
      %2569 = vmatpush1.msra.mxu0 0.0
      %2570 = vmatprep.subr.mxu0 0.0
      %2571 = vmatpush1.msra.mxu0 0.0
      %2572 = vmatprep.subr.mxu0 0.0
      %2573 = vmatpush1.msra.mxu0 0.0
      %2574 = vmatprep.subr.mxu0 0.0
      %2575 = vmatpush1.msra.mxu0 0.0
      %2576 = vmatprep.subr.mxu0 0.0
      %2577 = vmatpush1.msra.mxu0 0.0
      %2578 = vmatprep.subr.mxu0 0.0
      %2579 = vmatpush1.msra.mxu0 0.0
      %2580 = vmatprep.subr.mxu0 0.0
      %2581 = vmatpush1.msra.mxu0 0.0
      %2582 = vmatprep.subr.mxu0 0.0
      %2583 = vmatpush1.msra.mxu0 0.0
      %2584 = vmatprep.subr.mxu0 0.0
      %2585 = vmatpush1.msra.mxu0 0.0
      %2586 = vmatprep.subr.mxu0 0.0
      %2587 = vmatpush1.msra.mxu0 0.0
      %2588 = vmatprep.subr.mxu0 0.0
      %2589 = vmatpush1.msra.mxu0 0.0
      %2590 = vmatprep.subr.mxu0 0.0
      %2591 = vmatpush1.msra.mxu0 0.0
      %2592 = vmatprep.subr.mxu0 0.0
      %2593 = vmatpush1.msra.mxu0 0.0
      %2594 = vmatprep.subr.mxu0 0.0
      %2595 = vmatpush1.msra.mxu0 0.0
      %2596 = vmatprep.subr.mxu0 0.0
      %2597 = vmatpush1.msra.mxu0 0.0
      %2598 = vmatprep.subr.mxu0 0.0
      %2599 = vmatpush1.msra.mxu0 0.0
      %2600 = vmatprep.subr.mxu0 0.0
      %2601 = vmatpush1.msra.mxu0 0.0
      %2602 = vmatprep.subr.mxu0 0.0
      %2603 = vmatpush1.msra.mxu0 0.0
      %2604 = vmatprep.subr.mxu0 0.0
      %2605 = vmatpush1.msra.mxu0 0.0
      %2606 = vmatprep.subr.mxu0 0.0
      %2607 = vmatpush1.msra.mxu0 0.0
      %2608 = vmatprep.subr.mxu0 0.0
      %2609 = vmatpush1.msra.mxu0 0.0
      %2610 = vmatprep.subr.mxu0 0.0
      %2611 = vmatpush1.msra.mxu0 0.0
      %2612 = vmatprep.subr.mxu0 0.0
      %2613 = vmatpush1.msra.mxu0 0.0
      %2614 = vmatprep.subr.mxu0 0.0
      %2615 = vmatpush1.msra.mxu0 0.0
      %2616 = vmatprep.subr.mxu0 0.0
      %2617 = vmatpush1.msra.mxu0 0.0
      %2618 = vmatprep.subr.mxu0 0.0
      %2619 = vmatpush1.msra.mxu0 0.0
      %2620 = vmatprep.mubr.f32.mxu0 0.0
      %2621 = vmatmul.mubr.f32.gmra.mrb[0].mxu0 %v2551
      %v2622 = vpop.f32.mrb[0].mxu0
      %v2623 = vadd.f32 0.0, %v2622
      %v2624 = vpop.f32.mrb[0].mxu0
      %2625 = vmatprep.mubr.f32.mxu0 0.0
      %2626 = vmatmul.mubr.f32.gmra.mrb[0].mxu0 %v2554
      %v2627 = vpop.f32.mrb[0].mxu0
      %v2628 = vadd.f32 0.0, %v2627
      %v2629 = vpop.f32.mrb[0].mxu0
      %2630 = vdwg.mxu0
      %v2631 = vld [vmem:[%s27] sm:$0xff]
      %v2632 = vld [vmem:[%s27 + $0x8] sm:$0xff]
      %v2633 = vld [vmem:[%s27 + $0x10] sm:$0xff]
      %v2634 = vld [vmem:[%s27 + $0x18] sm:$0x7]
      %v2635 = vld [vmem:[%s29] sm:$0x1]
      %v2637 = vlaneseq
      %v2638 = vshrl.u32 %v2637, 7
      %v2639 = vsub.s32 0, %v2638
      %v2640 = vrot.slane %v2635, %v2639
      %v2643 = vsel %vm2393, %v2623, 0
      %v2646 = vsel %vm2393, %v2628, 0
      %v2649 = vsel %vm2412, %v2634, 0
      %2651 = vmatprep.subr.mxu0 0.0
      %2652 = vmatpush1.msra.mxu0 %v2631
      %2653 = vmatprep.subr.mxu0 0.0
      %2654 = vmatpush1.msra.mxu0 %v2632
      %2655 = vmatprep.subr.mxu0 0.0
      %2656 = vmatpush1.msra.mxu0 %v2633
      %2657 = vmatprep.subr.mxu0 0.0
      %2658 = vmatpush1.msra.mxu0 %v2649
      %2659 = vmatprep.subr.mxu0 0.0
      %2660 = vmatpush1.msra.mxu0 0.0
      %2661 = vmatprep.subr.mxu0 0.0
      %2662 = vmatpush1.msra.mxu0 0.0
      %2663 = vmatprep.subr.mxu0 0.0
      %2664 = vmatpush1.msra.mxu0 0.0
      %2665 = vmatprep.subr.mxu0 0.0
      %2666 = vmatpush1.msra.mxu0 0.0
      %2667 = vmatprep.subr.mxu0 0.0
      %2668 = vmatpush1.msra.mxu0 0.0
      %2669 = vmatprep.subr.mxu0 0.0
      %2670 = vmatpush1.msra.mxu0 0.0
      %2671 = vmatprep.subr.mxu0 0.0
      %2672 = vmatpush1.msra.mxu0 0.0
      %2673 = vmatprep.subr.mxu0 0.0
      %2674 = vmatpush1.msra.mxu0 0.0
      %2675 = vmatprep.subr.mxu0 0.0
      %2676 = vmatpush1.msra.mxu0 0.0
      %2677 = vmatprep.subr.mxu0 0.0
      %2678 = vmatpush1.msra.mxu0 0.0
      %2679 = vmatprep.subr.mxu0 0.0
      %2680 = vmatpush1.msra.mxu0 0.0
      %2681 = vmatprep.subr.mxu0 0.0
      %2682 = vmatpush1.msra.mxu0 0.0
      %2683 = vmatprep.subr.mxu0 0.0
      %2684 = vmatpush1.msra.mxu0 0.0
      %2685 = vmatprep.subr.mxu0 0.0
      %2686 = vmatpush1.msra.mxu0 0.0
      %2687 = vmatprep.subr.mxu0 0.0
      %2688 = vmatpush1.msra.mxu0 0.0
      %2689 = vmatprep.subr.mxu0 0.0
      %2690 = vmatpush1.msra.mxu0 0.0
      %2691 = vmatprep.subr.mxu0 0.0
      %2692 = vmatpush1.msra.mxu0 0.0
      %2693 = vmatprep.subr.mxu0 0.0
      %2694 = vmatpush1.msra.mxu0 0.0
      %2695 = vmatprep.subr.mxu0 0.0
      %2696 = vmatpush1.msra.mxu0 0.0
      %2697 = vmatprep.subr.mxu0 0.0
      %2698 = vmatpush1.msra.mxu0 0.0
      %2699 = vmatprep.subr.mxu0 0.0
      %2700 = vmatpush1.msra.mxu0 0.0
      %2701 = vmatprep.subr.mxu0 0.0
      %2702 = vmatpush1.msra.mxu0 0.0
      %2703 = vmatprep.subr.mxu0 0.0
      %2704 = vmatpush1.msra.mxu0 0.0
      %2705 = vmatprep.subr.mxu0 0.0
      %2706 = vmatpush1.msra.mxu0 0.0
      %2707 = vmatprep.subr.mxu0 0.0
      %2708 = vmatpush1.msra.mxu0 0.0
      %2709 = vmatprep.subr.mxu0 0.0
      %2710 = vmatpush1.msra.mxu0 0.0
      %2711 = vmatprep.subr.mxu0 0.0
      %2712 = vmatpush1.msra.mxu0 0.0
      %2713 = vmatprep.subr.mxu0 0.0
      %2714 = vmatpush1.msra.mxu0 0.0
      %2715 = vmatprep.mubr.f32.mxu0 0.0
      %2716 = vmatmul.mubr.f32.gmra.mrb[0].mxu0 %v2643
      %v2717 = vpop.f32.mrb[0].mxu0
      %v2718 = vadd.f32 %v2640, %v2717
      %v2719 = vpop.f32.mrb[0].mxu0
      %2720 = vmatprep.mubr.f32.mxu0 0.0
      %2721 = vmatmul.mubr.f32.gmra.mrb[0].mxu0 %v2646
      %v2722 = vpop.f32.mrb[0].mxu0
      %v2723 = vadd.f32 %v2640, %v2722
      %v2724 = vpop.f32.mrb[0].mxu0
      %2725 = vdwg.mxu0
      %v2726 = vxor.u32 %v2718, 2147483648
      %v2727 = vxor.u32 %v2723, 2147483648
      %v2728 = vmul.f32 %v2726, 1.442695
      %v2729 = vpow.pop %v2728
      %v2730 = vmul.f32 %v2727, 1.442695
      %v2731 = vpow.pop %v2730
      %v2732 = vadd.f32 %v2729, 1.0
      %v2733 = vadd.f32 %v2731, 1.0
      %v2734 = vrcp.pop %v2732
      %v2735 = vmul.f32 1.0, %v2734
      %v2736 = vrcp.pop %v2733
      %v2737 = vmul.f32 1.0, %v2736
      %v2738 = vld [vmem:[%s31] sm:$0x3]
      %v2739 = vld [vmem:[%s33] sm:$0x3f]
      %v2741 = vsel %vm2051, %v1127, 0
      %v2744 = vsel %vm2051, %v1128, 0
      %v2747 = vsel %vm2070, %v2739, 0
      %2749 = vmatprep.subr.mxu0 0.0
      %2750 = vmatpush1.msra.mxu0 %v2747
      %2751 = vmatprep.subr.mxu0 0.0
      %2752 = vmatpush1.msra.mxu0 0.0
      %2753 = vmatprep.subr.mxu0 0.0
      %2754 = vmatpush1.msra.mxu0 0.0
      %2755 = vmatprep.subr.mxu0 0.0
      %2756 = vmatpush1.msra.mxu0 0.0
      %2757 = vmatprep.subr.mxu0 0.0
      %2758 = vmatpush1.msra.mxu0 0.0
      %2759 = vmatprep.subr.mxu0 0.0
      %2760 = vmatpush1.msra.mxu0 0.0
      %2761 = vmatprep.subr.mxu0 0.0
      %2762 = vmatpush1.msra.mxu0 0.0
      %2763 = vmatprep.subr.mxu0 0.0
      %2764 = vmatpush1.msra.mxu0 0.0
      %2765 = vmatprep.subr.mxu0 0.0
      %2766 = vmatpush1.msra.mxu0 0.0
      %2767 = vmatprep.subr.mxu0 0.0
      %2768 = vmatpush1.msra.mxu0 0.0
      %2769 = vmatprep.subr.mxu0 0.0
      %2770 = vmatpush1.msra.mxu0 0.0
      %2771 = vmatprep.subr.mxu0 0.0
      %2772 = vmatpush1.msra.mxu0 0.0
      %2773 = vmatprep.subr.mxu0 0.0
      %2774 = vmatpush1.msra.mxu0 0.0
      %2775 = vmatprep.subr.mxu0 0.0
      %2776 = vmatpush1.msra.mxu0 0.0
      %2777 = vmatprep.subr.mxu0 0.0
      %2778 = vmatpush1.msra.mxu0 0.0
      %2779 = vmatprep.subr.mxu0 0.0
      %2780 = vmatpush1.msra.mxu0 0.0
      %2781 = vmatprep.subr.mxu0 0.0
      %2782 = vmatpush1.msra.mxu0 0.0
      %2783 = vmatprep.subr.mxu0 0.0
      %2784 = vmatpush1.msra.mxu0 0.0
      %2785 = vmatprep.subr.mxu0 0.0
      %2786 = vmatpush1.msra.mxu0 0.0
      %2787 = vmatprep.subr.mxu0 0.0
      %2788 = vmatpush1.msra.mxu0 0.0
      %2789 = vmatprep.subr.mxu0 0.0
      %2790 = vmatpush1.msra.mxu0 0.0
      %2791 = vmatprep.subr.mxu0 0.0
      %2792 = vmatpush1.msra.mxu0 0.0
      %2793 = vmatprep.subr.mxu0 0.0
      %2794 = vmatpush1.msra.mxu0 0.0
      %2795 = vmatprep.subr.mxu0 0.0
      %2796 = vmatpush1.msra.mxu0 0.0
      %2797 = vmatprep.subr.mxu0 0.0
      %2798 = vmatpush1.msra.mxu0 0.0
      %2799 = vmatprep.subr.mxu0 0.0
      %2800 = vmatpush1.msra.mxu0 0.0
      %2801 = vmatprep.subr.mxu0 0.0
      %2802 = vmatpush1.msra.mxu0 0.0
      %2803 = vmatprep.subr.mxu0 0.0
      %2804 = vmatpush1.msra.mxu0 0.0
      %2805 = vmatprep.subr.mxu0 0.0
      %2806 = vmatpush1.msra.mxu0 0.0
      %2807 = vmatprep.subr.mxu0 0.0
      %2808 = vmatpush1.msra.mxu0 0.0
      %2809 = vmatprep.subr.mxu0 0.0
      %2810 = vmatpush1.msra.mxu0 0.0
      %2811 = vmatprep.subr.mxu0 0.0
      %2812 = vmatpush1.msra.mxu0 0.0
      %2813 = vmatprep.mubr.f32.mxu0 0.0
      %2814 = vmatmul.mubr.f32.gmra.mrb[0].mxu0 %v2741
      %v2815 = vpop.f32.mrb[0].mxu0
      %v2816 = vadd.f32 0.0, %v2815
      %v2817 = vpop.f32.mrb[0].mxu0
      %2818 = vmatprep.mubr.f32.mxu0 0.0
      %2819 = vmatmul.mubr.f32.gmra.mrb[0].mxu0 %v2744
      %v2820 = vpop.f32.mrb[0].mxu0
      %v2821 = vadd.f32 0.0, %v2820
      %v2822 = vpop.f32.mrb[0].mxu0
      %2823 = vdwg.mxu0
      %vm2824 = vcmask 15360
      %v2826 = vsel %vm2824, %v2735, 0
      %v2829 = vsel %vm2824, %v2737, 0
      %vm2831 = vcmask 1041408
      %v2833 = vsel %vm2831, %v2738, 0
      %2835 = vmatprep.subr.mxu0 0.0
      %2836 = vmatpush1.msra.mxu0 %v2833
      %2837 = vmatprep.subr.mxu0 0.0
      %2838 = vmatpush1.msra.mxu0 0.0
      %2839 = vmatprep.subr.mxu0 0.0
      %2840 = vmatpush1.msra.mxu0 0.0
      %2841 = vmatprep.subr.mxu0 0.0
      %2842 = vmatpush1.msra.mxu0 0.0
      %2843 = vmatprep.subr.mxu0 0.0
      %2844 = vmatpush1.msra.mxu0 0.0
      %2845 = vmatprep.subr.mxu0 0.0
      %2846 = vmatpush1.msra.mxu0 0.0
      %2847 = vmatprep.subr.mxu0 0.0
      %2848 = vmatpush1.msra.mxu0 0.0
      %2849 = vmatprep.subr.mxu0 0.0
      %2850 = vmatpush1.msra.mxu0 0.0
      %2851 = vmatprep.subr.mxu0 0.0
      %2852 = vmatpush1.msra.mxu0 0.0
      %2853 = vmatprep.subr.mxu0 0.0
      %2854 = vmatpush1.msra.mxu0 0.0
      %2855 = vmatprep.subr.mxu0 0.0
      %2856 = vmatpush1.msra.mxu0 0.0
      %2857 = vmatprep.subr.mxu0 0.0
      %2858 = vmatpush1.msra.mxu0 0.0
      %2859 = vmatprep.subr.mxu0 0.0
      %2860 = vmatpush1.msra.mxu0 0.0
      %2861 = vmatprep.subr.mxu0 0.0
      %2862 = vmatpush1.msra.mxu0 0.0
      %2863 = vmatprep.subr.mxu0 0.0
      %2864 = vmatpush1.msra.mxu0 0.0
      %2865 = vmatprep.subr.mxu0 0.0
      %2866 = vmatpush1.msra.mxu0 0.0
      %2867 = vmatprep.subr.mxu0 0.0
      %2868 = vmatpush1.msra.mxu0 0.0
      %2869 = vmatprep.subr.mxu0 0.0
      %2870 = vmatpush1.msra.mxu0 0.0
      %2871 = vmatprep.subr.mxu0 0.0
      %2872 = vmatpush1.msra.mxu0 0.0
      %2873 = vmatprep.subr.mxu0 0.0
      %2874 = vmatpush1.msra.mxu0 0.0
      %2875 = vmatprep.subr.mxu0 0.0
      %2876 = vmatpush1.msra.mxu0 0.0
      %2877 = vmatprep.subr.mxu0 0.0
      %2878 = vmatpush1.msra.mxu0 0.0
      %2879 = vmatprep.subr.mxu0 0.0
      %2880 = vmatpush1.msra.mxu0 0.0
      %2881 = vmatprep.subr.mxu0 0.0
      %2882 = vmatpush1.msra.mxu0 0.0
      %2883 = vmatprep.subr.mxu0 0.0
      %2884 = vmatpush1.msra.mxu0 0.0
      %2885 = vmatprep.subr.mxu0 0.0
      %2886 = vmatpush1.msra.mxu0 0.0
      %2887 = vmatprep.subr.mxu0 0.0
      %2888 = vmatpush1.msra.mxu0 0.0
      %2889 = vmatprep.subr.mxu0 0.0
      %2890 = vmatpush1.msra.mxu0 0.0
      %2891 = vmatprep.subr.mxu0 0.0
      %2892 = vmatpush1.msra.mxu0 0.0
      %2893 = vmatprep.subr.mxu0 0.0
      %2894 = vmatpush1.msra.mxu0 0.0
      %2895 = vmatprep.subr.mxu0 0.0
      %2896 = vmatpush1.msra.mxu0 0.0
      %2897 = vmatprep.subr.mxu0 0.0
      %2898 = vmatpush1.msra.mxu0 0.0
      %2899 = vmatprep.mubr.f32.mxu0 0.0
      %2900 = vmatmul.mubr.f32.gmra.mrb[0].mxu0 %v2826
      %v2901 = vpop.f32.mrb[0].mxu0
      %v2902 = vadd.f32 %v2816, %v2901
      %v2903 = vpop.f32.mrb[0].mxu0
      %2904 = vmatprep.mubr.f32.mxu0 0.0
      %2905 = vmatmul.mubr.f32.gmra.mrb[0].mxu0 %v2829
      %v2906 = vpop.f32.mrb[0].mxu0
      %v2907 = vadd.f32 %v2821, %v2906
      %v2908 = vpop.f32.mrb[0].mxu0
      %2909 = vdwg.mxu0
      %v2910 = vld [vmem:[%s43] sm:$0x1]
      %v2912 = vlaneseq
      %v2913 = vshrl.u32 %v2912, 7
      %v2914 = vsub.s32 0, %v2913
      %v2915 = vrot.slane %v2910, %v2914
      %v2917 = vadd.f32 %v2902, %v2915
      %v2918 = vadd.f32 %v2907, %v2915
      %v2919 = vld [vmem:[%s35] sm:$0x3]
      %v2920 = vld [vmem:[%s37] sm:$0x3f]
      %v2922 = vsel %vm2070, %v2920, 0
      %2924 = vmatprep.subr.mxu0 0.0
      %2925 = vmatpush1.msra.mxu0 %v2922
      %2926 = vmatprep.subr.mxu0 0.0
      %2927 = vmatpush1.msra.mxu0 0.0
      %2928 = vmatprep.subr.mxu0 0.0
      %2929 = vmatpush1.msra.mxu0 0.0
      %2930 = vmatprep.subr.mxu0 0.0
      %2931 = vmatpush1.msra.mxu0 0.0
      %2932 = vmatprep.subr.mxu0 0.0
      %2933 = vmatpush1.msra.mxu0 0.0
      %2934 = vmatprep.subr.mxu0 0.0
      %2935 = vmatpush1.msra.mxu0 0.0
      %2936 = vmatprep.subr.mxu0 0.0
      %2937 = vmatpush1.msra.mxu0 0.0
      %2938 = vmatprep.subr.mxu0 0.0
      %2939 = vmatpush1.msra.mxu0 0.0
      %2940 = vmatprep.subr.mxu0 0.0
      %2941 = vmatpush1.msra.mxu0 0.0
      %2942 = vmatprep.subr.mxu0 0.0
      %2943 = vmatpush1.msra.mxu0 0.0
      %2944 = vmatprep.subr.mxu0 0.0
      %2945 = vmatpush1.msra.mxu0 0.0
      %2946 = vmatprep.subr.mxu0 0.0
      %2947 = vmatpush1.msra.mxu0 0.0
      %2948 = vmatprep.subr.mxu0 0.0
      %2949 = vmatpush1.msra.mxu0 0.0
      %2950 = vmatprep.subr.mxu0 0.0
      %2951 = vmatpush1.msra.mxu0 0.0
      %2952 = vmatprep.subr.mxu0 0.0
      %2953 = vmatpush1.msra.mxu0 0.0
      %2954 = vmatprep.subr.mxu0 0.0
      %2955 = vmatpush1.msra.mxu0 0.0
      %2956 = vmatprep.subr.mxu0 0.0
      %2957 = vmatpush1.msra.mxu0 0.0
      %2958 = vmatprep.subr.mxu0 0.0
      %2959 = vmatpush1.msra.mxu0 0.0
      %2960 = vmatprep.subr.mxu0 0.0
      %2961 = vmatpush1.msra.mxu0 0.0
      %2962 = vmatprep.subr.mxu0 0.0
      %2963 = vmatpush1.msra.mxu0 0.0
      %2964 = vmatprep.subr.mxu0 0.0
      %2965 = vmatpush1.msra.mxu0 0.0
      %2966 = vmatprep.subr.mxu0 0.0
      %2967 = vmatpush1.msra.mxu0 0.0
      %2968 = vmatprep.subr.mxu0 0.0
      %2969 = vmatpush1.msra.mxu0 0.0
      %2970 = vmatprep.subr.mxu0 0.0
      %2971 = vmatpush1.msra.mxu0 0.0
      %2972 = vmatprep.subr.mxu0 0.0
      %2973 = vmatpush1.msra.mxu0 0.0
      %2974 = vmatprep.subr.mxu0 0.0
      %2975 = vmatpush1.msra.mxu0 0.0
      %2976 = vmatprep.subr.mxu0 0.0
      %2977 = vmatpush1.msra.mxu0 0.0
      %2978 = vmatprep.subr.mxu0 0.0
      %2979 = vmatpush1.msra.mxu0 0.0
      %2980 = vmatprep.subr.mxu0 0.0
      %2981 = vmatpush1.msra.mxu0 0.0
      %2982 = vmatprep.subr.mxu0 0.0
      %2983 = vmatpush1.msra.mxu0 0.0
      %2984 = vmatprep.subr.mxu0 0.0
      %2985 = vmatpush1.msra.mxu0 0.0
      %2986 = vmatprep.subr.mxu0 0.0
      %2987 = vmatpush1.msra.mxu0 0.0
      %2988 = vmatprep.mubr.f32.mxu0 0.0
      %2989 = vmatmul.mubr.f32.gmra.mrb[0].mxu0 %v2741
      %v2990 = vpop.f32.mrb[0].mxu0
      %v2991 = vadd.f32 0.0, %v2990
      %v2992 = vpop.f32.mrb[0].mxu0
      %2993 = vmatprep.mubr.f32.mxu0 0.0
      %2994 = vmatmul.mubr.f32.gmra.mrb[0].mxu0 %v2744
      %v2995 = vpop.f32.mrb[0].mxu0
      %v2996 = vadd.f32 0.0, %v2995
      %v2997 = vpop.f32.mrb[0].mxu0
      %2998 = vdwg.mxu0
      %v3000 = vsel %vm2831, %v2919, 0
      %3002 = vmatprep.subr.mxu0 0.0
      %3003 = vmatpush1.msra.mxu0 %v3000
      %3004 = vmatprep.subr.mxu0 0.0
      %3005 = vmatpush1.msra.mxu0 0.0
      %3006 = vmatprep.subr.mxu0 0.0
      %3007 = vmatpush1.msra.mxu0 0.0
      %3008 = vmatprep.subr.mxu0 0.0
      %3009 = vmatpush1.msra.mxu0 0.0
      %3010 = vmatprep.subr.mxu0 0.0
      %3011 = vmatpush1.msra.mxu0 0.0
      %3012 = vmatprep.subr.mxu0 0.0
      %3013 = vmatpush1.msra.mxu0 0.0
      %3014 = vmatprep.subr.mxu0 0.0
      %3015 = vmatpush1.msra.mxu0 0.0
      %3016 = vmatprep.subr.mxu0 0.0
      %3017 = vmatpush1.msra.mxu0 0.0
      %3018 = vmatprep.subr.mxu0 0.0
      %3019 = vmatpush1.msra.mxu0 0.0
      %3020 = vmatprep.subr.mxu0 0.0
      %3021 = vmatpush1.msra.mxu0 0.0
      %3022 = vmatprep.subr.mxu0 0.0
      %3023 = vmatpush1.msra.mxu0 0.0
      %3024 = vmatprep.subr.mxu0 0.0
      %3025 = vmatpush1.msra.mxu0 0.0
      %3026 = vmatprep.subr.mxu0 0.0
      %3027 = vmatpush1.msra.mxu0 0.0
      %3028 = vmatprep.subr.mxu0 0.0
      %3029 = vmatpush1.msra.mxu0 0.0
      %3030 = vmatprep.subr.mxu0 0.0
      %3031 = vmatpush1.msra.mxu0 0.0
      %3032 = vmatprep.subr.mxu0 0.0
      %3033 = vmatpush1.msra.mxu0 0.0
      %3034 = vmatprep.subr.mxu0 0.0
      %3035 = vmatpush1.msra.mxu0 0.0
      %3036 = vmatprep.subr.mxu0 0.0
      %3037 = vmatpush1.msra.mxu0 0.0
      %3038 = vmatprep.subr.mxu0 0.0
      %3039 = vmatpush1.msra.mxu0 0.0
      %3040 = vmatprep.subr.mxu0 0.0
      %3041 = vmatpush1.msra.mxu0 0.0
      %3042 = vmatprep.subr.mxu0 0.0
      %3043 = vmatpush1.msra.mxu0 0.0
      %3044 = vmatprep.subr.mxu0 0.0
      %3045 = vmatpush1.msra.mxu0 0.0
      %3046 = vmatprep.subr.mxu0 0.0
      %3047 = vmatpush1.msra.mxu0 0.0
      %3048 = vmatprep.subr.mxu0 0.0
      %3049 = vmatpush1.msra.mxu0 0.0
      %3050 = vmatprep.subr.mxu0 0.0
      %3051 = vmatpush1.msra.mxu0 0.0
      %3052 = vmatprep.subr.mxu0 0.0
      %3053 = vmatpush1.msra.mxu0 0.0
      %3054 = vmatprep.subr.mxu0 0.0
      %3055 = vmatpush1.msra.mxu0 0.0
      %3056 = vmatprep.subr.mxu0 0.0
      %3057 = vmatpush1.msra.mxu0 0.0
      %3058 = vmatprep.subr.mxu0 0.0
      %3059 = vmatpush1.msra.mxu0 0.0
      %3060 = vmatprep.subr.mxu0 0.0
      %3061 = vmatpush1.msra.mxu0 0.0
      %3062 = vmatprep.subr.mxu0 0.0
      %3063 = vmatpush1.msra.mxu0 0.0
      %3064 = vmatprep.subr.mxu0 0.0
      %3065 = vmatpush1.msra.mxu0 0.0
      %3066 = vmatprep.mubr.f32.mxu0 0.0
      %3067 = vmatmul.mubr.f32.gmra.mrb[0].mxu0 %v2826
      %v3068 = vpop.f32.mrb[0].mxu0
      %v3069 = vadd.f32 %v2991, %v3068
      %v3070 = vpop.f32.mrb[0].mxu0
      %3071 = vmatprep.mubr.f32.mxu0 0.0
      %3072 = vmatmul.mubr.f32.gmra.mrb[0].mxu0 %v2829
      %v3073 = vpop.f32.mrb[0].mxu0
      %v3074 = vadd.f32 %v2996, %v3073
      %v3075 = vpop.f32.mrb[0].mxu0
      %3076 = vdwg.mxu0
      %v3077 = vld [vmem:[%s45] sm:$0x1]
      %v3079 = vlaneseq
      %v3080 = vshrl.u32 %v3079, 7
      %v3081 = vsub.s32 0, %v3080
      %v3082 = vrot.slane %v3077, %v3081
      %v3084 = vadd.f32 %v3069, %v3082
      %v3085 = vadd.f32 %v3074, %v3082
      %v3086 = vld [vmem:[%s39] sm:$0x3]
      %v3087 = vld [vmem:[%s41] sm:$0x3f]
      %v3089 = vsel %vm2070, %v3087, 0
      %3091 = vmatprep.subr.mxu0 0.0
      %3092 = vmatpush1.msra.mxu0 %v3089
      %3093 = vmatprep.subr.mxu0 0.0
      %3094 = vmatpush1.msra.mxu0 0.0
      %3095 = vmatprep.subr.mxu0 0.0
      %3096 = vmatpush1.msra.mxu0 0.0
      %3097 = vmatprep.subr.mxu0 0.0
      %3098 = vmatpush1.msra.mxu0 0.0
      %3099 = vmatprep.subr.mxu0 0.0
      %3100 = vmatpush1.msra.mxu0 0.0
      %3101 = vmatprep.subr.mxu0 0.0
      %3102 = vmatpush1.msra.mxu0 0.0
      %3103 = vmatprep.subr.mxu0 0.0
      %3104 = vmatpush1.msra.mxu0 0.0
      %3105 = vmatprep.subr.mxu0 0.0
      %3106 = vmatpush1.msra.mxu0 0.0
      %3107 = vmatprep.subr.mxu0 0.0
      %3108 = vmatpush1.msra.mxu0 0.0
      %3109 = vmatprep.subr.mxu0 0.0
      %3110 = vmatpush1.msra.mxu0 0.0
      %3111 = vmatprep.subr.mxu0 0.0
      %3112 = vmatpush1.msra.mxu0 0.0
      %3113 = vmatprep.subr.mxu0 0.0
      %3114 = vmatpush1.msra.mxu0 0.0
      %3115 = vmatprep.subr.mxu0 0.0
      %3116 = vmatpush1.msra.mxu0 0.0
      %3117 = vmatprep.subr.mxu0 0.0
      %3118 = vmatpush1.msra.mxu0 0.0
      %3119 = vmatprep.subr.mxu0 0.0
      %3120 = vmatpush1.msra.mxu0 0.0
      %3121 = vmatprep.subr.mxu0 0.0
      %3122 = vmatpush1.msra.mxu0 0.0
      %3123 = vmatprep.subr.mxu0 0.0
      %3124 = vmatpush1.msra.mxu0 0.0
      %3125 = vmatprep.subr.mxu0 0.0
      %3126 = vmatpush1.msra.mxu0 0.0
      %3127 = vmatprep.subr.mxu0 0.0
      %3128 = vmatpush1.msra.mxu0 0.0
      %3129 = vmatprep.subr.mxu0 0.0
      %3130 = vmatpush1.msra.mxu0 0.0
      %3131 = vmatprep.subr.mxu0 0.0
      %3132 = vmatpush1.msra.mxu0 0.0
      %3133 = vmatprep.subr.mxu0 0.0
      %3134 = vmatpush1.msra.mxu0 0.0
      %3135 = vmatprep.subr.mxu0 0.0
      %3136 = vmatpush1.msra.mxu0 0.0
      %3137 = vmatprep.subr.mxu0 0.0
      %3138 = vmatpush1.msra.mxu0 0.0
      %3139 = vmatprep.subr.mxu0 0.0
      %3140 = vmatpush1.msra.mxu0 0.0
      %3141 = vmatprep.subr.mxu0 0.0
      %3142 = vmatpush1.msra.mxu0 0.0
      %3143 = vmatprep.subr.mxu0 0.0
      %3144 = vmatpush1.msra.mxu0 0.0
      %3145 = vmatprep.subr.mxu0 0.0
      %3146 = vmatpush1.msra.mxu0 0.0
      %3147 = vmatprep.subr.mxu0 0.0
      %3148 = vmatpush1.msra.mxu0 0.0
      %3149 = vmatprep.subr.mxu0 0.0
      %3150 = vmatpush1.msra.mxu0 0.0
      %3151 = vmatprep.subr.mxu0 0.0
      %3152 = vmatpush1.msra.mxu0 0.0
      %3153 = vmatprep.subr.mxu0 0.0
      %3154 = vmatpush1.msra.mxu0 0.0
      %3155 = vmatprep.mubr.f32.mxu0 0.0
      %3156 = vmatmul.mubr.f32.gmra.mrb[0].mxu0 %v2741
      %v3157 = vpop.f32.mrb[0].mxu0
      %v3158 = vadd.f32 0.0, %v3157
      %v3159 = vpop.f32.mrb[0].mxu0
      %3160 = vmatprep.mubr.f32.mxu0 0.0
      %3161 = vmatmul.mubr.f32.gmra.mrb[0].mxu0 %v2744
      %v3162 = vpop.f32.mrb[0].mxu0
      %v3163 = vadd.f32 0.0, %v3162
      %v3164 = vpop.f32.mrb[0].mxu0
      %3165 = vdwg.mxu0
      %v3167 = vsel %vm2831, %v3086, 0
      %3169 = vmatprep.subr.mxu0 0.0
      %3170 = vmatpush1.msra.mxu0 %v3167
      %3171 = vmatprep.subr.mxu0 0.0
      %3172 = vmatpush1.msra.mxu0 0.0
      %3173 = vmatprep.subr.mxu0 0.0
      %3174 = vmatpush1.msra.mxu0 0.0
      %3175 = vmatprep.subr.mxu0 0.0
      %3176 = vmatpush1.msra.mxu0 0.0
      %3177 = vmatprep.subr.mxu0 0.0
      %3178 = vmatpush1.msra.mxu0 0.0
      %3179 = vmatprep.subr.mxu0 0.0
      %3180 = vmatpush1.msra.mxu0 0.0
      %3181 = vmatprep.subr.mxu0 0.0
      %3182 = vmatpush1.msra.mxu0 0.0
      %3183 = vmatprep.subr.mxu0 0.0
      %3184 = vmatpush1.msra.mxu0 0.0
      %3185 = vmatprep.subr.mxu0 0.0
      %3186 = vmatpush1.msra.mxu0 0.0
      %3187 = vmatprep.subr.mxu0 0.0
      %3188 = vmatpush1.msra.mxu0 0.0
      %3189 = vmatprep.subr.mxu0 0.0
      %3190 = vmatpush1.msra.mxu0 0.0
      %3191 = vmatprep.subr.mxu0 0.0
      %3192 = vmatpush1.msra.mxu0 0.0
      %3193 = vmatprep.subr.mxu0 0.0
      %3194 = vmatpush1.msra.mxu0 0.0
      %3195 = vmatprep.subr.mxu0 0.0
      %3196 = vmatpush1.msra.mxu0 0.0
      %3197 = vmatprep.subr.mxu0 0.0
      %3198 = vmatpush1.msra.mxu0 0.0
      %3199 = vmatprep.subr.mxu0 0.0
      %3200 = vmatpush1.msra.mxu0 0.0
      %3201 = vmatprep.subr.mxu0 0.0
      %3202 = vmatpush1.msra.mxu0 0.0
      %3203 = vmatprep.subr.mxu0 0.0
      %3204 = vmatpush1.msra.mxu0 0.0
      %3205 = vmatprep.subr.mxu0 0.0
      %3206 = vmatpush1.msra.mxu0 0.0
      %3207 = vmatprep.subr.mxu0 0.0
      %3208 = vmatpush1.msra.mxu0 0.0
      %3209 = vmatprep.subr.mxu0 0.0
      %3210 = vmatpush1.msra.mxu0 0.0
      %3211 = vmatprep.subr.mxu0 0.0
      %3212 = vmatpush1.msra.mxu0 0.0
      %3213 = vmatprep.subr.mxu0 0.0
      %3214 = vmatpush1.msra.mxu0 0.0
      %3215 = vmatprep.subr.mxu0 0.0
      %3216 = vmatpush1.msra.mxu0 0.0
      %3217 = vmatprep.subr.mxu0 0.0
      %3218 = vmatpush1.msra.mxu0 0.0
      %3219 = vmatprep.subr.mxu0 0.0
      %3220 = vmatpush1.msra.mxu0 0.0
      %3221 = vmatprep.subr.mxu0 0.0
      %3222 = vmatpush1.msra.mxu0 0.0
      %3223 = vmatprep.subr.mxu0 0.0
      %3224 = vmatpush1.msra.mxu0 0.0
      %3225 = vmatprep.subr.mxu0 0.0
      %3226 = vmatpush1.msra.mxu0 0.0
      %3227 = vmatprep.subr.mxu0 0.0
      %3228 = vmatpush1.msra.mxu0 0.0
      %3229 = vmatprep.subr.mxu0 0.0
      %3230 = vmatpush1.msra.mxu0 0.0
      %3231 = vmatprep.subr.mxu0 0.0
      %3232 = vmatpush1.msra.mxu0 0.0
      %3233 = vmatprep.mubr.f32.mxu0 0.0
      %3234 = vmatmul.mubr.f32.gmra.mrb[0].mxu0 %v2826
      %v3235 = vpop.f32.mrb[0].mxu0
      %v3236 = vadd.f32 %v3158, %v3235
      %v3237 = vpop.f32.mrb[0].mxu0
      %3238 = vmatprep.mubr.f32.mxu0 0.0
      %3239 = vmatmul.mubr.f32.gmra.mrb[0].mxu0 %v2829
      %v3240 = vpop.f32.mrb[0].mxu0
      %v3241 = vadd.f32 %v3163, %v3240
      %v3242 = vpop.f32.mrb[0].mxu0
      %3243 = vdwg.mxu0
      %v3244 = vld [vmem:[%s47] sm:$0x1]
      %v3246 = vlaneseq
      %v3247 = vshrl.u32 %v3246, 7
      %v3248 = vsub.s32 0, %v3247
      %v3249 = vrot.slane %v3244, %v3248
      %v3251 = vadd.f32 %v3236, %v3249
      %v3252 = vadd.f32 %v3241, %v3249
      %v3253 = vld [vmem:[%s49] sm:$0xff]
      %v3254 = vld [vmem:[%s49 + $0x8] sm:$0xff]
      %v3255 = vld [vmem:[%s49 + $0x10] sm:$0xff]
      %v3256 = vld [vmem:[%s49 + $0x18] sm:$0xff]
      %v3257 = vld [vmem:[%s49 + $0x20] sm:$0xff]
      %v3258 = vld [vmem:[%s49 + $0x28] sm:$0xff]
      %v3259 = vld [vmem:[%s49 + $0x30] sm:$0xff]
      %v3260 = vld [vmem:[%s49 + $0x38] sm:$0xff]
      %v3261 = vld [vmem:[%s55] sm:$0x1]
      %v3263 = vlaneseq
      %v3264 = vshrl.u32 %v3263, 7
      %v3265 = vsub.s32 0, %v3264
      %v3266 = vrot.slane %v3261, %v3265
      %vm3268 = vcmask 523264
      %v3270 = vsel %vm3268, %v1129, 0
      %v3273 = vsel %vm3268, %v1130, 0
      %3275 = vmatprep.subr.mxu0 0.0
      %3276 = vmatpush1.msra.mxu0 %v3253
      %3277 = vmatprep.subr.mxu0 0.0
      %3278 = vmatpush1.msra.mxu0 %v3254
      %3279 = vmatprep.subr.mxu0 0.0
      %3280 = vmatpush1.msra.mxu0 %v3255
      %3281 = vmatprep.subr.mxu0 0.0
      %3282 = vmatpush1.msra.mxu0 %v3256
      %3283 = vmatprep.subr.mxu0 0.0
      %3284 = vmatpush1.msra.mxu0 %v3257
      %3285 = vmatprep.subr.mxu0 0.0
      %3286 = vmatpush1.msra.mxu0 %v3258
      %3287 = vmatprep.subr.mxu0 0.0
      %3288 = vmatpush1.msra.mxu0 %v3259
      %3289 = vmatprep.subr.mxu0 0.0
      %3290 = vmatpush1.msra.mxu0 %v3260
      %3291 = vmatprep.subr.mxu0 0.0
      %3292 = vmatpush1.msra.mxu0 0.0
      %3293 = vmatprep.subr.mxu0 0.0
      %3294 = vmatpush1.msra.mxu0 0.0
      %3295 = vmatprep.subr.mxu0 0.0
      %3296 = vmatpush1.msra.mxu0 0.0
      %3297 = vmatprep.subr.mxu0 0.0
      %3298 = vmatpush1.msra.mxu0 0.0
      %3299 = vmatprep.subr.mxu0 0.0
      %3300 = vmatpush1.msra.mxu0 0.0
      %3301 = vmatprep.subr.mxu0 0.0
      %3302 = vmatpush1.msra.mxu0 0.0
      %3303 = vmatprep.subr.mxu0 0.0
      %3304 = vmatpush1.msra.mxu0 0.0
      %3305 = vmatprep.subr.mxu0 0.0
      %3306 = vmatpush1.msra.mxu0 0.0
      %3307 = vmatprep.subr.mxu0 0.0
      %3308 = vmatpush1.msra.mxu0 0.0
      %3309 = vmatprep.subr.mxu0 0.0
      %3310 = vmatpush1.msra.mxu0 0.0
      %3311 = vmatprep.subr.mxu0 0.0
      %3312 = vmatpush1.msra.mxu0 0.0
      %3313 = vmatprep.subr.mxu0 0.0
      %3314 = vmatpush1.msra.mxu0 0.0
      %3315 = vmatprep.subr.mxu0 0.0
      %3316 = vmatpush1.msra.mxu0 0.0
      %3317 = vmatprep.subr.mxu0 0.0
      %3318 = vmatpush1.msra.mxu0 0.0
      %3319 = vmatprep.subr.mxu0 0.0
      %3320 = vmatpush1.msra.mxu0 0.0
      %3321 = vmatprep.subr.mxu0 0.0
      %3322 = vmatpush1.msra.mxu0 0.0
      %3323 = vmatprep.subr.mxu0 0.0
      %3324 = vmatpush1.msra.mxu0 0.0
      %3325 = vmatprep.subr.mxu0 0.0
      %3326 = vmatpush1.msra.mxu0 0.0
      %3327 = vmatprep.subr.mxu0 0.0
      %3328 = vmatpush1.msra.mxu0 0.0
      %3329 = vmatprep.subr.mxu0 0.0
      %3330 = vmatpush1.msra.mxu0 0.0
      %3331 = vmatprep.subr.mxu0 0.0
      %3332 = vmatpush1.msra.mxu0 0.0
      %3333 = vmatprep.subr.mxu0 0.0
      %3334 = vmatpush1.msra.mxu0 0.0
      %3335 = vmatprep.subr.mxu0 0.0
      %3336 = vmatpush1.msra.mxu0 0.0
      %3337 = vmatprep.subr.mxu0 0.0
      %3338 = vmatpush1.msra.mxu0 0.0
      %3339 = vmatprep.mubr.f32.mxu0 0.0
      %3340 = vmatmul.mubr.f32.gmra.mrb[0].mxu0 %v3270
      %v3341 = vpop.f32.mrb[0].mxu0
      %v3342 = vadd.f32 %v3266, %v3341
      %v3343 = vpop.f32.mrb[0].mxu0
      %3344 = vmatprep.mubr.f32.mxu0 0.0
      %3345 = vmatmul.mubr.f32.gmra.mrb[0].mxu0 %v3273
      %v3346 = vpop.f32.mrb[0].mxu0
      %v3347 = vadd.f32 %v3266, %v3346
      %v3348 = vpop.f32.mrb[0].mxu0
      %3349 = vdwg.mxu0
      %v3350 = vld [vmem:[%s51] sm:$0xff]
      %v3351 = vld [vmem:[%s51 + $0x8] sm:$0xff]
      %v3352 = vld [vmem:[%s51 + $0x10] sm:$0xff]
      %v3353 = vld [vmem:[%s51 + $0x18] sm:$0xff]
      %v3354 = vld [vmem:[%s51 + $0x20] sm:$0xff]
      %v3355 = vld [vmem:[%s51 + $0x28] sm:$0xff]
      %v3356 = vld [vmem:[%s51 + $0x30] sm:$0xff]
      %v3357 = vld [vmem:[%s51 + $0x38] sm:$0xff]
      %v3358 = vld [vmem:[%s57] sm:$0x1]
      %v3360 = vlaneseq
      %v3361 = vshrl.u32 %v3360, 7
      %v3362 = vsub.s32 0, %v3361
      %v3363 = vrot.slane %v3358, %v3362
      %3365 = vmatprep.subr.mxu0 0.0
      %3366 = vmatpush1.msra.mxu0 %v3350
      %3367 = vmatprep.subr.mxu0 0.0
      %3368 = vmatpush1.msra.mxu0 %v3351
      %3369 = vmatprep.subr.mxu0 0.0
      %3370 = vmatpush1.msra.mxu0 %v3352
      %3371 = vmatprep.subr.mxu0 0.0
      %3372 = vmatpush1.msra.mxu0 %v3353
      %3373 = vmatprep.subr.mxu0 0.0
      %3374 = vmatpush1.msra.mxu0 %v3354
      %3375 = vmatprep.subr.mxu0 0.0
      %3376 = vmatpush1.msra.mxu0 %v3355
      %3377 = vmatprep.subr.mxu0 0.0
      %3378 = vmatpush1.msra.mxu0 %v3356
      %3379 = vmatprep.subr.mxu0 0.0
      %3380 = vmatpush1.msra.mxu0 %v3357
      %3381 = vmatprep.subr.mxu0 0.0
      %3382 = vmatpush1.msra.mxu0 0.0
      %3383 = vmatprep.subr.mxu0 0.0
      %3384 = vmatpush1.msra.mxu0 0.0
      %3385 = vmatprep.subr.mxu0 0.0
      %3386 = vmatpush1.msra.mxu0 0.0
      %3387 = vmatprep.subr.mxu0 0.0
      %3388 = vmatpush1.msra.mxu0 0.0
      %3389 = vmatprep.subr.mxu0 0.0
      %3390 = vmatpush1.msra.mxu0 0.0
      %3391 = vmatprep.subr.mxu0 0.0
      %3392 = vmatpush1.msra.mxu0 0.0
      %3393 = vmatprep.subr.mxu0 0.0
      %3394 = vmatpush1.msra.mxu0 0.0
      %3395 = vmatprep.subr.mxu0 0.0
      %3396 = vmatpush1.msra.mxu0 0.0
      %3397 = vmatprep.subr.mxu0 0.0
      %3398 = vmatpush1.msra.mxu0 0.0
      %3399 = vmatprep.subr.mxu0 0.0
      %3400 = vmatpush1.msra.mxu0 0.0
      %3401 = vmatprep.subr.mxu0 0.0
      %3402 = vmatpush1.msra.mxu0 0.0
      %3403 = vmatprep.subr.mxu0 0.0
      %3404 = vmatpush1.msra.mxu0 0.0
      %3405 = vmatprep.subr.mxu0 0.0
      %3406 = vmatpush1.msra.mxu0 0.0
      %3407 = vmatprep.subr.mxu0 0.0
      %3408 = vmatpush1.msra.mxu0 0.0
      %3409 = vmatprep.subr.mxu0 0.0
      %3410 = vmatpush1.msra.mxu0 0.0
      %3411 = vmatprep.subr.mxu0 0.0
      %3412 = vmatpush1.msra.mxu0 0.0
      %3413 = vmatprep.subr.mxu0 0.0
      %3414 = vmatpush1.msra.mxu0 0.0
      %3415 = vmatprep.subr.mxu0 0.0
      %3416 = vmatpush1.msra.mxu0 0.0
      %3417 = vmatprep.subr.mxu0 0.0
      %3418 = vmatpush1.msra.mxu0 0.0
      %3419 = vmatprep.subr.mxu0 0.0
      %3420 = vmatpush1.msra.mxu0 0.0
      %3421 = vmatprep.subr.mxu0 0.0
      %3422 = vmatpush1.msra.mxu0 0.0
      %3423 = vmatprep.subr.mxu0 0.0
      %3424 = vmatpush1.msra.mxu0 0.0
      %3425 = vmatprep.subr.mxu0 0.0
      %3426 = vmatpush1.msra.mxu0 0.0
      %3427 = vmatprep.subr.mxu0 0.0
      %3428 = vmatpush1.msra.mxu0 0.0
      %3429 = vmatprep.mubr.f32.mxu0 0.0
      %3430 = vmatmul.mubr.f32.gmra.mrb[0].mxu0 %v3270
      %v3431 = vpop.f32.mrb[0].mxu0
      %v3432 = vadd.f32 %v3363, %v3431
      %v3433 = vpop.f32.mrb[0].mxu0
      %3434 = vmatprep.mubr.f32.mxu0 0.0
      %3435 = vmatmul.mubr.f32.gmra.mrb[0].mxu0 %v3273
      %v3436 = vpop.f32.mrb[0].mxu0
      %v3437 = vadd.f32 %v3363, %v3436
      %v3438 = vpop.f32.mrb[0].mxu0
      %3439 = vdwg.mxu0
      %v3440 = vld [vmem:[%s53] sm:$0xff]
      %v3441 = vld [vmem:[%s53 + $0x8] sm:$0xff]
      %v3442 = vld [vmem:[%s53 + $0x10] sm:$0xff]
      %v3443 = vld [vmem:[%s53 + $0x18] sm:$0xff]
      %v3444 = vld [vmem:[%s53 + $0x20] sm:$0xff]
      %v3445 = vld [vmem:[%s53 + $0x28] sm:$0xff]
      %v3446 = vld [vmem:[%s53 + $0x30] sm:$0xff]
      %v3447 = vld [vmem:[%s53 + $0x38] sm:$0xff]
      %v3448 = vld [vmem:[%s59] sm:$0x1]
      %v3450 = vlaneseq
      %v3451 = vshrl.u32 %v3450, 7
      %v3452 = vsub.s32 0, %v3451
      %v3453 = vrot.slane %v3448, %v3452
      %3455 = vmatprep.subr.mxu0 0.0
      %3456 = vmatpush1.msra.mxu0 %v3440
      %3457 = vmatprep.subr.mxu0 0.0
      %3458 = vmatpush1.msra.mxu0 %v3441
      %3459 = vmatprep.subr.mxu0 0.0
      %3460 = vmatpush1.msra.mxu0 %v3442
      %3461 = vmatprep.subr.mxu0 0.0
      %3462 = vmatpush1.msra.mxu0 %v3443
      %3463 = vmatprep.subr.mxu0 0.0
      %3464 = vmatpush1.msra.mxu0 %v3444
      %3465 = vmatprep.subr.mxu0 0.0
      %3466 = vmatpush1.msra.mxu0 %v3445
      %3467 = vmatprep.subr.mxu0 0.0
      %3468 = vmatpush1.msra.mxu0 %v3446
      %3469 = vmatprep.subr.mxu0 0.0
      %3470 = vmatpush1.msra.mxu0 %v3447
      %3471 = vmatprep.subr.mxu0 0.0
      %3472 = vmatpush1.msra.mxu0 0.0
      %3473 = vmatprep.subr.mxu0 0.0
      %3474 = vmatpush1.msra.mxu0 0.0
      %3475 = vmatprep.subr.mxu0 0.0
      %3476 = vmatpush1.msra.mxu0 0.0
      %3477 = vmatprep.subr.mxu0 0.0
      %3478 = vmatpush1.msra.mxu0 0.0
      %3479 = vmatprep.subr.mxu0 0.0
      %3480 = vmatpush1.msra.mxu0 0.0
      %3481 = vmatprep.subr.mxu0 0.0
      %3482 = vmatpush1.msra.mxu0 0.0
      %3483 = vmatprep.subr.mxu0 0.0
      %3484 = vmatpush1.msra.mxu0 0.0
      %3485 = vmatprep.subr.mxu0 0.0
      %3486 = vmatpush1.msra.mxu0 0.0
      %3487 = vmatprep.subr.mxu0 0.0
      %3488 = vmatpush1.msra.mxu0 0.0
      %3489 = vmatprep.subr.mxu0 0.0
      %3490 = vmatpush1.msra.mxu0 0.0
      %3491 = vmatprep.subr.mxu0 0.0
      %3492 = vmatpush1.msra.mxu0 0.0
      %3493 = vmatprep.subr.mxu0 0.0
      %3494 = vmatpush1.msra.mxu0 0.0
      %3495 = vmatprep.subr.mxu0 0.0
      %3496 = vmatpush1.msra.mxu0 0.0
      %3497 = vmatprep.subr.mxu0 0.0
      %3498 = vmatpush1.msra.mxu0 0.0
      %3499 = vmatprep.subr.mxu0 0.0
      %3500 = vmatpush1.msra.mxu0 0.0
      %3501 = vmatprep.subr.mxu0 0.0
      %3502 = vmatpush1.msra.mxu0 0.0
      %3503 = vmatprep.subr.mxu0 0.0
      %3504 = vmatpush1.msra.mxu0 0.0
      %3505 = vmatprep.subr.mxu0 0.0
      %3506 = vmatpush1.msra.mxu0 0.0
      %3507 = vmatprep.subr.mxu0 0.0
      %3508 = vmatpush1.msra.mxu0 0.0
      %3509 = vmatprep.subr.mxu0 0.0
      %3510 = vmatpush1.msra.mxu0 0.0
      %3511 = vmatprep.subr.mxu0 0.0
      %3512 = vmatpush1.msra.mxu0 0.0
      %3513 = vmatprep.subr.mxu0 0.0
      %3514 = vmatpush1.msra.mxu0 0.0
      %3515 = vmatprep.subr.mxu0 0.0
      %3516 = vmatpush1.msra.mxu0 0.0
      %3517 = vmatprep.subr.mxu0 0.0
      %3518 = vmatpush1.msra.mxu0 0.0
      %3519 = vmatprep.mubr.f32.mxu0 0.0
      %3520 = vmatmul.mubr.f32.gmra.mrb[0].mxu0 %v3270
      %v3521 = vpop.f32.mrb[0].mxu0
      %v3522 = vadd.f32 %v3453, %v3521
      %v3523 = vpop.f32.mrb[0].mxu0
      %3524 = vmatprep.mubr.f32.mxu0 0.0
      %3525 = vmatmul.mubr.f32.gmra.mrb[0].mxu0 %v3273
      %v3526 = vpop.f32.mrb[0].mxu0
      %v3527 = vadd.f32 %v3453, %v3526
      %v3528 = vpop.f32.mrb[0].mxu0
      %3529 = vdwg.mxu0
      %v3530 = vadd.f32 %v2917, %v3342
      %v3531 = vadd.f32 %v2918, %v3347
      %v3532 = vxor.u32 %v3530, 2147483648
      %v3533 = vxor.u32 %v3531, 2147483648
      %v3534 = vmul.f32 %v3532, 1.442695
      %v3535 = vpow.pop %v3534
      %v3536 = vmul.f32 %v3533, 1.442695
      %v3537 = vpow.pop %v3536
      %v3538 = vadd.f32 %v3535, 1.0
      %v3539 = vadd.f32 %v3537, 1.0
      %v3540 = vrcp.pop %v3538
      %v3541 = vmul.f32 1.0, %v3540
      %v3542 = vrcp.pop %v3539
      %v3543 = vmul.f32 1.0, %v3542
      %v3544 = vadd.f32 %v3084, %v3432
      %v3545 = vadd.f32 %v3085, %v3437
      %v3546 = vxor.u32 %v3544, 2147483648
      %v3547 = vxor.u32 %v3545, 2147483648
      %v3548 = vmul.f32 %v3546, 1.442695
      %v3549 = vpow.pop %v3548
      %v3550 = vmul.f32 %v3547, 1.442695
      %v3551 = vpow.pop %v3550
      %v3552 = vadd.f32 %v3549, 1.0
      %v3553 = vadd.f32 %v3551, 1.0
      %v3554 = vrcp.pop %v3552
      %v3555 = vmul.f32 1.0, %v3554
      %v3556 = vrcp.pop %v3553
      %v3557 = vmul.f32 1.0, %v3556
      %v3558 = vmul.f32 %v3541, %v3522
      %v3559 = vmul.f32 %v3543, %v3527
      %v3560 = vadd.f32 %v3251, %v3558
      %v3561 = vadd.f32 %v3252, %v3559
      %v3562 = vtanh.pop %v3560
      %v3563 = vtanh.pop %v3561
      %v3564 = vsub.f32 %v1129, %v3562
      %v3565 = vsub.f32 %v1130, %v3563
      %v3566 = vmul.f32 %v3555, %v3564
      %v3567 = vmul.f32 %v3557, %v3565
      %v3568 = vadd.f32 %v3562, %v3566
      %v3569 = vadd.f32 %v3563, %v3567
      %v3570 = vld [vmem:[%s61] sm:$0xff]
      %v3571 = vld [vmem:[%s61 + $0x8] sm:$0xff]
      %v3572 = vld [vmem:[%s61 + $0x10] sm:$0xff]
      %v3573 = vld [vmem:[%s61 + $0x18] sm:$0xff]
      %v3574 = vld [vmem:[%s61 + $0x20] sm:$0xff]
      %v3575 = vld [vmem:[%s61 + $0x28] sm:$0xff]
      %v3576 = vld [vmem:[%s61 + $0x30] sm:$0xff]
      %v3577 = vld [vmem:[%s61 + $0x38] sm:$0xff]
      %v3578 = vld [vmem:[%s63] sm:$0x1]
      %v3580 = vlaneseq
      %v3581 = vshrl.u32 %v3580, 7
      %v3582 = vsub.s32 0, %v3581
      %v3583 = vrot.slane %v3578, %v3582
      %v3586 = vsel %vm3268, %v3568, 0
      %v3589 = vsel %vm3268, %v3569, 0
      %3591 = vmatprep.subr.mxu0 0.0
      %3592 = vmatpush1.msra.mxu0 %v3570
      %3593 = vmatprep.subr.mxu0 0.0
      %3594 = vmatpush1.msra.mxu0 %v3571
      %3595 = vmatprep.subr.mxu0 0.0
      %3596 = vmatpush1.msra.mxu0 %v3572
      %3597 = vmatprep.subr.mxu0 0.0
      %3598 = vmatpush1.msra.mxu0 %v3573
      %3599 = vmatprep.subr.mxu0 0.0
      %3600 = vmatpush1.msra.mxu0 %v3574
      %3601 = vmatprep.subr.mxu0 0.0
      %3602 = vmatpush1.msra.mxu0 %v3575
      %3603 = vmatprep.subr.mxu0 0.0
      %3604 = vmatpush1.msra.mxu0 %v3576
      %3605 = vmatprep.subr.mxu0 0.0
      %3606 = vmatpush1.msra.mxu0 %v3577
      %3607 = vmatprep.subr.mxu0 0.0
      %3608 = vmatpush1.msra.mxu0 0.0
      %3609 = vmatprep.subr.mxu0 0.0
      %3610 = vmatpush1.msra.mxu0 0.0
      %3611 = vmatprep.subr.mxu0 0.0
      %3612 = vmatpush1.msra.mxu0 0.0
      %3613 = vmatprep.subr.mxu0 0.0
      %3614 = vmatpush1.msra.mxu0 0.0
      %3615 = vmatprep.subr.mxu0 0.0
      %3616 = vmatpush1.msra.mxu0 0.0
      %3617 = vmatprep.subr.mxu0 0.0
      %3618 = vmatpush1.msra.mxu0 0.0
      %3619 = vmatprep.subr.mxu0 0.0
      %3620 = vmatpush1.msra.mxu0 0.0
      %3621 = vmatprep.subr.mxu0 0.0
      %3622 = vmatpush1.msra.mxu0 0.0
      %3623 = vmatprep.subr.mxu0 0.0
      %3624 = vmatpush1.msra.mxu0 0.0
      %3625 = vmatprep.subr.mxu0 0.0
      %3626 = vmatpush1.msra.mxu0 0.0
      %3627 = vmatprep.subr.mxu0 0.0
      %3628 = vmatpush1.msra.mxu0 0.0
      %3629 = vmatprep.subr.mxu0 0.0
      %3630 = vmatpush1.msra.mxu0 0.0
      %3631 = vmatprep.subr.mxu0 0.0
      %3632 = vmatpush1.msra.mxu0 0.0
      %3633 = vmatprep.subr.mxu0 0.0
      %3634 = vmatpush1.msra.mxu0 0.0
      %3635 = vmatprep.subr.mxu0 0.0
      %3636 = vmatpush1.msra.mxu0 0.0
      %3637 = vmatprep.subr.mxu0 0.0
      %3638 = vmatpush1.msra.mxu0 0.0
      %3639 = vmatprep.subr.mxu0 0.0
      %3640 = vmatpush1.msra.mxu0 0.0
      %3641 = vmatprep.subr.mxu0 0.0
      %3642 = vmatpush1.msra.mxu0 0.0
      %3643 = vmatprep.subr.mxu0 0.0
      %3644 = vmatpush1.msra.mxu0 0.0
      %3645 = vmatprep.subr.mxu0 0.0
      %3646 = vmatpush1.msra.mxu0 0.0
      %3647 = vmatprep.subr.mxu0 0.0
      %3648 = vmatpush1.msra.mxu0 0.0
      %3649 = vmatprep.subr.mxu0 0.0
      %3650 = vmatpush1.msra.mxu0 0.0
      %3651 = vmatprep.subr.mxu0 0.0
      %3652 = vmatpush1.msra.mxu0 0.0
      %3653 = vmatprep.subr.mxu0 0.0
      %3654 = vmatpush1.msra.mxu0 0.0
      %3655 = vmatprep.mubr.f32.mxu0 0.0
      %3656 = vmatmul.mubr.f32.gmra.mrb[0].mxu0 %v3586
      %v3657 = vpop.f32.mrb[0].mxu0
      %v3658 = vadd.f32 %v3583, %v3657
      %v3659 = vpop.f32.mrb[0].mxu0
      %3660 = vmatprep.mubr.f32.mxu0 0.0
      %3661 = vmatmul.mubr.f32.gmra.mrb[0].mxu0 %v3589
      %v3662 = vpop.f32.mrb[0].mxu0
      %v3663 = vadd.f32 %v3583, %v3662
      %v3664 = vpop.f32.mrb[0].mxu0
      %3665 = vdwg.mxu0
      %3666 = vst.msk [vmem:[#allocation2] sm:$0xff] %vm3268, %v3568
      %3667 = vst.msk [vmem:[#allocation2 + $0x8] sm:$0xff] %vm3268, %v3569
      %3668 = vst.msk [vmem:[#allocation3] sm:$0xff] %vm2824, %v3658
      %3669 = vst.msk [vmem:[#allocation3 + $0x8] sm:$0xff] %vm2824, %v3663
      %3670 = vst.msk [vmem:[%s1082] sm:$0xff] %vm2824, %v3658
      %3671 = vst.msk [vmem:[%s1082 + $0x8] sm:$0xff] %vm2824, %v3663
      %s3672 = ssub.s32 %s81, 4
      %p3673 = scmp.gt.s32.totalorder %s3672, 0
      %s3674 = scalar_select %p3673, %s3672, 0
      %p3675 = scmp.lt.s32.totalorder %s80, 1
      %s3676 = scalar_select %p3675, %s80, 1
      %p3677 = scmp.lt.s32.totalorder %s3674, 2
      %s3678 = scalar_select %p3677, %s3674, 2
      %s3679 = smul.addr %s3678, 2
      %s3680 = smul.addr %s3676, 6
      %s3681 = sadd.s32 %s3679, %s3680
      %s3682 = smul.addr %s3681, 8
      %s3683 = scalar_lea.vmem %s65, %s3682
      // Predicated region
      $region161: #{forward.1} parent=147 // pred_check
        %p3684 = pneg %p804
      $region162: #{forward.1} parent=147 // pred_check_branch
        %3686 = sbr.rel (%p3684) target = $region164
      $region163: #{forward.1} parent=147 // pred_region
        %s3687 = ssub.s32 %s81, 4
        %p3688 = scmp.gt.s32.totalorder %s3687, 0
        %s3689 = scalar_select %p3688, %s3687, 0
      $region164: #{forward.1} parent=147 // pred_fallthru
        _
    $region148: #{forward.1} parent=5 // pred_fallthru
      _
    %p3690 = scmp.le.s32.totalorder 2, %s71
    // Predicated region
    $region165: #{forward.1} parent=5 // pred_check
      %p3691 = pneg %p3690
    $region166: #{forward.1} parent=5 // pred_check_branch
      %3693 = sbr.rel (%p3691) target = $region168
    $region167: #{forward.1} parent=5 // pred_region
      %s3694 = ssub.s32 %s71, 2
      // Predicated region
      $region169: #{forward.1} parent=167 // pred_check
        %p3695 = pneg %p810
      $region170: #{forward.1} parent=167 // pred_check_branch
        %3697 = sbr.rel (%p3695) target = $region172
      $region171: #{forward.1} parent=167 // pred_region
        %s3698 = ssub.s32 %s83, 4
        %p3699 = scmp.gt.s32.totalorder %s3698, 0
        %s3700 = scalar_select %p3699, %s3698, 0
        %p3701 = scmp.lt.s32.totalorder %s82, 1
        %s3702 = scalar_select %p3701, %s82, 1
        %p3703 = scmp.lt.s32.totalorder %s3700, 2
        %s3704 = scalar_select %p3703, %s3700, 2
        %s3705 = smul.addr %s3704, 2
        %s3706 = smul.addr %s3702, 6
        %s3707 = sadd.s32 %s3705, %s3706
        %s3708 = smul.addr %s3707, 8
        %s3709 = scalar_lea.vmem %s65, %s3708
      $region172: #{forward.1} parent=167 // pred_fallthru
        _
    $region168: #{forward.1} parent=5 // pred_fallthru
      _
  $region6: #{forward.1} parent=0 // loop_footer
    %s75 = sadd.s32 1, %s71
  $region7: #{forward.1} parent=0 // loop_footer_branch
    %70 = sbr.rel target = $region3
  $region8: #{forward.1} parent=0 // loop_exit
    _

</llo_original>
